<compile_context>
chip_gen: v6e
topology: v6e:2x2x1
jax: 0.10.0
libtpu: 0.0.40
codegen_flags: <defaults>
</compile_context>

<pallas_src>
import functools

import jax
import jax.numpy as jnp
from jax.experimental import pallas as pl
from jax.experimental.pallas import tpu as pltpu

# ------------------------- problem configuration --------------------------
NT = 2                      # train_config.Nt
C_OUT = 4                   # mlp2 output width ("comb" features)
TWO_NT = 2 * NT
FX = C_OUT + TWO_NT         # node feature width (constant across conv calls)
FE = 4                      # edge attribute width
H1 = 16                     # mlp1 hidden / output width
H2 = 16                     # mlp2 hidden width
N_NODES = 8
N_EDGES = N_NODES * (N_NODES - 1)   # complete directed graph, no self loops
NUM_LAYERS = 3              # IGCNet_repara applies the same conv three times


# ------------------------------- kernel ------------------------------------
def igcnet_kernel(xc_ref, xp_ref, ea_ref, src_oh_ref, tgt_oh_ref,
                  w1a_c_ref, w1a_p_ref, w1a_e_ref, b1a_ref,
                  w2a_ref, b2a_ref,
                  w1b_c_ref, w1b_p_ref, w1b_a_ref, b1b_ref,
                  w2b_ref, b2b_ref,
                  out_ref):
    f32 = jnp.float32

    # Node features carried as two slabs: c = x[:, :C_OUT], p = x[:, C_OUT:].
    c = xc_ref[...]                              # [N, C]
    p = xp_ref[...]                              # [N, 2*Nt]
    c_out = c.shape[1]
    two_nt = p.shape[1]

    src_oh = src_oh_ref[...]                     # [E, N] one-hot of edge sources
    w1a_c, w1a_p = w1a_c_ref[...], w1a_p_ref[...]
    w2a, b2a = w2a_ref[...], b2a_ref[...]
    w1b_c, w1b_p, w1b_a = w1b_c_ref[...], w1b_p_ref[...], w1b_a_ref[...]
    b1b = b1b_ref[...]
    w2b, b2b = w2b_ref[...], b2b_ref[...]

    # Edge-attr contribution to mlp1 layer 1 (incl. bias) is identical in all
    # three conv passes -> computed once, reused every layer.
    ea_contrib = (jnp.dot(ea_ref[...], w1a_e_ref[...],
                          preferred_element_type=f32) + b1a_ref[...])    # [E, H1]

    # 0/1 target mask broadcast-ready along the feature (lane) axis; hoisted
    # out of the layer loop so the broadcast_in_dim isn't re-emitted per iter.
    tgt_mask = tgt_oh_ref[...][:, :, None]                               # [N, E, 1]

    for _ in range(NUM_LAYERS):                  # static unroll, shared weights
        # -------- message: mlp1(cat([x_j, edge_attr])) ----------------------
        # gather fused into matmul: (src_oh @ x) @ W == src_oh @ (x @ W)
        xw = (jnp.dot(c, w1a_c, preferred_element_type=f32)
              + jnp.dot(p, w1a_p, preferred_element_type=f32))           # [N, H1]
        h1 = jnp.maximum(jnp.dot(src_oh, xw, preferred_element_type=f32)
                         + ea_contrib, 0.0)                              # [E, H1]
        msg = jnp.maximum(jnp.dot(h1, w2a, preferred_element_type=f32)
                          + b2a, 0.0)                                    # [E, H1]

        # -------- aggregate: per-target max over incoming edges -------------
        # Valid because messages are post-ReLU (>= 0) and every node has at
        # least one incoming edge (complete graph), so a 0-fill masked max
        # equals segment_max.
        aggr = jnp.max(tgt_mask * msg[None, :, :], axis=1)               # [N, H1]

        # -------- update: mlp2(cat([x, aggr])), L2-norm clamp ---------------
        h2 = jnp.maximum(jnp.dot(c, w1b_c, preferred_element_type=f32)
                         + jnp.dot(p, w1b_p, preferred_element_type=f32)
                         + jnp.dot(aggr, w1b_a, preferred_element_type=f32)
                         + b1b, 0.0)                                     # [N, H2]
        comb = jnp.maximum(jnp.dot(h2, w2b, preferred_element_type=f32)
                           + b2b, 0.0)                                   # [N, C]

        sumsq = jnp.sum(comb * comb, axis=1, keepdims=True)              # [N, 1]
        # div-by-max(1, ||comb||) == mul-by-min(1, rsqrt(sumsq)); the min is
        # applied BEFORE the multiply so all-zero rows give 0 (no 0*inf NaN).
        comb = comb * jnp.minimum(1.0, jax.lax.rsqrt(sumsq))

        # new node features = cat([comb, x[:, :2*Nt]]) carried as two slabs.
        if two_nt <= c_out:
            new_p = c[:, :two_nt]
        else:
            new_p = jnp.concatenate([c, p[:, :two_nt - c_out]], axis=1)
        c, p = comb, new_p

    # Final output written as two lane-slice stores (no in-register concat).
    out_ref[:, :c_out] = c
    out_ref[:, c_out:] = p


# ------------------------------- wrappers -----------------------------------
def _vmem():
    return pl.BlockSpec(memory_space=pltpu.MemorySpace.VMEM)


def _prep_mlp(var, if_bias):
    """Torch F.linear weights [out, in] -> ([in, out] transposed, [1, out] bias)."""
    if if_bias:
        w1, b1, w2, b2 = var[0], var[1], var[2], var[3]
        b1 = b1.reshape(1, -1).astype(jnp.float32)
        b2 = b2.reshape(1, -1).astype(jnp.float32)
    else:
        w1, w2 = var[0], var[1]
        b1 = jnp.zeros((1, w1.shape[0]), jnp.float32)
        b2 = jnp.zeros((1, w2.shape[0]), jnp.float32)
    return (jnp.transpose(w1).astype(jnp.float32), b1,
            jnp.transpose(w2).astype(jnp.float32), b2)


@functools.partial(jax.jit, static_argnames=("if_bias",))
def igcnet_repara_forward(x0, edge_attr, edge_index, var1, var2, if_bias=True):
    """IGCNet_repara.forward: three weight-shared IGConv passes, one Pallas kernel."""
    n, fx = x0.shape
    src = edge_index[0]
    tgt = edge_index[1]

    # Gather / scatter encoded as dense 0/1 matrices (built once for all layers).
    src_oh = jax.nn.one_hot(src, n, dtype=jnp.float32)                 # [E, N]
    tgt_oh = jnp.transpose(jax.nn.one_hot(tgt, n, dtype=jnp.float32))  # [N, E]

    # Weight prep done exactly once for the whole 3-layer stack.
    w1a_t, b1a, w2a_t, b2a = _prep_mlp(var1, if_bias)             # w1a_t: [FX+FE, H1]
    w1b_t, b1b, w2b_t, b2b = _prep_mlp(var2, if_bias)             # w1b_t: [FX+H1, H2]

    c_out = w2b_t.shape[1]
    two_nt = fx - c_out
    assert two_nt == 2 * NT and c_out + two_nt == fx, "conv output width mismatch"

    # Split weights so in-kernel cat([x_j, ea]) / cat([x, aggr]) become
    # split matmuls instead of lane-axis concatenates.
    w1a_c, w1a_p, w1a_e = w1a_t[:c_out], w1a_t[c_out:fx], w1a_t[fx:]
    w1b_c, w1b_p, w1b_a = w1b_t[:c_out], w1b_t[c_out:fx], w1b_t[fx:]

    # Node features split the same way (c = "comb slot", p = "x[:, :2*Nt] slot").
    xc = x0[:, :c_out].astype(jnp.float32)
    xp = x0[:, c_out:].astype(jnp.float32)

    n_inputs = 17
    return pl.pallas_call(
        igcnet_kernel,
        out_shape=jax.ShapeDtypeStruct((n, fx), jnp.float32),
        in_specs=[_vmem()] * n_inputs,
        out_specs=_vmem(),
    )(xc, xp, edge_attr.astype(jnp.float32), src_oh, tgt_oh,
      w1a_c, w1a_p, w1a_e, b1a, w2a_t, b2a,
      w1b_c, w1b_p, w1b_a, b1b, w2b_t, b2b)


# ------------------------- pure-JAX reference (for checking) ----------------
def conv_ref(x, edge_attr, src, tgt, var1, var2):
    x_j = x[src]
    tmp = jnp.concatenate([x_j, edge_attr], axis=1)
    h = jax.nn.relu(tmp @ var1[0].T + var1[1])
    msg = jax.nn.relu(h @ var1[2].T + var1[3])
    aggr = jax.ops.segment_max(msg, tgt, num_segments=x.shape[0])
    tmp2 = jnp.concatenate([x, aggr], axis=1)
    h2 = jax.nn.relu(tmp2 @ var2[0].T + var2[1])
    comb = jax.nn.relu(h2 @ var2[2].T + var2[3])
    nor = jnp.sqrt(jnp.sum(comb * comb, axis=1, keepdims=True))
    comb = comb / jnp.maximum(1.0, nor)
    return jnp.concatenate([comb, x[:, :2 * NT]], axis=1)


def model_ref(x0, edge_attr, edge_index, var1, var2):
    src, tgt = edge_index[0], edge_index[1]
    x1 = conv_ref(x0, edge_attr, src, tgt, var1, var2)
    x2 = conv_ref(x1, edge_attr, src, tgt, var1, var2)
    return conv_ref(x2, edge_attr, src, tgt, var1, var2)


# --------------------------------- main --------------------------------------
if __name__ == "__main__":
    key = jax.random.PRNGKey(0)
    keys = jax.random.split(key, 12)

    # node / edge features
    x0 = jax.random.normal(keys[0], (N_NODES, FX), dtype=jnp.float32)
    edge_attr = jax.random.normal(keys[1], (N_EDGES, FE), dtype=jnp.float32)

    # complete directed graph (no self loops): edge (j -> i) for all i != j
    src_list, tgt_list = [], []
    for i in range(N_NODES):
        for j in range(N_NODES):
            if i != j:
                src_list.append(j)
                tgt_list.append(i)
    edge_index = jnp.array([src_list, tgt_list], dtype=jnp.int32)   # [2, E]

    # parameters (F.linear convention: W is [out, in]), if_bias=True
    scale = 0.2
    var1 = [
        scale * jax.random.normal(keys[2], (H1, FX + FE), dtype=jnp.float32),
        scale * jax.random.normal(keys[3], (H1,), dtype=jnp.float32),
        scale * jax.random.normal(keys[4], (H1, H1), dtype=jnp.float32),
        scale * jax.random.normal(keys[5], (H1,), dtype=jnp.float32),
    ]
    var2 = [
        scale * jax.random.normal(keys[6], (H2, FX + H1), dtype=jnp.float32),
        scale * jax.random.normal(keys[7], (H2,), dtype=jnp.float32),
        scale * jax.random.normal(keys[8], (C_OUT, H2), dtype=jnp.float32),
        scale * jax.random.normal(keys[9], (C_OUT,), dtype=jnp.float32),
    ]

    out = igcnet_repara_forward(x0, edge_attr, edge_index, var1, var2, if_bias=True)
    out = jax.block_until_ready(out)

    ref = jax.block_until_ready(model_ref(x0, edge_attr, edge_index, var1, var2))
    assert out.shape == (N_NODES, FX), out.shape
    assert jnp.allclose(out, ref, rtol=1e-4, atol=1e-4), (
        f"max abs diff {float(jnp.max(jnp.abs(out - ref)))}")

    print("KERNEL_OK")
</pallas_src>

<mosaic_0001>
module attributes {stable_mosaic.version = 11 : i64} {
  func.func @igcnet_kernel(%arg0: memref<8x4xf32, #tpu.memory_space<vmem>>, %arg1: memref<8x4xf32, #tpu.memory_space<vmem>>, %arg2: memref<56x4xf32, #tpu.memory_space<vmem>>, %arg3: memref<56x8xf32, #tpu.memory_space<vmem>>, %arg4: memref<8x56xf32, #tpu.memory_space<vmem>>, %arg5: memref<4x16xf32, #tpu.memory_space<vmem>>, %arg6: memref<4x16xf32, #tpu.memory_space<vmem>>, %arg7: memref<4x16xf32, #tpu.memory_space<vmem>>, %arg8: memref<1x16xf32, #tpu.memory_space<vmem>>, %arg9: memref<16x16xf32, #tpu.memory_space<vmem>>, %arg10: memref<1x16xf32, #tpu.memory_space<vmem>>, %arg11: memref<4x16xf32, #tpu.memory_space<vmem>>, %arg12: memref<4x16xf32, #tpu.memory_space<vmem>>, %arg13: memref<16x16xf32, #tpu.memory_space<vmem>>, %arg14: memref<1x16xf32, #tpu.memory_space<vmem>>, %arg15: memref<16x4xf32, #tpu.memory_space<vmem>>, %arg16: memref<1x4xf32, #tpu.memory_space<vmem>>, %arg17: memref<8x8xf32, #tpu.memory_space<vmem>>) attributes {dimension_semantics = [], scalar_prefetch = 0 : i64, scratch_operands = 0 : i64, tpu.core_type = #tpu.core_type<tc>} {
    %c0 = arith.constant 0 : index
    %c0_0 = arith.constant 0 : index
    %0 = vector.load %arg0[%c0, %c0_0] : memref<8x4xf32, #tpu.memory_space<vmem>>, vector<8x4xf32>
    %c0_1 = arith.constant 0 : index
    %c0_2 = arith.constant 0 : index
    %1 = vector.load %arg1[%c0_1, %c0_2] : memref<8x4xf32, #tpu.memory_space<vmem>>, vector<8x4xf32>
    %c0_3 = arith.constant 0 : index
    %c0_4 = arith.constant 0 : index
    %2 = vector.load %arg3[%c0_3, %c0_4] : memref<56x8xf32, #tpu.memory_space<vmem>>, vector<56x8xf32>
    %c0_5 = arith.constant 0 : index
    %c0_6 = arith.constant 0 : index
    %3 = vector.load %arg5[%c0_5, %c0_6] : memref<4x16xf32, #tpu.memory_space<vmem>>, vector<4x16xf32>
    %c0_7 = arith.constant 0 : index
    %c0_8 = arith.constant 0 : index
    %4 = vector.load %arg6[%c0_7, %c0_8] : memref<4x16xf32, #tpu.memory_space<vmem>>, vector<4x16xf32>
    %c0_9 = arith.constant 0 : index
    %c0_10 = arith.constant 0 : index
    %5 = vector.load %arg9[%c0_9, %c0_10] : memref<16x16xf32, #tpu.memory_space<vmem>>, vector<16x16xf32>
    %c0_11 = arith.constant 0 : index
    %c0_12 = arith.constant 0 : index
    %6 = vector.load %arg10[%c0_11, %c0_12] : memref<1x16xf32, #tpu.memory_space<vmem>>, vector<1x16xf32>
    %c0_13 = arith.constant 0 : index
    %c0_14 = arith.constant 0 : index
    %7 = vector.load %arg11[%c0_13, %c0_14] : memref<4x16xf32, #tpu.memory_space<vmem>>, vector<4x16xf32>
    %c0_15 = arith.constant 0 : index
    %c0_16 = arith.constant 0 : index
    %8 = vector.load %arg12[%c0_15, %c0_16] : memref<4x16xf32, #tpu.memory_space<vmem>>, vector<4x16xf32>
    %c0_17 = arith.constant 0 : index
    %c0_18 = arith.constant 0 : index
    %9 = vector.load %arg13[%c0_17, %c0_18] : memref<16x16xf32, #tpu.memory_space<vmem>>, vector<16x16xf32>
    %c0_19 = arith.constant 0 : index
    %c0_20 = arith.constant 0 : index
    %10 = vector.load %arg14[%c0_19, %c0_20] : memref<1x16xf32, #tpu.memory_space<vmem>>, vector<1x16xf32>
    %c0_21 = arith.constant 0 : index
    %c0_22 = arith.constant 0 : index
    %11 = vector.load %arg15[%c0_21, %c0_22] : memref<16x4xf32, #tpu.memory_space<vmem>>, vector<16x4xf32>
    %c0_23 = arith.constant 0 : index
    %c0_24 = arith.constant 0 : index
    %12 = vector.load %arg16[%c0_23, %c0_24] : memref<1x4xf32, #tpu.memory_space<vmem>>, vector<1x4xf32>
    %c0_25 = arith.constant 0 : index
    %c0_26 = arith.constant 0 : index
    %13 = vector.load %arg2[%c0_25, %c0_26] : memref<56x4xf32, #tpu.memory_space<vmem>>, vector<56x4xf32>
    %c0_27 = arith.constant 0 : index
    %c0_28 = arith.constant 0 : index
    %14 = vector.load %arg7[%c0_27, %c0_28] : memref<4x16xf32, #tpu.memory_space<vmem>>, vector<4x16xf32>
    %cst = arith.constant dense<0.000000e+00> : vector<56x16xf32>
    %15 = tpu.matmul %13, %14, %cst {dimension_numbers = #tpu.dot_dimension_numbers<[1], [0], [0], [1], [0, 0, 1, 1], [], []>} : vector<56x4xf32>, vector<4x16xf32>, vector<56x16xf32> -> vector<56x16xf32>
    %c0_29 = arith.constant 0 : index
    %c0_30 = arith.constant 0 : index
    %16 = vector.load %arg8[%c0_29, %c0_30] : memref<1x16xf32, #tpu.memory_space<vmem>>, vector<1x16xf32>
    %17 = vector.broadcast %16 : vector<1x16xf32> to vector<56x16xf32>
    %18 = arith.addf %15, %17 : vector<56x16xf32>
    %c0_31 = arith.constant 0 : index
    %c0_32 = arith.constant 0 : index
    %19 = vector.load %arg4[%c0_31, %c0_32] : memref<8x56xf32, #tpu.memory_space<vmem>>, vector<8x56xf32>
    %20 = vector.shape_cast %19 : vector<8x56xf32> to vector<8x56x1xf32>
    %cst_33 = arith.constant dense<0.000000e+00> : vector<8x16xf32>
    %21 = tpu.matmul %0, %3, %cst_33 {dimension_numbers = #tpu.dot_dimension_numbers<[1], [0], [0], [1], [0, 0, 1, 1], [], []>} : vector<8x4xf32>, vector<4x16xf32>, vector<8x16xf32> -> vector<8x16xf32>
    %cst_34 = arith.constant dense<0.000000e+00> : vector<8x16xf32>
    %22 = tpu.matmul %1, %4, %cst_34 {dimension_numbers = #tpu.dot_dimension_numbers<[1], [0], [0], [1], [0, 0, 1, 1], [], []>} : vector<8x4xf32>, vector<4x16xf32>, vector<8x16xf32> -> vector<8x16xf32>
    %23 = arith.addf %21, %22 : vector<8x16xf32>
    %cst_35 = arith.constant dense<0.000000e+00> : vector<56x16xf32>
    %24 = tpu.matmul %2, %23, %cst_35 {dimension_numbers = #tpu.dot_dimension_numbers<[1], [0], [0], [1], [0, 0, 1, 1], [], []>} : vector<56x8xf32>, vector<8x16xf32>, vector<56x16xf32> -> vector<56x16xf32>
    %25 = arith.addf %24, %18 : vector<56x16xf32>
    %cst_36 = arith.constant 0.000000e+00 : f32
    %26 = vector.broadcast %cst_36 : f32 to vector<56x16xf32>
    %27 = arith.maximumf %25, %26 : vector<56x16xf32>
    %cst_37 = arith.constant dense<0.000000e+00> : vector<56x16xf32>
    %28 = tpu.matmul %27, %5, %cst_37 {dimension_numbers = #tpu.dot_dimension_numbers<[1], [0], [0], [1], [0, 0, 1, 1], [], []>} : vector<56x16xf32>, vector<16x16xf32>, vector<56x16xf32> -> vector<56x16xf32>
    %29 = vector.broadcast %6 : vector<1x16xf32> to vector<56x16xf32>
    %30 = arith.addf %28, %29 : vector<56x16xf32>
    %cst_38 = arith.constant 0.000000e+00 : f32
    %31 = vector.broadcast %cst_38 : f32 to vector<56x16xf32>
    %32 = arith.maximumf %30, %31 : vector<56x16xf32>
    %33 = vector.shape_cast %32 : vector<56x16xf32> to vector<1x56x16xf32>
    %34 = vector.broadcast %20 : vector<8x56x1xf32> to vector<8x56x16xf32>
    %35 = vector.broadcast %33 : vector<1x56x16xf32> to vector<8x56x16xf32>
    %36 = arith.mulf %34, %35 : vector<8x56x16xf32>
    %cst_39 = arith.constant dense<0xFF800000> : vector<8x16xf32>
    %37 = vector.multi_reduction <maximumf>, %36, %cst_39 [1] : vector<8x56x16xf32> to vector<8x16xf32>
    %cst_40 = arith.constant dense<0.000000e+00> : vector<8x16xf32>
    %38 = tpu.matmul %0, %7, %cst_40 {dimension_numbers = #tpu.dot_dimension_numbers<[1], [0], [0], [1], [0, 0, 1, 1], [], []>} : vector<8x4xf32>, vector<4x16xf32>, vector<8x16xf32> -> vector<8x16xf32>
    %cst_41 = arith.constant dense<0.000000e+00> : vector<8x16xf32>
    %39 = tpu.matmul %1, %8, %cst_41 {dimension_numbers = #tpu.dot_dimension_numbers<[1], [0], [0], [1], [0, 0, 1, 1], [], []>} : vector<8x4xf32>, vector<4x16xf32>, vector<8x16xf32> -> vector<8x16xf32>
    %40 = arith.addf %38, %39 : vector<8x16xf32>
    %cst_42 = arith.constant dense<0.000000e+00> : vector<8x16xf32>
    %41 = tpu.matmul %37, %9, %cst_42 {dimension_numbers = #tpu.dot_dimension_numbers<[1], [0], [0], [1], [0, 0, 1, 1], [], []>} : vector<8x16xf32>, vector<16x16xf32>, vector<8x16xf32> -> vector<8x16xf32>
    %42 = arith.addf %40, %41 : vector<8x16xf32>
    %43 = vector.broadcast %10 : vector<1x16xf32> to vector<8x16xf32>
    %44 = arith.addf %42, %43 : vector<8x16xf32>
    %cst_43 = arith.constant 0.000000e+00 : f32
    %45 = vector.broadcast %cst_43 : f32 to vector<8x16xf32>
    %46 = arith.maximumf %44, %45 : vector<8x16xf32>
    %cst_44 = arith.constant dense<0.000000e+00> : vector<8x4xf32>
    %47 = tpu.matmul %46, %11, %cst_44 {dimension_numbers = #tpu.dot_dimension_numbers<[1], [0], [0], [1], [0, 0, 1, 1], [], []>} : vector<8x16xf32>, vector<16x4xf32>, vector<8x4xf32> -> vector<8x4xf32>
    %48 = vector.broadcast %12 : vector<1x4xf32> to vector<8x4xf32>
    %49 = arith.addf %47, %48 : vector<8x4xf32>
    %cst_45 = arith.constant 0.000000e+00 : f32
    %50 = vector.broadcast %cst_45 : f32 to vector<8x4xf32>
    %51 = arith.maximumf %49, %50 : vector<8x4xf32>
    %52 = arith.mulf %51, %51 : vector<8x4xf32>
    %cst_46 = arith.constant dense<0.000000e+00> : vector<8xf32>
    %53 = vector.multi_reduction <add>, %52, %cst_46 [1] : vector<8x4xf32> to vector<8xf32>
    %54 = vector.shape_cast %53 : vector<8xf32> to vector<8x1xf32>
    %55 = math.rsqrt %54 : vector<8x1xf32>
    %cst_47 = arith.constant 1.000000e+00 : f32
    %56 = vector.broadcast %cst_47 : f32 to vector<8x1xf32>
    %57 = arith.minimumf %56, %55 : vector<8x1xf32>
    %58 = vector.broadcast %57 : vector<8x1xf32> to vector<8x4xf32>
    %59 = arith.mulf %51, %58 : vector<8x4xf32>
    %cst_48 = arith.constant dense<0.000000e+00> : vector<8x16xf32>
    %60 = tpu.matmul %59, %3, %cst_48 {dimension_numbers = #tpu.dot_dimension_numbers<[1], [0], [0], [1], [0, 0, 1, 1], [], []>} : vector<8x4xf32>, vector<4x16xf32>, vector<8x16xf32> -> vector<8x16xf32>
    %cst_49 = arith.constant dense<0.000000e+00> : vector<8x16xf32>
    %61 = tpu.matmul %0, %4, %cst_49 {dimension_numbers = #tpu.dot_dimension_numbers<[1], [0], [0], [1], [0, 0, 1, 1], [], []>} : vector<8x4xf32>, vector<4x16xf32>, vector<8x16xf32> -> vector<8x16xf32>
    %62 = arith.addf %60, %61 : vector<8x16xf32>
    %cst_50 = arith.constant dense<0.000000e+00> : vector<56x16xf32>
    %63 = tpu.matmul %2, %62, %cst_50 {dimension_numbers = #tpu.dot_dimension_numbers<[1], [0], [0], [1], [0, 0, 1, 1], [], []>} : vector<56x8xf32>, vector<8x16xf32>, vector<56x16xf32> -> vector<56x16xf32>
    %64 = arith.addf %63, %18 : vector<56x16xf32>
    %cst_51 = arith.constant 0.000000e+00 : f32
    %65 = vector.broadcast %cst_51 : f32 to vector<56x16xf32>
    %66 = arith.maximumf %64, %65 : vector<56x16xf32>
    %cst_52 = arith.constant dense<0.000000e+00> : vector<56x16xf32>
    %67 = tpu.matmul %66, %5, %cst_52 {dimension_numbers = #tpu.dot_dimension_numbers<[1], [0], [0], [1], [0, 0, 1, 1], [], []>} : vector<56x16xf32>, vector<16x16xf32>, vector<56x16xf32> -> vector<56x16xf32>
    %68 = vector.broadcast %6 : vector<1x16xf32> to vector<56x16xf32>
    %69 = arith.addf %67, %68 : vector<56x16xf32>
    %cst_53 = arith.constant 0.000000e+00 : f32
    %70 = vector.broadcast %cst_53 : f32 to vector<56x16xf32>
    %71 = arith.maximumf %69, %70 : vector<56x16xf32>
    %72 = vector.shape_cast %71 : vector<56x16xf32> to vector<1x56x16xf32>
    %73 = vector.broadcast %20 : vector<8x56x1xf32> to vector<8x56x16xf32>
    %74 = vector.broadcast %72 : vector<1x56x16xf32> to vector<8x56x16xf32>
    %75 = arith.mulf %73, %74 : vector<8x56x16xf32>
    %cst_54 = arith.constant dense<0xFF800000> : vector<8x16xf32>
    %76 = vector.multi_reduction <maximumf>, %75, %cst_54 [1] : vector<8x56x16xf32> to vector<8x16xf32>
    %cst_55 = arith.constant dense<0.000000e+00> : vector<8x16xf32>
    %77 = tpu.matmul %59, %7, %cst_55 {dimension_numbers = #tpu.dot_dimension_numbers<[1], [0], [0], [1], [0, 0, 1, 1], [], []>} : vector<8x4xf32>, vector<4x16xf32>, vector<8x16xf32> -> vector<8x16xf32>
    %cst_56 = arith.constant dense<0.000000e+00> : vector<8x16xf32>
    %78 = tpu.matmul %0, %8, %cst_56 {dimension_numbers = #tpu.dot_dimension_numbers<[1], [0], [0], [1], [0, 0, 1, 1], [], []>} : vector<8x4xf32>, vector<4x16xf32>, vector<8x16xf32> -> vector<8x16xf32>
    %79 = arith.addf %77, %78 : vector<8x16xf32>
    %cst_57 = arith.constant dense<0.000000e+00> : vector<8x16xf32>
    %80 = tpu.matmul %76, %9, %cst_57 {dimension_numbers = #tpu.dot_dimension_numbers<[1], [0], [0], [1], [0, 0, 1, 1], [], []>} : vector<8x16xf32>, vector<16x16xf32>, vector<8x16xf32> -> vector<8x16xf32>
    %81 = arith.addf %79, %80 : vector<8x16xf32>
    %82 = vector.broadcast %10 : vector<1x16xf32> to vector<8x16xf32>
    %83 = arith.addf %81, %82 : vector<8x16xf32>
    %cst_58 = arith.constant 0.000000e+00 : f32
    %84 = vector.broadcast %cst_58 : f32 to vector<8x16xf32>
    %85 = arith.maximumf %83, %84 : vector<8x16xf32>
    %cst_59 = arith.constant dense<0.000000e+00> : vector<8x4xf32>
    %86 = tpu.matmul %85, %11, %cst_59 {dimension_numbers = #tpu.dot_dimension_numbers<[1], [0], [0], [1], [0, 0, 1, 1], [], []>} : vector<8x16xf32>, vector<16x4xf32>, vector<8x4xf32> -> vector<8x4xf32>
    %87 = vector.broadcast %12 : vector<1x4xf32> to vector<8x4xf32>
    %88 = arith.addf %86, %87 : vector<8x4xf32>
    %cst_60 = arith.constant 0.000000e+00 : f32
    %89 = vector.broadcast %cst_60 : f32 to vector<8x4xf32>
    %90 = arith.maximumf %88, %89 : vector<8x4xf32>
    %91 = arith.mulf %90, %90 : vector<8x4xf32>
    %cst_61 = arith.constant dense<0.000000e+00> : vector<8xf32>
    %92 = vector.multi_reduction <add>, %91, %cst_61 [1] : vector<8x4xf32> to vector<8xf32>
    %93 = vector.shape_cast %92 : vector<8xf32> to vector<8x1xf32>
    %94 = math.rsqrt %93 : vector<8x1xf32>
    %cst_62 = arith.constant 1.000000e+00 : f32
    %95 = vector.broadcast %cst_62 : f32 to vector<8x1xf32>
    %96 = arith.minimumf %95, %94 : vector<8x1xf32>
    %97 = vector.broadcast %96 : vector<8x1xf32> to vector<8x4xf32>
    %98 = arith.mulf %90, %97 : vector<8x4xf32>
    %cst_63 = arith.constant dense<0.000000e+00> : vector<8x16xf32>
    %99 = tpu.matmul %98, %3, %cst_63 {dimension_numbers = #tpu.dot_dimension_numbers<[1], [0], [0], [1], [0, 0, 1, 1], [], []>} : vector<8x4xf32>, vector<4x16xf32>, vector<8x16xf32> -> vector<8x16xf32>
    %cst_64 = arith.constant dense<0.000000e+00> : vector<8x16xf32>
    %100 = tpu.matmul %59, %4, %cst_64 {dimension_numbers = #tpu.dot_dimension_numbers<[1], [0], [0], [1], [0, 0, 1, 1], [], []>} : vector<8x4xf32>, vector<4x16xf32>, vector<8x16xf32> -> vector<8x16xf32>
    %101 = arith.addf %99, %100 : vector<8x16xf32>
    %cst_65 = arith.constant dense<0.000000e+00> : vector<56x16xf32>
    %102 = tpu.matmul %2, %101, %cst_65 {dimension_numbers = #tpu.dot_dimension_numbers<[1], [0], [0], [1], [0, 0, 1, 1], [], []>} : vector<56x8xf32>, vector<8x16xf32>, vector<56x16xf32> -> vector<56x16xf32>
    %103 = arith.addf %102, %18 : vector<56x16xf32>
    %cst_66 = arith.constant 0.000000e+00 : f32
    %104 = vector.broadcast %cst_66 : f32 to vector<56x16xf32>
    %105 = arith.maximumf %103, %104 : vector<56x16xf32>
    %cst_67 = arith.constant dense<0.000000e+00> : vector<56x16xf32>
    %106 = tpu.matmul %105, %5, %cst_67 {dimension_numbers = #tpu.dot_dimension_numbers<[1], [0], [0], [1], [0, 0, 1, 1], [], []>} : vector<56x16xf32>, vector<16x16xf32>, vector<56x16xf32> -> vector<56x16xf32>
    %107 = vector.broadcast %6 : vector<1x16xf32> to vector<56x16xf32>
    %108 = arith.addf %106, %107 : vector<56x16xf32>
    %cst_68 = arith.constant 0.000000e+00 : f32
    %109 = vector.broadcast %cst_68 : f32 to vector<56x16xf32>
    %110 = arith.maximumf %108, %109 : vector<56x16xf32>
    %111 = vector.shape_cast %110 : vector<56x16xf32> to vector<1x56x16xf32>
    %112 = vector.broadcast %20 : vector<8x56x1xf32> to vector<8x56x16xf32>
    %113 = vector.broadcast %111 : vector<1x56x16xf32> to vector<8x56x16xf32>
    %114 = arith.mulf %112, %113 : vector<8x56x16xf32>
    %cst_69 = arith.constant dense<0xFF800000> : vector<8x16xf32>
    %115 = vector.multi_reduction <maximumf>, %114, %cst_69 [1] : vector<8x56x16xf32> to vector<8x16xf32>
    %cst_70 = arith.constant dense<0.000000e+00> : vector<8x16xf32>
    %116 = tpu.matmul %98, %7, %cst_70 {dimension_numbers = #tpu.dot_dimension_numbers<[1], [0], [0], [1], [0, 0, 1, 1], [], []>} : vector<8x4xf32>, vector<4x16xf32>, vector<8x16xf32> -> vector<8x16xf32>
    %cst_71 = arith.constant dense<0.000000e+00> : vector<8x16xf32>
    %117 = tpu.matmul %59, %8, %cst_71 {dimension_numbers = #tpu.dot_dimension_numbers<[1], [0], [0], [1], [0, 0, 1, 1], [], []>} : vector<8x4xf32>, vector<4x16xf32>, vector<8x16xf32> -> vector<8x16xf32>
    %118 = arith.addf %116, %117 : vector<8x16xf32>
    %cst_72 = arith.constant dense<0.000000e+00> : vector<8x16xf32>
    %119 = tpu.matmul %115, %9, %cst_72 {dimension_numbers = #tpu.dot_dimension_numbers<[1], [0], [0], [1], [0, 0, 1, 1], [], []>} : vector<8x16xf32>, vector<16x16xf32>, vector<8x16xf32> -> vector<8x16xf32>
    %120 = arith.addf %118, %119 : vector<8x16xf32>
    %121 = vector.broadcast %10 : vector<1x16xf32> to vector<8x16xf32>
    %122 = arith.addf %120, %121 : vector<8x16xf32>
    %cst_73 = arith.constant 0.000000e+00 : f32
    %123 = vector.broadcast %cst_73 : f32 to vector<8x16xf32>
    %124 = arith.maximumf %122, %123 : vector<8x16xf32>
    %cst_74 = arith.constant dense<0.000000e+00> : vector<8x4xf32>
    %125 = tpu.matmul %124, %11, %cst_74 {dimension_numbers = #tpu.dot_dimension_numbers<[1], [0], [0], [1], [0, 0, 1, 1], [], []>} : vector<8x16xf32>, vector<16x4xf32>, vector<8x4xf32> -> vector<8x4xf32>
    %126 = vector.broadcast %12 : vector<1x4xf32> to vector<8x4xf32>
    %127 = arith.addf %125, %126 : vector<8x4xf32>
    %cst_75 = arith.constant 0.000000e+00 : f32
    %128 = vector.broadcast %cst_75 : f32 to vector<8x4xf32>
    %129 = arith.maximumf %127, %128 : vector<8x4xf32>
    %130 = arith.mulf %129, %129 : vector<8x4xf32>
    %cst_76 = arith.constant dense<0.000000e+00> : vector<8xf32>
    %131 = vector.multi_reduction <add>, %130, %cst_76 [1] : vector<8x4xf32> to vector<8xf32>
    %132 = vector.shape_cast %131 : vector<8xf32> to vector<8x1xf32>
    %133 = math.rsqrt %132 : vector<8x1xf32>
    %cst_77 = arith.constant 1.000000e+00 : f32
    %134 = vector.broadcast %cst_77 : f32 to vector<8x1xf32>
    %135 = arith.minimumf %134, %133 : vector<8x1xf32>
    %136 = vector.broadcast %135 : vector<8x1xf32> to vector<8x4xf32>
    %137 = arith.mulf %129, %136 : vector<8x4xf32>
    %c0_78 = arith.constant 0 : index
    %c0_79 = arith.constant 0 : index
    %138 = vector.load %arg17[%c0_78, %c0_79] : memref<8x8xf32, #tpu.memory_space<vmem>>, vector<8x4xf32>
    tpu.vector_store %arg17[%c0_78, %c0_79], %137 {strides = array<i32>} : memref<8x8xf32, #tpu.memory_space<vmem>>, vector<8x4xf32>,
    %c0_80 = arith.constant 0 : index
    %c4 = arith.constant 4 : index
    %139 = vector.load %arg17[%c0_80, %c4] : memref<8x8xf32, #tpu.memory_space<vmem>>, vector<8x4xf32>
    tpu.vector_store %arg17[%c0_80, %c4], %98 {strides = array<i32>} : memref<8x8xf32, #tpu.memory_space<vmem>>, vector<8x4xf32>,
    return
  }
}

</mosaic_0001>

<llo_original>
// kernel: igcnet_repara_forward.1
$region0: #{igcnet_repara_forward.1}
  #allocation0 [shape = 'u32[]', space=smem, size = 0x4, offset = 0x4, fixed_abs, tag = 'smem constant byte address 0x4 - core index']
  #allocation1 [shape = 'u32[144,128]{1,0:T(1,128)}', space=vmem, size = 0x12000, scoped, tag = 'internal scratch']
  %s0 = inlined_call_operand.vmem [shape: f32[8,4], index: 0, kind: input, shape index: {}]
  %s1 = inlined_call_operand.vmem [shape: f32[8,4], index: 1, kind: input, shape index: {}]
  %s2 = inlined_call_operand.vmem [shape: f32[56,4], index: 2, kind: input, shape index: {}]
  %s3 = inlined_call_operand.vmem [shape: f32[56,8], index: 3, kind: input, shape index: {}]
  %s4 = inlined_call_operand.vmem [shape: f32[8,56], index: 4, kind: input, shape index: {}]
  %s5 = inlined_call_operand.vmem [shape: f32[4,16], index: 5, kind: input, shape index: {}]
  %s6 = inlined_call_operand.vmem [shape: f32[4,16], index: 6, kind: input, shape index: {}]
  %s7 = inlined_call_operand.vmem [shape: f32[4,16], index: 7, kind: input, shape index: {}]
  %s8 = inlined_call_operand.vmem [shape: f32[1,16], index: 8, kind: input, shape index: {}]
  %s9 = inlined_call_operand.vmem [shape: f32[16,16], index: 9, kind: input, shape index: {}]
  %s10 = inlined_call_operand.vmem [shape: f32[1,16], index: 10, kind: input, shape index: {}]
  %s11 = inlined_call_operand.vmem [shape: f32[4,16], index: 11, kind: input, shape index: {}]
  %s12 = inlined_call_operand.vmem [shape: f32[4,16], index: 12, kind: input, shape index: {}]
  %s13 = inlined_call_operand.vmem [shape: f32[16,16], index: 13, kind: input, shape index: {}]
  %s14 = inlined_call_operand.vmem [shape: f32[1,16], index: 14, kind: input, shape index: {}]
  %s15 = inlined_call_operand.vmem [shape: f32[16,4], index: 15, kind: input, shape index: {}]
  %s16 = inlined_call_operand.vmem [shape: f32[1,4], index: 16, kind: input, shape index: {}]
  %s17 = inlined_call_operand.hbm [shape: f32[8,8], index: 17, kind: output, shape index: {}]
  %s18 = sld [smem:[#allocation0]]
  $region78: #{igcnet_repara_forward.1} parent=0
    _
  %s20 = ssub.s32 1, %s18
  %s21 = scalar_select 0, %s20, %s18
  $region1: #{igcnet_repara_forward.1} parent=0
    #allocation2 [shape = 'u8[4096]{0}', space=vmem, size = 0x1000, scoped, tag = 'output window, operand 0, single buffered']
    #allocation3 [shape = 's32[1]{0}', space=sflag, size = 0x4, scoped, tag = 'scoped memory for igcnet_repara_forward.1']
    %22 = vsyncpa [#allocation3], 0
    // Predicated region
    $region2: #{igcnet_repara_forward.1} parent=1 // pred_check
      _
    $region3: #{igcnet_repara_forward.1} parent=1 // pred_check_branch
      %24 = sbr.rel (0) target = $region5
    $region4: #{igcnet_repara_forward.1} parent=1 // pred_region
      _
    $region5: #{igcnet_repara_forward.1} parent=1 // pred_fallthru
      _
    // Predicated region
    $region6: #{igcnet_repara_forward.1} parent=1 // pred_check
      _
    $region7: #{igcnet_repara_forward.1} parent=1 // pred_check_branch
      %26 = sbr.rel (0) target = $region9
    $region8: #{igcnet_repara_forward.1} parent=1 // pred_region
      _
    $region9: #{igcnet_repara_forward.1} parent=1 // pred_fallthru
      _
    // Predicated region
    $region10: #{igcnet_repara_forward.1} parent=1 // pred_check
      _
    $region11: #{igcnet_repara_forward.1} parent=1 // pred_check_branch
      %28 = sbr.rel (0) target = $region13
    $region12: #{igcnet_repara_forward.1} parent=1 // pred_region
      _
    $region13: #{igcnet_repara_forward.1} parent=1 // pred_fallthru
      _
    // Predicated region
    $region14: #{igcnet_repara_forward.1} parent=1 // pred_check
      _
    $region15: #{igcnet_repara_forward.1} parent=1 // pred_check_branch
      %30 = sbr.rel (0) target = $region17
    $region16: #{igcnet_repara_forward.1} parent=1 // pred_region
      _
    $region17: #{igcnet_repara_forward.1} parent=1 // pred_fallthru
      _
    // Predicated region
    $region18: #{igcnet_repara_forward.1} parent=1 // pred_check
      _
    $region19: #{igcnet_repara_forward.1} parent=1 // pred_check_branch
      %32 = sbr.rel (0) target = $region21
    $region20: #{igcnet_repara_forward.1} parent=1 // pred_region
      _
    $region21: #{igcnet_repara_forward.1} parent=1 // pred_fallthru
      _
    // Predicated region
    $region22: #{igcnet_repara_forward.1} parent=1 // pred_check
      _
    $region23: #{igcnet_repara_forward.1} parent=1 // pred_check_branch
      %34 = sbr.rel (0) target = $region25
    $region24: #{igcnet_repara_forward.1} parent=1 // pred_region
      _
    $region25: #{igcnet_repara_forward.1} parent=1 // pred_fallthru
      _
    // Predicated region
    $region26: #{igcnet_repara_forward.1} parent=1 // pred_check
      _
    $region27: #{igcnet_repara_forward.1} parent=1 // pred_check_branch
      %36 = sbr.rel (0) target = $region29
    $region28: #{igcnet_repara_forward.1} parent=1 // pred_region
      _
    $region29: #{igcnet_repara_forward.1} parent=1 // pred_fallthru
      _
    // Predicated region
    $region30: #{igcnet_repara_forward.1} parent=1 // pred_check
      _
    $region31: #{igcnet_repara_forward.1} parent=1 // pred_check_branch
      %38 = sbr.rel (0) target = $region33
    $region32: #{igcnet_repara_forward.1} parent=1 // pred_region
      _
    $region33: #{igcnet_repara_forward.1} parent=1 // pred_fallthru
      _
    // Predicated region
    $region34: #{igcnet_repara_forward.1} parent=1 // pred_check
      _
    $region35: #{igcnet_repara_forward.1} parent=1 // pred_check_branch
      %40 = sbr.rel (0) target = $region37
    $region36: #{igcnet_repara_forward.1} parent=1 // pred_region
      _
    $region37: #{igcnet_repara_forward.1} parent=1 // pred_fallthru
      _
    // Predicated region
    $region38: #{igcnet_repara_forward.1} parent=1 // pred_check
      _
    $region39: #{igcnet_repara_forward.1} parent=1 // pred_check_branch
      %42 = sbr.rel (0) target = $region41
    $region40: #{igcnet_repara_forward.1} parent=1 // pred_region
      _
    $region41: #{igcnet_repara_forward.1} parent=1 // pred_fallthru
      _
    // Predicated region
    $region42: #{igcnet_repara_forward.1} parent=1 // pred_check
      _
    $region43: #{igcnet_repara_forward.1} parent=1 // pred_check_branch
      %44 = sbr.rel (0) target = $region45
    $region44: #{igcnet_repara_forward.1} parent=1 // pred_region
      _
    $region45: #{igcnet_repara_forward.1} parent=1 // pred_fallthru
      _
    // Predicated region
    $region46: #{igcnet_repara_forward.1} parent=1 // pred_check
      _
    $region47: #{igcnet_repara_forward.1} parent=1 // pred_check_branch
      %46 = sbr.rel (0) target = $region49
    $region48: #{igcnet_repara_forward.1} parent=1 // pred_region
      _
    $region49: #{igcnet_repara_forward.1} parent=1 // pred_fallthru
      _
    // Predicated region
    $region50: #{igcnet_repara_forward.1} parent=1 // pred_check
      _
    $region51: #{igcnet_repara_forward.1} parent=1 // pred_check_branch
      %48 = sbr.rel (0) target = $region53
    $region52: #{igcnet_repara_forward.1} parent=1 // pred_region
      _
    $region53: #{igcnet_repara_forward.1} parent=1 // pred_fallthru
      _
    // Predicated region
    $region54: #{igcnet_repara_forward.1} parent=1 // pred_check
      _
    $region55: #{igcnet_repara_forward.1} parent=1 // pred_check_branch
      %50 = sbr.rel (0) target = $region57
    $region56: #{igcnet_repara_forward.1} parent=1 // pred_region
      _
    $region57: #{igcnet_repara_forward.1} parent=1 // pred_fallthru
      _
    // Predicated region
    $region58: #{igcnet_repara_forward.1} parent=1 // pred_check
      _
    $region59: #{igcnet_repara_forward.1} parent=1 // pred_check_branch
      %52 = sbr.rel (0) target = $region61
    $region60: #{igcnet_repara_forward.1} parent=1 // pred_region
      _
    $region61: #{igcnet_repara_forward.1} parent=1 // pred_fallthru
      _
    // Predicated region
    $region62: #{igcnet_repara_forward.1} parent=1 // pred_check
      _
    $region63: #{igcnet_repara_forward.1} parent=1 // pred_check_branch
      %54 = sbr.rel (0) target = $region65
    $region64: #{igcnet_repara_forward.1} parent=1 // pred_region
      _
    $region65: #{igcnet_repara_forward.1} parent=1 // pred_fallthru
      _
    // Predicated region
    $region66: #{igcnet_repara_forward.1} parent=1 // pred_check
      _
    $region67: #{igcnet_repara_forward.1} parent=1 // pred_check_branch
      %56 = sbr.rel (0) target = $region69
    $region68: #{igcnet_repara_forward.1} parent=1 // pred_region
      _
    $region69: #{igcnet_repara_forward.1} parent=1 // pred_fallthru
      _
    %v57 = vld [vmem:[%s0] sm:$0xff]
    %v58 = vld [vmem:[%s1] sm:$0xff]
    %v59 = vld [vmem:[%s3] sm:$0xff]
    %v60 = vld [vmem:[%s3 + $0x8] sm:$0xff]
    %v61 = vld [vmem:[%s3 + $0x10] sm:$0xff]
    %v62 = vld [vmem:[%s3 + $0x18] sm:$0xff]
    %v63 = vld [vmem:[%s3 + $0x20] sm:$0xff]
    %v64 = vld [vmem:[%s3 + $0x28] sm:$0xff]
    %v65 = vld [vmem:[%s3 + $0x30] sm:$0xff]
    %v66 = vld [vmem:[%s5] sm:$0xf]
    %v67 = vld [vmem:[%s6] sm:$0xf]
    %v68 = vld [vmem:[%s9] sm:$0xff]
    %v69 = vld [vmem:[%s9 + $0x8] sm:$0xff]
    %v70 = vld [vmem:[%s10] sm:$0x1]
    %v71 = vld [vmem:[%s11] sm:$0xf]
    %v72 = vld [vmem:[%s12] sm:$0xf]
    %v73 = vld [vmem:[%s13] sm:$0xff]
    %v74 = vld [vmem:[%s13 + $0x8] sm:$0xff]
    %v75 = vld [vmem:[%s14] sm:$0x1]
    %v76 = vld [vmem:[%s15] sm:$0xff]
    %v77 = vld [vmem:[%s15 + $0x8] sm:$0xff]
    %v78 = vld [vmem:[%s16] sm:$0x1]
    %v79 = vld [vmem:[%s2] sm:$0xff]
    %v80 = vld [vmem:[%s2 + $0x8] sm:$0xff]
    %v81 = vld [vmem:[%s2 + $0x10] sm:$0xff]
    %v82 = vld [vmem:[%s2 + $0x18] sm:$0xff]
    %v83 = vld [vmem:[%s2 + $0x20] sm:$0xff]
    %v84 = vld [vmem:[%s2 + $0x28] sm:$0xff]
    %v85 = vld [vmem:[%s2 + $0x30] sm:$0xff]
    %v86 = vld [vmem:[%s7] sm:$0xf]
    %v87 = vld [vmem:[%s8] sm:$0x1]
    %v89 = vlaneseq
    %v90 = vshrl.u32 %v89, 7
    %v91 = vsub.s32 0, %v90
    %v92 = vrot.slane %v87, %v91
    %vm94 = vcmask 31744
    %v96 = vsel %vm94, %v79, 0
    %v99 = vsel %vm94, %v80, 0
    %v102 = vsel %vm94, %v81, 0
    %v105 = vsel %vm94, %v82, 0
    %v108 = vsel %vm94, %v83, 0
    %v111 = vsel %vm94, %v84, 0
    %v114 = vsel %vm94, %v85, 0
    %vm116 = vcmask 1043456
    %v118 = vsel %vm116, %v86, 0
    %120 = vmatprep.subr.mxu0 0.0
    %121 = vmatpush1.msra.mxu0 0.0
    %122 = vmatprep.subr.mxu0 0.0
    %123 = vmatpush1.msra.mxu0 0.0
    %124 = vmatprep.subr.mxu0 0.0
    %125 = vmatpush1.msra.mxu0 0.0
    %126 = vmatprep.subr.mxu0 0.0
    %127 = vmatpush1.msra.mxu0 0.0
    %128 = vmatprep.subr.mxu0 0.0
    %129 = vmatpush1.msra.mxu0 0.0
    %130 = vmatprep.subr.mxu0 0.0
    %131 = vmatpush1.msra.mxu0 0.0
    %132 = vmatprep.subr.mxu0 0.0
    %133 = vmatpush1.msra.mxu0 0.0
    %134 = vmatprep.subr.mxu0 0.0
    %135 = vmatpush1.msra.mxu0 0.0
    %136 = vmatprep.subr.mxu0 0.0
    %137 = vmatpush1.msra.mxu0 0.0
    %138 = vmatprep.subr.mxu0 0.0
    %139 = vmatpush1.msra.mxu0 0.0
    %140 = vmatprep.subr.mxu0 0.0
    %141 = vmatpush1.msra.mxu0 0.0
    %142 = vmatprep.subr.mxu0 0.0
    %143 = vmatpush1.msra.mxu0 0.0
    %144 = vmatprep.subr.mxu0 0.0
    %145 = vmatpush1.msra.mxu0 0.0
    %146 = vmatprep.subr.mxu0 0.0
    %147 = vmatpush1.msra.mxu0 0.0
    %148 = vmatprep.subr.mxu0 0.0
    %149 = vmatpush1.msra.mxu0 0.0
    %150 = vmatprep.subr.mxu0 0.0
    %151 = vmatpush1.msra.mxu0 %v118
    %152 = vmatprep.subr.mxu0 0.0
    %153 = vmatpush2.msra.mxu0 0.0
    %154 = vmatprep.subr.mxu0 0.0
    %155 = vmatpush2.msra.mxu0 0.0
    %156 = vmatprep.subr.mxu0 0.0
    %157 = vmatpush2.msra.mxu0 0.0
    %158 = vmatprep.subr.mxu0 0.0
    %159 = vmatpush2.msra.mxu0 0.0
    %160 = vmatprep.subr.mxu0 0.0
    %161 = vmatpush2.msra.mxu0 0.0
    %162 = vmatprep.subr.mxu0 0.0
    %163 = vmatpush2.msra.mxu0 0.0
    %164 = vmatprep.subr.mxu0 0.0
    %165 = vmatpush2.msra.mxu0 0.0
    %166 = vmatprep.subr.mxu0 0.0
    %167 = vmatpush2.msra.mxu0 0.0
    %168 = vmatprep.subr.mxu0 0.0
    %169 = vmatpush2.msra.mxu0 0.0
    %170 = vmatprep.subr.mxu0 0.0
    %171 = vmatpush2.msra.mxu0 0.0
    %172 = vmatprep.subr.mxu0 0.0
    %173 = vmatpush2.msra.mxu0 0.0
    %174 = vmatprep.subr.mxu0 0.0
    %175 = vmatpush2.msra.mxu0 0.0
    %176 = vmatprep.subr.mxu0 0.0
    %177 = vmatpush2.msra.mxu0 0.0
    %178 = vmatprep.subr.mxu0 0.0
    %179 = vmatpush2.msra.mxu0 0.0
    %180 = vmatprep.subr.mxu0 0.0
    %181 = vmatpush2.msra.mxu0 0.0
    %182 = vmatprep.subr.mxu0 0.0
    %183 = vmatpush2.msra.mxu0 0.0
    %184 = vmatprep.mubr.f32.mxu0 0.0
    %185 = vmatmul.mubr.f32.gmra.mxu0 %v96
    %v186 = vpop.f32.mrf.mxu0
    %v187 = vadd.f32 %v92, %v186
    %v188 = vpop.f32.mrf.mxu0
    %189 = vmatprep.mubr.f32.mxu0 0.0
    %190 = vmatmul.mubr.f32.gmra.mxu0 %v99
    %v191 = vpop.f32.mrf.mxu0
    %v192 = vadd.f32 %v92, %v191
    %v193 = vpop.f32.mrf.mxu0
    %194 = vmatprep.mubr.f32.mxu0 0.0
    %195 = vmatmul.mubr.f32.gmra.mxu0 %v102
    %v196 = vpop.f32.mrf.mxu0
    %v197 = vadd.f32 %v92, %v196
    %v198 = vpop.f32.mrf.mxu0
    %199 = vmatprep.mubr.f32.mxu0 0.0
    %200 = vmatmul.mubr.f32.gmra.mxu0 %v105
    %v201 = vpop.f32.mrf.mxu0
    %v202 = vadd.f32 %v92, %v201
    %v203 = vpop.f32.mrf.mxu0
    %204 = vmatprep.mubr.f32.mxu0 0.0
    %205 = vmatmul.mubr.f32.gmra.mxu0 %v108
    %v206 = vpop.f32.mrf.mxu0
    %v207 = vadd.f32 %v92, %v206
    %v208 = vpop.f32.mrf.mxu0
    %209 = vmatprep.mubr.f32.mxu0 0.0
    %210 = vmatmul.mubr.f32.gmra.mxu0 %v111
    %v211 = vpop.f32.mrf.mxu0
    %v212 = vadd.f32 %v92, %v211
    %v213 = vpop.f32.mrf.mxu0
    %214 = vmatprep.mubr.f32.mxu0 0.0
    %215 = vmatmul.mubr.f32.gmra.mxu0 %v114
    %v216 = vpop.f32.mrf.mxu0
    %v217 = vadd.f32 %v92, %v216
    %v218 = vpop.f32.mrf.mxu0
    %219 = vdwg.mxu0
    %v220 = vld [vmem:[%s4] sm:$0xff]
    %v221 = vlaneseq
    %v222 = vshrl.u32 %v221, 7
    %v223 = vsub.s32 0, %v222
    %v224 = vrot.slane %v220, %v223
    %226 = vbcast.lane.b32.xlu0 %v224, 256
    %v227 = vpop.permute.xlu0 %226
    %s229 = sor.u32 256, 8
    %230 = vbcast.lane.b32.xlu0 %v224, %s229
    %v231 = vpop.permute.xlu0 %230
    %s233 = sor.u32 256, 16
    %234 = vbcast.lane.b32.xlu0 %v224, %s233
    %v235 = vpop.permute.xlu0 %234
    %s237 = sor.u32 256, 24
    %238 = vbcast.lane.b32.xlu0 %v224, %s237
    %v239 = vpop.permute.xlu0 %238
    %s241 = sor.u32 256, 32
    %242 = vbcast.lane.b32.xlu0 %v224, %s241
    %v243 = vpop.permute.xlu0 %242
    %s245 = sor.u32 256, 40
    %246 = vbcast.lane.b32.xlu0 %v224, %s245
    %v247 = vpop.permute.xlu0 %246
    %s249 = sor.u32 256, 48
    %250 = vbcast.lane.b32.xlu0 %v224, %s249
    %v251 = vpop.permute.xlu0 %250
    %v252 = vlaneseq
    %v253 = vshrl.u32 %v252, 7
    %v254 = vsub.s32 1, %v253
    %v255 = vrot.slane %v220, %v254
    %257 = vbcast.lane.b32.xlu0 %v255, 256
    %v258 = vpop.permute.xlu0 %257
    %s260 = sor.u32 256, 8
    %261 = vbcast.lane.b32.xlu0 %v255, %s260
    %v262 = vpop.permute.xlu0 %261
    %s264 = sor.u32 256, 16
    %265 = vbcast.lane.b32.xlu0 %v255, %s264
    %v266 = vpop.permute.xlu0 %265
    %s268 = sor.u32 256, 24
    %269 = vbcast.lane.b32.xlu0 %v255, %s268
    %v270 = vpop.permute.xlu0 %269
    %s272 = sor.u32 256, 32
    %273 = vbcast.lane.b32.xlu0 %v255, %s272
    %v274 = vpop.permute.xlu0 %273
    %s276 = sor.u32 256, 40
    %277 = vbcast.lane.b32.xlu0 %v255, %s276
    %v278 = vpop.permute.xlu0 %277
    %s280 = sor.u32 256, 48
    %281 = vbcast.lane.b32.xlu0 %v255, %s280
    %v282 = vpop.permute.xlu0 %281
    %v283 = vlaneseq
    %v284 = vshrl.u32 %v283, 7
    %v285 = vsub.s32 2, %v284
    %v286 = vrot.slane %v220, %v285
    %288 = vbcast.lane.b32.xlu0 %v286, 256
    %v289 = vpop.permute.xlu0 %288
    %s291 = sor.u32 256, 8
    %292 = vbcast.lane.b32.xlu0 %v286, %s291
    %v293 = vpop.permute.xlu0 %292
    %s295 = sor.u32 256, 16
    %296 = vbcast.lane.b32.xlu0 %v286, %s295
    %v297 = vpop.permute.xlu0 %296
    %s299 = sor.u32 256, 24
    %300 = vbcast.lane.b32.xlu0 %v286, %s299
    %v301 = vpop.permute.xlu0 %300
    %s303 = sor.u32 256, 32
    %304 = vbcast.lane.b32.xlu0 %v286, %s303
    %v305 = vpop.permute.xlu0 %304
    %s307 = sor.u32 256, 40
    %308 = vbcast.lane.b32.xlu0 %v286, %s307
    %v309 = vpop.permute.xlu0 %308
    %s311 = sor.u32 256, 48
    %312 = vbcast.lane.b32.xlu0 %v286, %s311
    %v313 = vpop.permute.xlu0 %312
    %v314 = vlaneseq
    %v315 = vshrl.u32 %v314, 7
    %v316 = vsub.s32 3, %v315
    %v317 = vrot.slane %v220, %v316
    %319 = vbcast.lane.b32.xlu0 %v317, 256
    %v320 = vpop.permute.xlu0 %319
    %s322 = sor.u32 256, 8
    %323 = vbcast.lane.b32.xlu0 %v317, %s322
    %v324 = vpop.permute.xlu0 %323
    %s326 = sor.u32 256, 16
    %327 = vbcast.lane.b32.xlu0 %v317, %s326
    %v328 = vpop.permute.xlu0 %327
    %s330 = sor.u32 256, 24
    %331 = vbcast.lane.b32.xlu0 %v317, %s330
    %v332 = vpop.permute.xlu0 %331
    %s334 = sor.u32 256, 32
    %335 = vbcast.lane.b32.xlu0 %v317, %s334
    %v336 = vpop.permute.xlu0 %335
    %s338 = sor.u32 256, 40
    %339 = vbcast.lane.b32.xlu0 %v317, %s338
    %v340 = vpop.permute.xlu0 %339
    %s342 = sor.u32 256, 48
    %343 = vbcast.lane.b32.xlu0 %v317, %s342
    %v344 = vpop.permute.xlu0 %343
    %v345 = vlaneseq
    %v346 = vshrl.u32 %v345, 7
    %v347 = vsub.s32 4, %v346
    %v348 = vrot.slane %v220, %v347
    %350 = vbcast.lane.b32.xlu0 %v348, 256
    %v351 = vpop.permute.xlu0 %350
    %s353 = sor.u32 256, 8
    %354 = vbcast.lane.b32.xlu0 %v348, %s353
    %v355 = vpop.permute.xlu0 %354
    %s357 = sor.u32 256, 16
    %358 = vbcast.lane.b32.xlu0 %v348, %s357
    %v359 = vpop.permute.xlu0 %358
    %s361 = sor.u32 256, 24
    %362 = vbcast.lane.b32.xlu0 %v348, %s361
    %v363 = vpop.permute.xlu0 %362
    %s365 = sor.u32 256, 32
    %366 = vbcast.lane.b32.xlu0 %v348, %s365
    %v367 = vpop.permute.xlu0 %366
    %s369 = sor.u32 256, 40
    %370 = vbcast.lane.b32.xlu0 %v348, %s369
    %v371 = vpop.permute.xlu0 %370
    %s373 = sor.u32 256, 48
    %374 = vbcast.lane.b32.xlu0 %v348, %s373
    %v375 = vpop.permute.xlu0 %374
    %v376 = vlaneseq
    %v377 = vshrl.u32 %v376, 7
    %v378 = vsub.s32 5, %v377
    %v379 = vrot.slane %v220, %v378
    %381 = vbcast.lane.b32.xlu0 %v379, 256
    %v382 = vpop.permute.xlu0 %381
    %s384 = sor.u32 256, 8
    %385 = vbcast.lane.b32.xlu0 %v379, %s384
    %v386 = vpop.permute.xlu0 %385
    %s388 = sor.u32 256, 16
    %389 = vbcast.lane.b32.xlu0 %v379, %s388
    %v390 = vpop.permute.xlu0 %389
    %s392 = sor.u32 256, 24
    %393 = vbcast.lane.b32.xlu0 %v379, %s392
    %v394 = vpop.permute.xlu0 %393
    %s396 = sor.u32 256, 32
    %397 = vbcast.lane.b32.xlu0 %v379, %s396
    %v398 = vpop.permute.xlu0 %397
    %s400 = sor.u32 256, 40
    %401 = vbcast.lane.b32.xlu0 %v379, %s400
    %v402 = vpop.permute.xlu0 %401
    %s404 = sor.u32 256, 48
    %405 = vbcast.lane.b32.xlu0 %v379, %s404
    %v406 = vpop.permute.xlu0 %405
    %v407 = vlaneseq
    %v408 = vshrl.u32 %v407, 7
    %v409 = vsub.s32 6, %v408
    %v410 = vrot.slane %v220, %v409
    %412 = vbcast.lane.b32.xlu0 %v410, 256
    %v413 = vpop.permute.xlu0 %412
    %s415 = sor.u32 256, 8
    %416 = vbcast.lane.b32.xlu0 %v410, %s415
    %v417 = vpop.permute.xlu0 %416
    %s419 = sor.u32 256, 16
    %420 = vbcast.lane.b32.xlu0 %v410, %s419
    %v421 = vpop.permute.xlu0 %420
    %s423 = sor.u32 256, 24
    %424 = vbcast.lane.b32.xlu0 %v410, %s423
    %v425 = vpop.permute.xlu0 %424
    %s427 = sor.u32 256, 32
    %428 = vbcast.lane.b32.xlu0 %v410, %s427
    %v429 = vpop.permute.xlu0 %428
    %s431 = sor.u32 256, 40
    %432 = vbcast.lane.b32.xlu0 %v410, %s431
    %v433 = vpop.permute.xlu0 %432
    %s435 = sor.u32 256, 48
    %436 = vbcast.lane.b32.xlu0 %v410, %s435
    %v437 = vpop.permute.xlu0 %436
    %v438 = vlaneseq
    %v439 = vshrl.u32 %v438, 7
    %v440 = vsub.s32 7, %v439
    %v441 = vrot.slane %v220, %v440
    %443 = vbcast.lane.b32.xlu0 %v441, 256
    %v444 = vpop.permute.xlu0 %443
    %s446 = sor.u32 256, 8
    %447 = vbcast.lane.b32.xlu0 %v441, %s446
    %v448 = vpop.permute.xlu0 %447
    %s450 = sor.u32 256, 16
    %451 = vbcast.lane.b32.xlu0 %v441, %s450
    %v452 = vpop.permute.xlu0 %451
    %s454 = sor.u32 256, 24
    %455 = vbcast.lane.b32.xlu0 %v441, %s454
    %v456 = vpop.permute.xlu0 %455
    %s458 = sor.u32 256, 32
    %459 = vbcast.lane.b32.xlu0 %v441, %s458
    %v460 = vpop.permute.xlu0 %459
    %s462 = sor.u32 256, 40
    %463 = vbcast.lane.b32.xlu0 %v441, %s462
    %v464 = vpop.permute.xlu0 %463
    %s466 = sor.u32 256, 48
    %467 = vbcast.lane.b32.xlu0 %v441, %s466
    %v468 = vpop.permute.xlu0 %467
    %v470 = vsel %vm94, %v58, 0
    %v473 = vsel %vm116, %v67, 0
    %475 = vmatprep.subr.mxu0 0.0
    %476 = vmatpush1.msra.mxu0 0.0
    %477 = vmatprep.subr.mxu0 0.0
    %478 = vmatpush1.msra.mxu0 0.0
    %479 = vmatprep.subr.mxu0 0.0
    %480 = vmatpush1.msra.mxu0 0.0
    %481 = vmatprep.subr.mxu0 0.0
    %482 = vmatpush1.msra.mxu0 0.0
    %483 = vmatprep.subr.mxu0 0.0
    %484 = vmatpush1.msra.mxu0 0.0
    %485 = vmatprep.subr.mxu0 0.0
    %486 = vmatpush1.msra.mxu0 0.0
    %487 = vmatprep.subr.mxu0 0.0
    %488 = vmatpush1.msra.mxu0 0.0
    %489 = vmatprep.subr.mxu0 0.0
    %490 = vmatpush1.msra.mxu0 0.0
    %491 = vmatprep.subr.mxu0 0.0
    %492 = vmatpush1.msra.mxu0 0.0
    %493 = vmatprep.subr.mxu0 0.0
    %494 = vmatpush1.msra.mxu0 0.0
    %495 = vmatprep.subr.mxu0 0.0
    %496 = vmatpush1.msra.mxu0 0.0
    %497 = vmatprep.subr.mxu0 0.0
    %498 = vmatpush1.msra.mxu0 0.0
    %499 = vmatprep.subr.mxu0 0.0
    %500 = vmatpush1.msra.mxu0 0.0
    %501 = vmatprep.subr.mxu0 0.0
    %502 = vmatpush1.msra.mxu0 0.0
    %503 = vmatprep.subr.mxu0 0.0
    %504 = vmatpush1.msra.mxu0 0.0
    %505 = vmatprep.subr.mxu0 0.0
    %506 = vmatpush1.msra.mxu0 %v473
    %507 = vmatprep.subr.mxu0 0.0
    %508 = vmatpush2.msra.mxu0 0.0
    %509 = vmatprep.subr.mxu0 0.0
    %510 = vmatpush2.msra.mxu0 0.0
    %511 = vmatprep.subr.mxu0 0.0
    %512 = vmatpush2.msra.mxu0 0.0
    %513 = vmatprep.subr.mxu0 0.0
    %514 = vmatpush2.msra.mxu0 0.0
    %515 = vmatprep.subr.mxu0 0.0
    %516 = vmatpush2.msra.mxu0 0.0
    %517 = vmatprep.subr.mxu0 0.0
    %518 = vmatpush2.msra.mxu0 0.0
    %519 = vmatprep.subr.mxu0 0.0
    %520 = vmatpush2.msra.mxu0 0.0
    %521 = vmatprep.subr.mxu0 0.0
    %522 = vmatpush2.msra.mxu0 0.0
    %523 = vmatprep.subr.mxu0 0.0
    %524 = vmatpush2.msra.mxu0 0.0
    %525 = vmatprep.subr.mxu0 0.0
    %526 = vmatpush2.msra.mxu0 0.0
    %527 = vmatprep.subr.mxu0 0.0
    %528 = vmatpush2.msra.mxu0 0.0
    %529 = vmatprep.subr.mxu0 0.0
    %530 = vmatpush2.msra.mxu0 0.0
    %531 = vmatprep.subr.mxu0 0.0
    %532 = vmatpush2.msra.mxu0 0.0
    %533 = vmatprep.subr.mxu0 0.0
    %534 = vmatpush2.msra.mxu0 0.0
    %535 = vmatprep.subr.mxu0 0.0
    %536 = vmatpush2.msra.mxu0 0.0
    %537 = vmatprep.subr.mxu0 0.0
    %538 = vmatpush2.msra.mxu0 0.0
    %539 = vmatprep.mubr.f32.mxu0 0.0
    %540 = vmatmul.mubr.f32.gmra.mxu0 %v470
    %v541 = vpop.f32.mrf.mxu0
    %v542 = vadd.f32 0.0, %v541
    %v543 = vpop.f32.mrf.mxu0
    %544 = vdwg.mxu0
    %v546 = vsel %vm94, %v57, 0
    %v549 = vsel %vm116, %v66, 0
    %551 = vmatprep.subr.mxu0 0.0
    %552 = vmatpush1.msra.mxu0 0.0
    %553 = vmatprep.subr.mxu0 0.0
    %554 = vmatpush1.msra.mxu0 0.0
    %555 = vmatprep.subr.mxu0 0.0
    %556 = vmatpush1.msra.mxu0 0.0
    %557 = vmatprep.subr.mxu0 0.0
    %558 = vmatpush1.msra.mxu0 0.0
    %559 = vmatprep.subr.mxu0 0.0
    %560 = vmatpush1.msra.mxu0 0.0
    %561 = vmatprep.subr.mxu0 0.0
    %562 = vmatpush1.msra.mxu0 0.0
    %563 = vmatprep.subr.mxu0 0.0
    %564 = vmatpush1.msra.mxu0 0.0
    %565 = vmatprep.subr.mxu0 0.0
    %566 = vmatpush1.msra.mxu0 0.0
    %567 = vmatprep.subr.mxu0 0.0
    %568 = vmatpush1.msra.mxu0 0.0
    %569 = vmatprep.subr.mxu0 0.0
    %570 = vmatpush1.msra.mxu0 0.0
    %571 = vmatprep.subr.mxu0 0.0
    %572 = vmatpush1.msra.mxu0 0.0
    %573 = vmatprep.subr.mxu0 0.0
    %574 = vmatpush1.msra.mxu0 0.0
    %575 = vmatprep.subr.mxu0 0.0
    %576 = vmatpush1.msra.mxu0 0.0
    %577 = vmatprep.subr.mxu0 0.0
    %578 = vmatpush1.msra.mxu0 0.0
    %579 = vmatprep.subr.mxu0 0.0
    %580 = vmatpush1.msra.mxu0 0.0
    %581 = vmatprep.subr.mxu0 0.0
    %582 = vmatpush1.msra.mxu0 %v549
    %583 = vmatprep.subr.mxu0 0.0
    %584 = vmatpush2.msra.mxu0 0.0
    %585 = vmatprep.subr.mxu0 0.0
    %586 = vmatpush2.msra.mxu0 0.0
    %587 = vmatprep.subr.mxu0 0.0
    %588 = vmatpush2.msra.mxu0 0.0
    %589 = vmatprep.subr.mxu0 0.0
    %590 = vmatpush2.msra.mxu0 0.0
    %591 = vmatprep.subr.mxu0 0.0
    %592 = vmatpush2.msra.mxu0 0.0
    %593 = vmatprep.subr.mxu0 0.0
    %594 = vmatpush2.msra.mxu0 0.0
    %595 = vmatprep.subr.mxu0 0.0
    %596 = vmatpush2.msra.mxu0 0.0
    %597 = vmatprep.subr.mxu0 0.0
    %598 = vmatpush2.msra.mxu0 0.0
    %599 = vmatprep.subr.mxu0 0.0
    %600 = vmatpush2.msra.mxu0 0.0
    %601 = vmatprep.subr.mxu0 0.0
    %602 = vmatpush2.msra.mxu0 0.0
    %603 = vmatprep.subr.mxu0 0.0
    %604 = vmatpush2.msra.mxu0 0.0
    %605 = vmatprep.subr.mxu0 0.0
    %606 = vmatpush2.msra.mxu0 0.0
    %607 = vmatprep.subr.mxu0 0.0
    %608 = vmatpush2.msra.mxu0 0.0
    %609 = vmatprep.subr.mxu0 0.0
    %610 = vmatpush2.msra.mxu0 0.0
    %611 = vmatprep.subr.mxu0 0.0
    %612 = vmatpush2.msra.mxu0 0.0
    %613 = vmatprep.subr.mxu0 0.0
    %614 = vmatpush2.msra.mxu0 0.0
    %615 = vmatprep.mubr.f32.mxu0 0.0
    %616 = vmatmul.mubr.f32.gmra.mxu0 %v546
    %v617 = vpop.f32.mrf.mxu0
    %v618 = vadd.f32 %v542, %v617
    %v619 = vpop.f32.mrf.mxu0
    %620 = vdwg.mxu0
    %vm621 = vcmask 64512
    %v623 = vsel %vm621, %v59, 0
    %v626 = vsel %vm621, %v60, 0
    %v629 = vsel %vm621, %v61, 0
    %v632 = vsel %vm621, %v62, 0
    %v635 = vsel %vm621, %v63, 0
    %v638 = vsel %vm621, %v64, 0
    %v641 = vsel %vm621, %v65, 0
    %643 = vmatprep.subr.mxu0 0.0
    %644 = vmatpush1.msra.mxu0 0.0
    %645 = vmatprep.subr.mxu0 0.0
    %646 = vmatpush1.msra.mxu0 0.0
    %647 = vmatprep.subr.mxu0 0.0
    %648 = vmatpush1.msra.mxu0 0.0
    %649 = vmatprep.subr.mxu0 0.0
    %650 = vmatpush1.msra.mxu0 0.0
    %651 = vmatprep.subr.mxu0 0.0
    %652 = vmatpush1.msra.mxu0 0.0
    %653 = vmatprep.subr.mxu0 0.0
    %654 = vmatpush1.msra.mxu0 0.0
    %655 = vmatprep.subr.mxu0 0.0
    %656 = vmatpush1.msra.mxu0 0.0
    %657 = vmatprep.subr.mxu0 0.0
    %658 = vmatpush1.msra.mxu0 0.0
    %659 = vmatprep.subr.mxu0 0.0
    %660 = vmatpush1.msra.mxu0 0.0
    %661 = vmatprep.subr.mxu0 0.0
    %662 = vmatpush1.msra.mxu0 0.0
    %663 = vmatprep.subr.mxu0 0.0
    %664 = vmatpush1.msra.mxu0 0.0
    %665 = vmatprep.subr.mxu0 0.0
    %666 = vmatpush1.msra.mxu0 0.0
    %667 = vmatprep.subr.mxu0 0.0
    %668 = vmatpush1.msra.mxu0 0.0
    %669 = vmatprep.subr.mxu0 0.0
    %670 = vmatpush1.msra.mxu0 0.0
    %671 = vmatprep.subr.mxu0 0.0
    %672 = vmatpush1.msra.mxu0 0.0
    %673 = vmatprep.subr.mxu0 0.0
    %674 = vmatpush1.msra.mxu0 %v618
    %675 = vmatprep.subr.mxu0 0.0
    %676 = vmatpush2.msra.mxu0 0.0
    %677 = vmatprep.subr.mxu0 0.0
    %678 = vmatpush2.msra.mxu0 0.0
    %679 = vmatprep.subr.mxu0 0.0
    %680 = vmatpush2.msra.mxu0 0.0
    %681 = vmatprep.subr.mxu0 0.0
    %682 = vmatpush2.msra.mxu0 0.0
    %683 = vmatprep.subr.mxu0 0.0
    %684 = vmatpush2.msra.mxu0 0.0
    %685 = vmatprep.subr.mxu0 0.0
    %686 = vmatpush2.msra.mxu0 0.0
    %687 = vmatprep.subr.mxu0 0.0
    %688 = vmatpush2.msra.mxu0 0.0
    %689 = vmatprep.subr.mxu0 0.0
    %690 = vmatpush2.msra.mxu0 0.0
    %691 = vmatprep.subr.mxu0 0.0
    %692 = vmatpush2.msra.mxu0 0.0
    %693 = vmatprep.subr.mxu0 0.0
    %694 = vmatpush2.msra.mxu0 0.0
    %695 = vmatprep.subr.mxu0 0.0
    %696 = vmatpush2.msra.mxu0 0.0
    %697 = vmatprep.subr.mxu0 0.0
    %698 = vmatpush2.msra.mxu0 0.0
    %699 = vmatprep.subr.mxu0 0.0
    %700 = vmatpush2.msra.mxu0 0.0
    %701 = vmatprep.subr.mxu0 0.0
    %702 = vmatpush2.msra.mxu0 0.0
    %703 = vmatprep.subr.mxu0 0.0
    %704 = vmatpush2.msra.mxu0 0.0
    %705 = vmatprep.subr.mxu0 0.0
    %706 = vmatpush2.msra.mxu0 0.0
    %707 = vmatprep.mubr.f32.mxu0 0.0
    %708 = vmatmul.mubr.f32.gmra.mxu0 %v623
    %v709 = vpop.f32.mrf.mxu0
    %v710 = vadd.f32 %v187, %v709
    %v711 = vpop.f32.mrf.mxu0
    %712 = vmatprep.mubr.f32.mxu0 0.0
    %713 = vmatmul.mubr.f32.gmra.mxu0 %v626
    %v714 = vpop.f32.mrf.mxu0
    %v715 = vadd.f32 %v192, %v714
    %v716 = vpop.f32.mrf.mxu0
    %717 = vmatprep.mubr.f32.mxu0 0.0
    %718 = vmatmul.mubr.f32.gmra.mxu0 %v629
    %v719 = vpop.f32.mrf.mxu0
    %v720 = vadd.f32 %v197, %v719
    %v721 = vpop.f32.mrf.mxu0
    %722 = vmatprep.mubr.f32.mxu0 0.0
    %723 = vmatmul.mubr.f32.gmra.mxu0 %v632
    %v724 = vpop.f32.mrf.mxu0
    %v725 = vadd.f32 %v202, %v724
    %v726 = vpop.f32.mrf.mxu0
    %727 = vmatprep.mubr.f32.mxu0 0.0
    %728 = vmatmul.mubr.f32.gmra.mxu0 %v635
    %v729 = vpop.f32.mrf.mxu0
    %v730 = vadd.f32 %v207, %v729
    %v731 = vpop.f32.mrf.mxu0
    %732 = vmatprep.mubr.f32.mxu0 0.0
    %733 = vmatmul.mubr.f32.gmra.mxu0 %v638
    %v734 = vpop.f32.mrf.mxu0
    %v735 = vadd.f32 %v212, %v734
    %v736 = vpop.f32.mrf.mxu0
    %737 = vmatprep.mubr.f32.mxu0 0.0
    %738 = vmatmul.mubr.f32.gmra.mxu0 %v641
    %v739 = vpop.f32.mrf.mxu0
    %v740 = vadd.f32 %v217, %v739
    %v741 = vpop.f32.mrf.mxu0
    %742 = vdwg.mxu0
    %v743 = vmax.f32 %v710, 0.0
    %v744 = vmax.f32 %v715, 0.0
    %v745 = vmax.f32 %v720, 0.0
    %v746 = vmax.f32 %v725, 0.0
    %v747 = vmax.f32 %v730, 0.0
    %v748 = vmax.f32 %v735, 0.0
    %v749 = vmax.f32 %v740, 0.0
    %v751 = vlaneseq
    %v752 = vshrl.u32 %v751, 7
    %v753 = vsub.s32 0, %v752
    %v754 = vrot.slane %v70, %v753
    %vm756 = vcmask 130048
    %v758 = vsel %vm756, %v743, 0
    %v761 = vsel %vm756, %v744, 0
    %v764 = vsel %vm756, %v745, 0
    %v767 = vsel %vm756, %v746, 0
    %v770 = vsel %vm756, %v747, 0
    %v773 = vsel %vm756, %v748, 0
    %v776 = vsel %vm756, %v749, 0
    %778 = vmatprep.subr.mxu0 0.0
    %779 = vmatpush1.msra.mxu0 0.0
    %780 = vmatprep.subr.mxu0 0.0
    %781 = vmatpush1.msra.mxu0 0.0
    %782 = vmatprep.subr.mxu0 0.0
    %783 = vmatpush1.msra.mxu0 0.0
    %784 = vmatprep.subr.mxu0 0.0
    %785 = vmatpush1.msra.mxu0 0.0
    %786 = vmatprep.subr.mxu0 0.0
    %787 = vmatpush1.msra.mxu0 0.0
    %788 = vmatprep.subr.mxu0 0.0
    %789 = vmatpush1.msra.mxu0 0.0
    %790 = vmatprep.subr.mxu0 0.0
    %791 = vmatpush1.msra.mxu0 0.0
    %792 = vmatprep.subr.mxu0 0.0
    %793 = vmatpush1.msra.mxu0 0.0
    %794 = vmatprep.subr.mxu0 0.0
    %795 = vmatpush1.msra.mxu0 0.0
    %796 = vmatprep.subr.mxu0 0.0
    %797 = vmatpush1.msra.mxu0 0.0
    %798 = vmatprep.subr.mxu0 0.0
    %799 = vmatpush1.msra.mxu0 0.0
    %800 = vmatprep.subr.mxu0 0.0
    %801 = vmatpush1.msra.mxu0 0.0
    %802 = vmatprep.subr.mxu0 0.0
    %803 = vmatpush1.msra.mxu0 0.0
    %804 = vmatprep.subr.mxu0 0.0
    %805 = vmatpush1.msra.mxu0 0.0
    %806 = vmatprep.subr.mxu0 0.0
    %807 = vmatpush1.msra.mxu0 %v69
    %808 = vmatprep.subr.mxu0 0.0
    %809 = vmatpush1.msra.mxu0 %v68
    %810 = vmatprep.subr.mxu0 0.0
    %811 = vmatpush2.msra.mxu0 0.0
    %812 = vmatprep.subr.mxu0 0.0
    %813 = vmatpush2.msra.mxu0 0.0
    %814 = vmatprep.subr.mxu0 0.0
    %815 = vmatpush2.msra.mxu0 0.0
    %816 = vmatprep.subr.mxu0 0.0
    %817 = vmatpush2.msra.mxu0 0.0
    %818 = vmatprep.subr.mxu0 0.0
    %819 = vmatpush2.msra.mxu0 0.0
    %820 = vmatprep.subr.mxu0 0.0
    %821 = vmatpush2.msra.mxu0 0.0
    %822 = vmatprep.subr.mxu0 0.0
    %823 = vmatpush2.msra.mxu0 0.0
    %824 = vmatprep.subr.mxu0 0.0
    %825 = vmatpush2.msra.mxu0 0.0
    %826 = vmatprep.subr.mxu0 0.0
    %827 = vmatpush2.msra.mxu0 0.0
    %828 = vmatprep.subr.mxu0 0.0
    %829 = vmatpush2.msra.mxu0 0.0
    %830 = vmatprep.subr.mxu0 0.0
    %831 = vmatpush2.msra.mxu0 0.0
    %832 = vmatprep.subr.mxu0 0.0
    %833 = vmatpush2.msra.mxu0 0.0
    %834 = vmatprep.subr.mxu0 0.0
    %835 = vmatpush2.msra.mxu0 0.0
    %836 = vmatprep.subr.mxu0 0.0
    %837 = vmatpush2.msra.mxu0 0.0
    %838 = vmatprep.subr.mxu0 0.0
    %839 = vmatpush2.msra.mxu0 0.0
    %840 = vmatprep.subr.mxu0 0.0
    %841 = vmatpush2.msra.mxu0 0.0
    %842 = vmatprep.mubr.f32.mxu0 0.0
    %843 = vmatmul.mubr.f32.gmra.mxu0 %v758
    %v844 = vpop.f32.mrf.mxu0
    %v845 = vadd.f32 %v754, %v844
    %v846 = vpop.f32.mrf.mxu0
    %847 = vmatprep.mubr.f32.mxu0 0.0
    %848 = vmatmul.mubr.f32.gmra.mxu0 %v761
    %v849 = vpop.f32.mrf.mxu0
    %v850 = vadd.f32 %v754, %v849
    %v851 = vpop.f32.mrf.mxu0
    %852 = vmatprep.mubr.f32.mxu0 0.0
    %853 = vmatmul.mubr.f32.gmra.mxu0 %v764
    %v854 = vpop.f32.mrf.mxu0
    %v855 = vadd.f32 %v754, %v854
    %v856 = vpop.f32.mrf.mxu0
    %857 = vmatprep.mubr.f32.mxu0 0.0
    %858 = vmatmul.mubr.f32.gmra.mxu0 %v767
    %v859 = vpop.f32.mrf.mxu0
    %v860 = vadd.f32 %v754, %v859
    %v861 = vpop.f32.mrf.mxu0
    %862 = vmatprep.mubr.f32.mxu0 0.0
    %863 = vmatmul.mubr.f32.gmra.mxu0 %v770
    %v864 = vpop.f32.mrf.mxu0
    %v865 = vadd.f32 %v754, %v864
    %v866 = vpop.f32.mrf.mxu0
    %867 = vmatprep.mubr.f32.mxu0 0.0
    %868 = vmatmul.mubr.f32.gmra.mxu0 %v773
    %v869 = vpop.f32.mrf.mxu0
    %v870 = vadd.f32 %v754, %v869
    %v871 = vpop.f32.mrf.mxu0
    %872 = vmatprep.mubr.f32.mxu0 0.0
    %873 = vmatmul.mubr.f32.gmra.mxu0 %v776
    %v874 = vpop.f32.mrf.mxu0
    %v875 = vadd.f32 %v754, %v874
    %v876 = vpop.f32.mrf.mxu0
    %877 = vdwg.mxu0
    %v878 = vmax.f32 %v845, 0.0
    %v879 = vmax.f32 %v850, 0.0
    %v880 = vmax.f32 %v855, 0.0
    %v881 = vmax.f32 %v860, 0.0
    %v882 = vmax.f32 %v865, 0.0
    %v883 = vmax.f32 %v870, 0.0
    %v884 = vmax.f32 %v875, 0.0
    %v885 = vmul.f32 %v227, %v878
    %v886 = vmul.f32 %v231, %v879
    %v887 = vmul.f32 %v235, %v880
    %v888 = vmul.f32 %v239, %v881
    %v889 = vmul.f32 %v243, %v882
    %v890 = vmul.f32 %v247, %v883
    %v891 = vmul.f32 %v251, %v884
    %v892 = vmul.f32 %v258, %v878
    %v893 = vmul.f32 %v262, %v879
    %v894 = vmul.f32 %v266, %v880
    %v895 = vmul.f32 %v270, %v881
    %v896 = vmul.f32 %v274, %v882
    %v897 = vmul.f32 %v278, %v883
    %v898 = vmul.f32 %v282, %v884
    %v899 = vmul.f32 %v289, %v878
    %v900 = vmul.f32 %v293, %v879
    %v901 = vmul.f32 %v297, %v880
    %v902 = vmul.f32 %v301, %v881
    %v903 = vmul.f32 %v305, %v882
    %v904 = vmul.f32 %v309, %v883
    %v905 = vmul.f32 %v313, %v884
    %v906 = vmul.f32 %v320, %v878
    %v907 = vmul.f32 %v324, %v879
    %v908 = vmul.f32 %v328, %v880
    %v909 = vmul.f32 %v332, %v881
    %v910 = vmul.f32 %v336, %v882
    %v911 = vmul.f32 %v340, %v883
    %v912 = vmul.f32 %v344, %v884
    %v913 = vmul.f32 %v351, %v878
    %v914 = vmul.f32 %v355, %v879
    %v915 = vmul.f32 %v359, %v880
    %v916 = vmul.f32 %v363, %v881
    %v917 = vmul.f32 %v367, %v882
    %v918 = vmul.f32 %v371, %v883
    %v919 = vmul.f32 %v375, %v884
    %v920 = vmul.f32 %v382, %v878
    %v921 = vmul.f32 %v386, %v879
    %v922 = vmul.f32 %v390, %v880
    %v923 = vmul.f32 %v394, %v881
    %v924 = vmul.f32 %v398, %v882
    %v925 = vmul.f32 %v402, %v883
    %v926 = vmul.f32 %v406, %v884
    %v927 = vmul.f32 %v413, %v878
    %v928 = vmul.f32 %v417, %v879
    %v929 = vmul.f32 %v421, %v880
    %v930 = vmul.f32 %v425, %v881
    %v931 = vmul.f32 %v429, %v882
    %v932 = vmul.f32 %v433, %v883
    %v933 = vmul.f32 %v437, %v884
    %v934 = vmul.f32 %v444, %v878
    %v935 = vmul.f32 %v448, %v879
    %v936 = vmul.f32 %v452, %v880
    %v937 = vmul.f32 %v456, %v881
    %v938 = vmul.f32 %v460, %v882
    %v939 = vmul.f32 %v464, %v883
    %v940 = vmul.f32 %v468, %v884
    %v941 = vsel %vm756, %v885, -inf
    %v942 = vsel %vm756, %v886, -inf
    %v943 = vmax.f32 %v941, %v942
    %v944 = vsel %vm756, %v887, -inf
    %v945 = vmax.f32 %v943, %v944
    %v946 = vsel %vm756, %v888, -inf
    %v947 = vmax.f32 %v945, %v946
    %v948 = vsel %vm756, %v889, -inf
    %v949 = vmax.f32 %v947, %v948
    %v950 = vsel %vm756, %v890, -inf
    %v951 = vmax.f32 %v949, %v950
    %v952 = vsel %vm756, %v891, -inf
    %v953 = vmax.f32 %v951, %v952
    %v954 = vrot.slane %v953, 4
    %v955 = vmax.f32 %v953, %v954
    %v956 = vrot.slane %v955, 2
    %v957 = vmax.f32 %v955, %v956
    %v958 = vrot.slane %v957, 1
    %v959 = vmax.f32 %v957, %v958
    %v960 = vsel %vm756, %v892, -inf
    %v961 = vsel %vm756, %v893, -inf
    %v962 = vmax.f32 %v960, %v961
    %v963 = vsel %vm756, %v894, -inf
    %v964 = vmax.f32 %v962, %v963
    %v965 = vsel %vm756, %v895, -inf
    %v966 = vmax.f32 %v964, %v965
    %v967 = vsel %vm756, %v896, -inf
    %v968 = vmax.f32 %v966, %v967
    %v969 = vsel %vm756, %v897, -inf
    %v970 = vmax.f32 %v968, %v969
    %v971 = vsel %vm756, %v898, -inf
    %v972 = vmax.f32 %v970, %v971
    %v973 = vrot.slane %v972, 4
    %v974 = vmax.f32 %v972, %v973
    %v975 = vrot.slane %v974, 2
    %v976 = vmax.f32 %v974, %v975
    %v977 = vrot.slane %v976, 1
    %v978 = vmax.f32 %v976, %v977
    %v979 = vsel %vm756, %v899, -inf
    %v980 = vsel %vm756, %v900, -inf
    %v981 = vmax.f32 %v979, %v980
    %v982 = vsel %vm756, %v901, -inf
    %v983 = vmax.f32 %v981, %v982
    %v984 = vsel %vm756, %v902, -inf
    %v985 = vmax.f32 %v983, %v984
    %v986 = vsel %vm756, %v903, -inf
    %v987 = vmax.f32 %v985, %v986
    %v988 = vsel %vm756, %v904, -inf
    %v989 = vmax.f32 %v987, %v988
    %v990 = vsel %vm756, %v905, -inf
    %v991 = vmax.f32 %v989, %v990
    %v992 = vrot.slane %v991, 4
    %v993 = vmax.f32 %v991, %v992
    %v994 = vrot.slane %v993, 2
    %v995 = vmax.f32 %v993, %v994
    %v996 = vrot.slane %v995, 1
    %v997 = vmax.f32 %v995, %v996
    %v998 = vsel %vm756, %v906, -inf
    %v999 = vsel %vm756, %v907, -inf
    %v1000 = vmax.f32 %v998, %v999
    %v1001 = vsel %vm756, %v908, -inf
    %v1002 = vmax.f32 %v1000, %v1001
    %v1003 = vsel %vm756, %v909, -inf
    %v1004 = vmax.f32 %v1002, %v1003
    %v1005 = vsel %vm756, %v910, -inf
    %v1006 = vmax.f32 %v1004, %v1005
    %v1007 = vsel %vm756, %v911, -inf
    %v1008 = vmax.f32 %v1006, %v1007
    %v1009 = vsel %vm756, %v912, -inf
    %v1010 = vmax.f32 %v1008, %v1009
    %v1011 = vrot.slane %v1010, 4
    %v1012 = vmax.f32 %v1010, %v1011
    %v1013 = vrot.slane %v1012, 2
    %v1014 = vmax.f32 %v1012, %v1013
    %v1015 = vrot.slane %v1014, 1
    %v1016 = vmax.f32 %v1014, %v1015
    %v1017 = vsel %vm756, %v913, -inf
    %v1018 = vsel %vm756, %v914, -inf
    %v1019 = vmax.f32 %v1017, %v1018
    %v1020 = vsel %vm756, %v915, -inf
    %v1021 = vmax.f32 %v1019, %v1020
    %v1022 = vsel %vm756, %v916, -inf
    %v1023 = vmax.f32 %v1021, %v1022
    %v1024 = vsel %vm756, %v917, -inf
    %v1025 = vmax.f32 %v1023, %v1024
    %v1026 = vsel %vm756, %v918, -inf
    %v1027 = vmax.f32 %v1025, %v1026
    %v1028 = vsel %vm756, %v919, -inf
    %v1029 = vmax.f32 %v1027, %v1028
    %v1030 = vrot.slane %v1029, 4
    %v1031 = vmax.f32 %v1029, %v1030
    %v1032 = vrot.slane %v1031, 2
    %v1033 = vmax.f32 %v1031, %v1032
    %v1034 = vrot.slane %v1033, 1
    %v1035 = vmax.f32 %v1033, %v1034
    %v1036 = vsel %vm756, %v920, -inf
    %v1037 = vsel %vm756, %v921, -inf
    %v1038 = vmax.f32 %v1036, %v1037
    %v1039 = vsel %vm756, %v922, -inf
    %v1040 = vmax.f32 %v1038, %v1039
    %v1041 = vsel %vm756, %v923, -inf
    %v1042 = vmax.f32 %v1040, %v1041
    %v1043 = vsel %vm756, %v924, -inf
    %v1044 = vmax.f32 %v1042, %v1043
    %v1045 = vsel %vm756, %v925, -inf
    %v1046 = vmax.f32 %v1044, %v1045
    %v1047 = vsel %vm756, %v926, -inf
    %v1048 = vmax.f32 %v1046, %v1047
    %v1049 = vrot.slane %v1048, 4
    %v1050 = vmax.f32 %v1048, %v1049
    %v1051 = vrot.slane %v1050, 2
    %v1052 = vmax.f32 %v1050, %v1051
    %v1053 = vrot.slane %v1052, 1
    %v1054 = vmax.f32 %v1052, %v1053
    %v1055 = vsel %vm756, %v927, -inf
    %v1056 = vsel %vm756, %v928, -inf
    %v1057 = vmax.f32 %v1055, %v1056
    %v1058 = vsel %vm756, %v929, -inf
    %v1059 = vmax.f32 %v1057, %v1058
    %v1060 = vsel %vm756, %v930, -inf
    %v1061 = vmax.f32 %v1059, %v1060
    %v1062 = vsel %vm756, %v931, -inf
    %v1063 = vmax.f32 %v1061, %v1062
    %v1064 = vsel %vm756, %v932, -inf
    %v1065 = vmax.f32 %v1063, %v1064
    %v1066 = vsel %vm756, %v933, -inf
    %v1067 = vmax.f32 %v1065, %v1066
    %v1068 = vrot.slane %v1067, 4
    %v1069 = vmax.f32 %v1067, %v1068
    %v1070 = vrot.slane %v1069, 2
    %v1071 = vmax.f32 %v1069, %v1070
    %v1072 = vrot.slane %v1071, 1
    %v1073 = vmax.f32 %v1071, %v1072
    %v1074 = vsel %vm756, %v934, -inf
    %v1075 = vsel %vm756, %v935, -inf
    %v1076 = vmax.f32 %v1074, %v1075
    %v1077 = vsel %vm756, %v936, -inf
    %v1078 = vmax.f32 %v1076, %v1077
    %v1079 = vsel %vm756, %v937, -inf
    %v1080 = vmax.f32 %v1078, %v1079
    %v1081 = vsel %vm756, %v938, -inf
    %v1082 = vmax.f32 %v1080, %v1081
    %v1083 = vsel %vm756, %v939, -inf
    %v1084 = vmax.f32 %v1082, %v1083
    %v1085 = vsel %vm756, %v940, -inf
    %v1086 = vmax.f32 %v1084, %v1085
    %v1087 = vrot.slane %v1086, 4
    %v1088 = vmax.f32 %v1086, %v1087
    %v1089 = vrot.slane %v1088, 2
    %v1090 = vmax.f32 %v1088, %v1089
    %v1091 = vrot.slane %v1090, 1
    %v1092 = vmax.f32 %v1090, %v1091
    %v1094 = vsel %vm116, %v72, 0
    %1096 = vmatprep.subr.mxu0 0.0
    %1097 = vmatpush1.msra.mxu0 0.0
    %1098 = vmatprep.subr.mxu0 0.0
    %1099 = vmatpush1.msra.mxu0 0.0
    %1100 = vmatprep.subr.mxu0 0.0
    %1101 = vmatpush1.msra.mxu0 0.0
    %1102 = vmatprep.subr.mxu0 0.0
    %1103 = vmatpush1.msra.mxu0 0.0
    %1104 = vmatprep.subr.mxu0 0.0
    %1105 = vmatpush1.msra.mxu0 0.0
    %1106 = vmatprep.subr.mxu0 0.0
    %1107 = vmatpush1.msra.mxu0 0.0
    %1108 = vmatprep.subr.mxu0 0.0
    %1109 = vmatpush1.msra.mxu0 0.0
    %1110 = vmatprep.subr.mxu0 0.0
    %1111 = vmatpush1.msra.mxu0 0.0
    %1112 = vmatprep.subr.mxu0 0.0
    %1113 = vmatpush1.msra.mxu0 0.0
    %1114 = vmatprep.subr.mxu0 0.0
    %1115 = vmatpush1.msra.mxu0 0.0
    %1116 = vmatprep.subr.mxu0 0.0
    %1117 = vmatpush1.msra.mxu0 0.0
    %1118 = vmatprep.subr.mxu0 0.0
    %1119 = vmatpush1.msra.mxu0 0.0
    %1120 = vmatprep.subr.mxu0 0.0
    %1121 = vmatpush1.msra.mxu0 0.0
    %1122 = vmatprep.subr.mxu0 0.0
    %1123 = vmatpush1.msra.mxu0 0.0
    %1124 = vmatprep.subr.mxu0 0.0
    %1125 = vmatpush1.msra.mxu0 0.0
    %1126 = vmatprep.subr.mxu0 0.0
    %1127 = vmatpush1.msra.mxu0 %v1094
    %1128 = vmatprep.subr.mxu0 0.0
    %1129 = vmatpush2.msra.mxu0 0.0
    %1130 = vmatprep.subr.mxu0 0.0
    %1131 = vmatpush2.msra.mxu0 0.0
    %1132 = vmatprep.subr.mxu0 0.0
    %1133 = vmatpush2.msra.mxu0 0.0
    %1134 = vmatprep.subr.mxu0 0.0
    %1135 = vmatpush2.msra.mxu0 0.0
    %1136 = vmatprep.subr.mxu0 0.0
    %1137 = vmatpush2.msra.mxu0 0.0
    %1138 = vmatprep.subr.mxu0 0.0
    %1139 = vmatpush2.msra.mxu0 0.0
    %1140 = vmatprep.subr.mxu0 0.0
    %1141 = vmatpush2.msra.mxu0 0.0
    %1142 = vmatprep.subr.mxu0 0.0
    %1143 = vmatpush2.msra.mxu0 0.0
    %1144 = vmatprep.subr.mxu0 0.0
    %1145 = vmatpush2.msra.mxu0 0.0
    %1146 = vmatprep.subr.mxu0 0.0
    %1147 = vmatpush2.msra.mxu0 0.0
    %1148 = vmatprep.subr.mxu0 0.0
    %1149 = vmatpush2.msra.mxu0 0.0
    %1150 = vmatprep.subr.mxu0 0.0
    %1151 = vmatpush2.msra.mxu0 0.0
    %1152 = vmatprep.subr.mxu0 0.0
    %1153 = vmatpush2.msra.mxu0 0.0
    %1154 = vmatprep.subr.mxu0 0.0
    %1155 = vmatpush2.msra.mxu0 0.0
    %1156 = vmatprep.subr.mxu0 0.0
    %1157 = vmatpush2.msra.mxu0 0.0
    %1158 = vmatprep.subr.mxu0 0.0
    %1159 = vmatpush2.msra.mxu0 0.0
    %1160 = vmatprep.mubr.f32.mxu0 0.0
    %1161 = vmatmul.mubr.f32.gmra.mxu0 %v470
    %v1162 = vpop.f32.mrf.mxu0
    %v1163 = vadd.f32 0.0, %v1162
    %v1164 = vpop.f32.mrf.mxu0
    %1165 = vdwg.mxu0
    %v1167 = vsel %vm116, %v71, 0
    %1169 = vmatprep.subr.mxu0 0.0
    %1170 = vmatpush1.msra.mxu0 0.0
    %1171 = vmatprep.subr.mxu0 0.0
    %1172 = vmatpush1.msra.mxu0 0.0
    %1173 = vmatprep.subr.mxu0 0.0
    %1174 = vmatpush1.msra.mxu0 0.0
    %1175 = vmatprep.subr.mxu0 0.0
    %1176 = vmatpush1.msra.mxu0 0.0
    %1177 = vmatprep.subr.mxu0 0.0
    %1178 = vmatpush1.msra.mxu0 0.0
    %1179 = vmatprep.subr.mxu0 0.0
    %1180 = vmatpush1.msra.mxu0 0.0
    %1181 = vmatprep.subr.mxu0 0.0
    %1182 = vmatpush1.msra.mxu0 0.0
    %1183 = vmatprep.subr.mxu0 0.0
    %1184 = vmatpush1.msra.mxu0 0.0
    %1185 = vmatprep.subr.mxu0 0.0
    %1186 = vmatpush1.msra.mxu0 0.0
    %1187 = vmatprep.subr.mxu0 0.0
    %1188 = vmatpush1.msra.mxu0 0.0
    %1189 = vmatprep.subr.mxu0 0.0
    %1190 = vmatpush1.msra.mxu0 0.0
    %1191 = vmatprep.subr.mxu0 0.0
    %1192 = vmatpush1.msra.mxu0 0.0
    %1193 = vmatprep.subr.mxu0 0.0
    %1194 = vmatpush1.msra.mxu0 0.0
    %1195 = vmatprep.subr.mxu0 0.0
    %1196 = vmatpush1.msra.mxu0 0.0
    %1197 = vmatprep.subr.mxu0 0.0
    %1198 = vmatpush1.msra.mxu0 0.0
    %1199 = vmatprep.subr.mxu0 0.0
    %1200 = vmatpush1.msra.mxu0 %v1167
    %1201 = vmatprep.subr.mxu0 0.0
    %1202 = vmatpush2.msra.mxu0 0.0
    %1203 = vmatprep.subr.mxu0 0.0
    %1204 = vmatpush2.msra.mxu0 0.0
    %1205 = vmatprep.subr.mxu0 0.0
    %1206 = vmatpush2.msra.mxu0 0.0
    %1207 = vmatprep.subr.mxu0 0.0
    %1208 = vmatpush2.msra.mxu0 0.0
    %1209 = vmatprep.subr.mxu0 0.0
    %1210 = vmatpush2.msra.mxu0 0.0
    %1211 = vmatprep.subr.mxu0 0.0
    %1212 = vmatpush2.msra.mxu0 0.0
    %1213 = vmatprep.subr.mxu0 0.0
    %1214 = vmatpush2.msra.mxu0 0.0
    %1215 = vmatprep.subr.mxu0 0.0
    %1216 = vmatpush2.msra.mxu0 0.0
    %1217 = vmatprep.subr.mxu0 0.0
    %1218 = vmatpush2.msra.mxu0 0.0
    %1219 = vmatprep.subr.mxu0 0.0
    %1220 = vmatpush2.msra.mxu0 0.0
    %1221 = vmatprep.subr.mxu0 0.0
    %1222 = vmatpush2.msra.mxu0 0.0
    %1223 = vmatprep.subr.mxu0 0.0
    %1224 = vmatpush2.msra.mxu0 0.0
    %1225 = vmatprep.subr.mxu0 0.0
    %1226 = vmatpush2.msra.mxu0 0.0
    %1227 = vmatprep.subr.mxu0 0.0
    %1228 = vmatpush2.msra.mxu0 0.0
    %1229 = vmatprep.subr.mxu0 0.0
    %1230 = vmatpush2.msra.mxu0 0.0
    %1231 = vmatprep.subr.mxu0 0.0
    %1232 = vmatpush2.msra.mxu0 0.0
    %1233 = vmatprep.mubr.f32.mxu0 0.0
    %1234 = vmatmul.mubr.f32.gmra.mxu0 %v546
    %v1235 = vpop.f32.mrf.mxu0
    %v1236 = vadd.f32 %v1163, %v1235
    %v1237 = vpop.f32.mrf.mxu0
    %1238 = vdwg.mxu0
    %vm1247 = vcmask 1041409
    %v1248 = vsel %vm1247, %v978, %v959
    %vm1249 = vcmask 1042434
    %v1250 = vsel %vm1249, %v997, %v1248
    %vm1251 = vcmask 1043459
    %v1252 = vsel %vm1251, %v1016, %v1250
    %vm1253 = vcmask 1044484
    %v1254 = vsel %vm1253, %v1035, %v1252
    %vm1255 = vcmask 1045509
    %v1256 = vsel %vm1255, %v1054, %v1254
    %vm1257 = vcmask 1046534
    %v1258 = vsel %vm1257, %v1073, %v1256
    %vm1259 = vcmask 1047559
    %v1260 = vsel %vm1259, %v1092, %v1258
    %v1261 = vsel %vm756, %v1260, 0
    %1263 = vmatprep.subr.mxu0 0.0
    %1264 = vmatpush1.msra.mxu0 0.0
    %1265 = vmatprep.subr.mxu0 0.0
    %1266 = vmatpush1.msra.mxu0 0.0
    %1267 = vmatprep.subr.mxu0 0.0
    %1268 = vmatpush1.msra.mxu0 0.0
    %1269 = vmatprep.subr.mxu0 0.0
    %1270 = vmatpush1.msra.mxu0 0.0
    %1271 = vmatprep.subr.mxu0 0.0
    %1272 = vmatpush1.msra.mxu0 0.0
    %1273 = vmatprep.subr.mxu0 0.0
    %1274 = vmatpush1.msra.mxu0 0.0
    %1275 = vmatprep.subr.mxu0 0.0
    %1276 = vmatpush1.msra.mxu0 0.0
    %1277 = vmatprep.subr.mxu0 0.0
    %1278 = vmatpush1.msra.mxu0 0.0
    %1279 = vmatprep.subr.mxu0 0.0
    %1280 = vmatpush1.msra.mxu0 0.0
    %1281 = vmatprep.subr.mxu0 0.0
    %1282 = vmatpush1.msra.mxu0 0.0
    %1283 = vmatprep.subr.mxu0 0.0
    %1284 = vmatpush1.msra.mxu0 0.0
    %1285 = vmatprep.subr.mxu0 0.0
    %1286 = vmatpush1.msra.mxu0 0.0
    %1287 = vmatprep.subr.mxu0 0.0
    %1288 = vmatpush1.msra.mxu0 0.0
    %1289 = vmatprep.subr.mxu0 0.0
    %1290 = vmatpush1.msra.mxu0 0.0
    %1291 = vmatprep.subr.mxu0 0.0
    %1292 = vmatpush1.msra.mxu0 %v74
    %1293 = vmatprep.subr.mxu0 0.0
    %1294 = vmatpush1.msra.mxu0 %v73
    %1295 = vmatprep.subr.mxu0 0.0
    %1296 = vmatpush2.msra.mxu0 0.0
    %1297 = vmatprep.subr.mxu0 0.0
    %1298 = vmatpush2.msra.mxu0 0.0
    %1299 = vmatprep.subr.mxu0 0.0
    %1300 = vmatpush2.msra.mxu0 0.0
    %1301 = vmatprep.subr.mxu0 0.0
    %1302 = vmatpush2.msra.mxu0 0.0
    %1303 = vmatprep.subr.mxu0 0.0
    %1304 = vmatpush2.msra.mxu0 0.0
    %1305 = vmatprep.subr.mxu0 0.0
    %1306 = vmatpush2.msra.mxu0 0.0
    %1307 = vmatprep.subr.mxu0 0.0
    %1308 = vmatpush2.msra.mxu0 0.0
    %1309 = vmatprep.subr.mxu0 0.0
    %1310 = vmatpush2.msra.mxu0 0.0
    %1311 = vmatprep.subr.mxu0 0.0
    %1312 = vmatpush2.msra.mxu0 0.0
    %1313 = vmatprep.subr.mxu0 0.0
    %1314 = vmatpush2.msra.mxu0 0.0
    %1315 = vmatprep.subr.mxu0 0.0
    %1316 = vmatpush2.msra.mxu0 0.0
    %1317 = vmatprep.subr.mxu0 0.0
    %1318 = vmatpush2.msra.mxu0 0.0
    %1319 = vmatprep.subr.mxu0 0.0
    %1320 = vmatpush2.msra.mxu0 0.0
    %1321 = vmatprep.subr.mxu0 0.0
    %1322 = vmatpush2.msra.mxu0 0.0
    %1323 = vmatprep.subr.mxu0 0.0
    %1324 = vmatpush2.msra.mxu0 0.0
    %1325 = vmatprep.subr.mxu0 0.0
    %1326 = vmatpush2.msra.mxu0 0.0
    %1327 = vmatprep.mubr.f32.mxu0 0.0
    %1328 = vmatmul.mubr.f32.gmra.mxu0 %v1261
    %v1329 = vpop.f32.mrf.mxu0
    %v1330 = vadd.f32 0.0, %v1329
    %v1331 = vpop.f32.mrf.mxu0
    %1332 = vdwg.mxu0
    %v1333 = vadd.f32 %v1236, %v1330
    %v1335 = vlaneseq
    %v1336 = vshrl.u32 %v1335, 7
    %v1337 = vsub.s32 0, %v1336
    %v1338 = vrot.slane %v75, %v1337
    %v1340 = vadd.f32 %v1333, %v1338
    %v1341 = vmax.f32 %v1340, 0.0
    %v1343 = vlaneseq
    %v1344 = vshrl.u32 %v1343, 7
    %v1345 = vsub.s32 0, %v1344
    %v1346 = vrot.slane %v78, %v1345
    %v1349 = vsel %vm756, %v1341, 0
    %1351 = vmatprep.subr.mxu0 0.0
    %1352 = vmatpush1.msra.mxu0 0.0
    %1353 = vmatprep.subr.mxu0 0.0
    %1354 = vmatpush1.msra.mxu0 0.0
    %1355 = vmatprep.subr.mxu0 0.0
    %1356 = vmatpush1.msra.mxu0 0.0
    %1357 = vmatprep.subr.mxu0 0.0
    %1358 = vmatpush1.msra.mxu0 0.0
    %1359 = vmatprep.subr.mxu0 0.0
    %1360 = vmatpush1.msra.mxu0 0.0
    %1361 = vmatprep.subr.mxu0 0.0
    %1362 = vmatpush1.msra.mxu0 0.0
    %1363 = vmatprep.subr.mxu0 0.0
    %1364 = vmatpush1.msra.mxu0 0.0
    %1365 = vmatprep.subr.mxu0 0.0
    %1366 = vmatpush1.msra.mxu0 0.0
    %1367 = vmatprep.subr.mxu0 0.0
    %1368 = vmatpush1.msra.mxu0 0.0
    %1369 = vmatprep.subr.mxu0 0.0
    %1370 = vmatpush1.msra.mxu0 0.0
    %1371 = vmatprep.subr.mxu0 0.0
    %1372 = vmatpush1.msra.mxu0 0.0
    %1373 = vmatprep.subr.mxu0 0.0
    %1374 = vmatpush1.msra.mxu0 0.0
    %1375 = vmatprep.subr.mxu0 0.0
    %1376 = vmatpush1.msra.mxu0 0.0
    %1377 = vmatprep.subr.mxu0 0.0
    %1378 = vmatpush1.msra.mxu0 0.0
    %1379 = vmatprep.subr.mxu0 0.0
    %1380 = vmatpush1.msra.mxu0 %v77
    %1381 = vmatprep.subr.mxu0 0.0
    %1382 = vmatpush1.msra.mxu0 %v76
    %1383 = vmatprep.subr.mxu0 0.0
    %1384 = vmatpush2.msra.mxu0 0.0
    %1385 = vmatprep.subr.mxu0 0.0
    %1386 = vmatpush2.msra.mxu0 0.0
    %1387 = vmatprep.subr.mxu0 0.0
    %1388 = vmatpush2.msra.mxu0 0.0
    %1389 = vmatprep.subr.mxu0 0.0
    %1390 = vmatpush2.msra.mxu0 0.0
    %1391 = vmatprep.subr.mxu0 0.0
    %1392 = vmatpush2.msra.mxu0 0.0
    %1393 = vmatprep.subr.mxu0 0.0
    %1394 = vmatpush2.msra.mxu0 0.0
    %1395 = vmatprep.subr.mxu0 0.0
    %1396 = vmatpush2.msra.mxu0 0.0
    %1397 = vmatprep.subr.mxu0 0.0
    %1398 = vmatpush2.msra.mxu0 0.0
    %1399 = vmatprep.subr.mxu0 0.0
    %1400 = vmatpush2.msra.mxu0 0.0
    %1401 = vmatprep.subr.mxu0 0.0
    %1402 = vmatpush2.msra.mxu0 0.0
    %1403 = vmatprep.subr.mxu0 0.0
    %1404 = vmatpush2.msra.mxu0 0.0
    %1405 = vmatprep.subr.mxu0 0.0
    %1406 = vmatpush2.msra.mxu0 0.0
    %1407 = vmatprep.subr.mxu0 0.0
    %1408 = vmatpush2.msra.mxu0 0.0
    %1409 = vmatprep.subr.mxu0 0.0
    %1410 = vmatpush2.msra.mxu0 0.0
    %1411 = vmatprep.subr.mxu0 0.0
    %1412 = vmatpush2.msra.mxu0 0.0
    %1413 = vmatprep.subr.mxu0 0.0
    %1414 = vmatpush2.msra.mxu0 0.0
    %1415 = vmatprep.mubr.f32.mxu0 0.0
    %1416 = vmatmul.mubr.f32.gmra.mxu0 %v1349
    %v1417 = vpop.f32.mrf.mxu0
    %v1418 = vadd.f32 %v1346, %v1417
    %v1419 = vpop.f32.mrf.mxu0
    %1420 = vdwg.mxu0
    %v1421 = vmax.f32 %v1418, 0.0
    %v1422 = vmul.f32 %v1421, %v1421
    %v1423 = vsel %vm94, %v1422, 0.0
    %1424 = vadd.xlane.f32.xlu0 %v1423
    %v1425 = vpop.xlane.xlu0 %1424
    %v1426 = vrsqrt.pop %v1425
    %v1427 = vmin.f32 %v1426, 1.0
    %v1428 = vmul.f32 %v1421, %v1427
    %1429 = vmatprep.subr.mxu0 0.0
    %1430 = vmatpush1.msra.mxu0 0.0
    %1431 = vmatprep.subr.mxu0 0.0
    %1432 = vmatpush1.msra.mxu0 0.0
    %1433 = vmatprep.subr.mxu0 0.0
    %1434 = vmatpush1.msra.mxu0 0.0
    %1435 = vmatprep.subr.mxu0 0.0
    %1436 = vmatpush1.msra.mxu0 0.0
    %1437 = vmatprep.subr.mxu0 0.0
    %1438 = vmatpush1.msra.mxu0 0.0
    %1439 = vmatprep.subr.mxu0 0.0
    %1440 = vmatpush1.msra.mxu0 0.0
    %1441 = vmatprep.subr.mxu0 0.0
    %1442 = vmatpush1.msra.mxu0 0.0
    %1443 = vmatprep.subr.mxu0 0.0
    %1444 = vmatpush1.msra.mxu0 0.0
    %1445 = vmatprep.subr.mxu0 0.0
    %1446 = vmatpush1.msra.mxu0 0.0
    %1447 = vmatprep.subr.mxu0 0.0
    %1448 = vmatpush1.msra.mxu0 0.0
    %1449 = vmatprep.subr.mxu0 0.0
    %1450 = vmatpush1.msra.mxu0 0.0
    %1451 = vmatprep.subr.mxu0 0.0
    %1452 = vmatpush1.msra.mxu0 0.0
    %1453 = vmatprep.subr.mxu0 0.0
    %1454 = vmatpush1.msra.mxu0 0.0
    %1455 = vmatprep.subr.mxu0 0.0
    %1456 = vmatpush1.msra.mxu0 0.0
    %1457 = vmatprep.subr.mxu0 0.0
    %1458 = vmatpush1.msra.mxu0 0.0
    %1459 = vmatprep.subr.mxu0 0.0
    %1460 = vmatpush1.msra.mxu0 %v473
    %1461 = vmatprep.subr.mxu0 0.0
    %1462 = vmatpush2.msra.mxu0 0.0
    %1463 = vmatprep.subr.mxu0 0.0
    %1464 = vmatpush2.msra.mxu0 0.0
    %1465 = vmatprep.subr.mxu0 0.0
    %1466 = vmatpush2.msra.mxu0 0.0
    %1467 = vmatprep.subr.mxu0 0.0
    %1468 = vmatpush2.msra.mxu0 0.0
    %1469 = vmatprep.subr.mxu0 0.0
    %1470 = vmatpush2.msra.mxu0 0.0
    %1471 = vmatprep.subr.mxu0 0.0
    %1472 = vmatpush2.msra.mxu0 0.0
    %1473 = vmatprep.subr.mxu0 0.0
    %1474 = vmatpush2.msra.mxu0 0.0
    %1475 = vmatprep.subr.mxu0 0.0
    %1476 = vmatpush2.msra.mxu0 0.0
    %1477 = vmatprep.subr.mxu0 0.0
    %1478 = vmatpush2.msra.mxu0 0.0
    %1479 = vmatprep.subr.mxu0 0.0
    %1480 = vmatpush2.msra.mxu0 0.0
    %1481 = vmatprep.subr.mxu0 0.0
    %1482 = vmatpush2.msra.mxu0 0.0
    %1483 = vmatprep.subr.mxu0 0.0
    %1484 = vmatpush2.msra.mxu0 0.0
    %1485 = vmatprep.subr.mxu0 0.0
    %1486 = vmatpush2.msra.mxu0 0.0
    %1487 = vmatprep.subr.mxu0 0.0
    %1488 = vmatpush2.msra.mxu0 0.0
    %1489 = vmatprep.subr.mxu0 0.0
    %1490 = vmatpush2.msra.mxu0 0.0
    %1491 = vmatprep.subr.mxu0 0.0
    %1492 = vmatpush2.msra.mxu0 0.0
    %1493 = vmatprep.mubr.f32.mxu0 0.0
    %1494 = vmatmul.mubr.f32.gmra.mxu0 %v546
    %v1495 = vpop.f32.mrf.mxu0
    %v1496 = vadd.f32 0.0, %v1495
    %v1497 = vpop.f32.mrf.mxu0
    %1498 = vdwg.mxu0
    %v1500 = vsel %vm94, %v1428, 0
    %1502 = vmatprep.subr.mxu0 0.0
    %1503 = vmatpush1.msra.mxu0 0.0
    %1504 = vmatprep.subr.mxu0 0.0
    %1505 = vmatpush1.msra.mxu0 0.0
    %1506 = vmatprep.subr.mxu0 0.0
    %1507 = vmatpush1.msra.mxu0 0.0
    %1508 = vmatprep.subr.mxu0 0.0
    %1509 = vmatpush1.msra.mxu0 0.0
    %1510 = vmatprep.subr.mxu0 0.0
    %1511 = vmatpush1.msra.mxu0 0.0
    %1512 = vmatprep.subr.mxu0 0.0
    %1513 = vmatpush1.msra.mxu0 0.0
    %1514 = vmatprep.subr.mxu0 0.0
    %1515 = vmatpush1.msra.mxu0 0.0
    %1516 = vmatprep.subr.mxu0 0.0
    %1517 = vmatpush1.msra.mxu0 0.0
    %1518 = vmatprep.subr.mxu0 0.0
    %1519 = vmatpush1.msra.mxu0 0.0
    %1520 = vmatprep.subr.mxu0 0.0
    %1521 = vmatpush1.msra.mxu0 0.0
    %1522 = vmatprep.subr.mxu0 0.0
    %1523 = vmatpush1.msra.mxu0 0.0
    %1524 = vmatprep.subr.mxu0 0.0
    %1525 = vmatpush1.msra.mxu0 0.0
    %1526 = vmatprep.subr.mxu0 0.0
    %1527 = vmatpush1.msra.mxu0 0.0
    %1528 = vmatprep.subr.mxu0 0.0
    %1529 = vmatpush1.msra.mxu0 0.0
    %1530 = vmatprep.subr.mxu0 0.0
    %1531 = vmatpush1.msra.mxu0 0.0
    %1532 = vmatprep.subr.mxu0 0.0
    %1533 = vmatpush1.msra.mxu0 %v549
    %1534 = vmatprep.subr.mxu0 0.0
    %1535 = vmatpush2.msra.mxu0 0.0
    %1536 = vmatprep.subr.mxu0 0.0
    %1537 = vmatpush2.msra.mxu0 0.0
    %1538 = vmatprep.subr.mxu0 0.0
    %1539 = vmatpush2.msra.mxu0 0.0
    %1540 = vmatprep.subr.mxu0 0.0
    %1541 = vmatpush2.msra.mxu0 0.0
    %1542 = vmatprep.subr.mxu0 0.0
    %1543 = vmatpush2.msra.mxu0 0.0
    %1544 = vmatprep.subr.mxu0 0.0
    %1545 = vmatpush2.msra.mxu0 0.0
    %1546 = vmatprep.subr.mxu0 0.0
    %1547 = vmatpush2.msra.mxu0 0.0
    %1548 = vmatprep.subr.mxu0 0.0
    %1549 = vmatpush2.msra.mxu0 0.0
    %1550 = vmatprep.subr.mxu0 0.0
    %1551 = vmatpush2.msra.mxu0 0.0
    %1552 = vmatprep.subr.mxu0 0.0
    %1553 = vmatpush2.msra.mxu0 0.0
    %1554 = vmatprep.subr.mxu0 0.0
    %1555 = vmatpush2.msra.mxu0 0.0
    %1556 = vmatprep.subr.mxu0 0.0
    %1557 = vmatpush2.msra.mxu0 0.0
    %1558 = vmatprep.subr.mxu0 0.0
    %1559 = vmatpush2.msra.mxu0 0.0
    %1560 = vmatprep.subr.mxu0 0.0
    %1561 = vmatpush2.msra.mxu0 0.0
    %1562 = vmatprep.subr.mxu0 0.0
    %1563 = vmatpush2.msra.mxu0 0.0
    %1564 = vmatprep.subr.mxu0 0.0
    %1565 = vmatpush2.msra.mxu0 0.0
    %1566 = vmatprep.mubr.f32.mxu0 0.0
    %1567 = vmatmul.mubr.f32.gmra.mxu0 %v1500
    %v1568 = vpop.f32.mrf.mxu0
    %v1569 = vadd.f32 %v1496, %v1568
    %v1570 = vpop.f32.mrf.mxu0
    %1571 = vdwg.mxu0
    %1572 = vmatprep.subr.mxu0 0.0
    %1573 = vmatpush1.msra.mxu0 0.0
    %1574 = vmatprep.subr.mxu0 0.0
    %1575 = vmatpush1.msra.mxu0 0.0
    %1576 = vmatprep.subr.mxu0 0.0
    %1577 = vmatpush1.msra.mxu0 0.0
    %1578 = vmatprep.subr.mxu0 0.0
    %1579 = vmatpush1.msra.mxu0 0.0
    %1580 = vmatprep.subr.mxu0 0.0
    %1581 = vmatpush1.msra.mxu0 0.0
    %1582 = vmatprep.subr.mxu0 0.0
    %1583 = vmatpush1.msra.mxu0 0.0
    %1584 = vmatprep.subr.mxu0 0.0
    %1585 = vmatpush1.msra.mxu0 0.0
    %1586 = vmatprep.subr.mxu0 0.0
    %1587 = vmatpush1.msra.mxu0 0.0
    %1588 = vmatprep.subr.mxu0 0.0
    %1589 = vmatpush1.msra.mxu0 0.0
    %1590 = vmatprep.subr.mxu0 0.0
    %1591 = vmatpush1.msra.mxu0 0.0
    %1592 = vmatprep.subr.mxu0 0.0
    %1593 = vmatpush1.msra.mxu0 0.0
    %1594 = vmatprep.subr.mxu0 0.0
    %1595 = vmatpush1.msra.mxu0 0.0
    %1596 = vmatprep.subr.mxu0 0.0
    %1597 = vmatpush1.msra.mxu0 0.0
    %1598 = vmatprep.subr.mxu0 0.0
    %1599 = vmatpush1.msra.mxu0 0.0
    %1600 = vmatprep.subr.mxu0 0.0
    %1601 = vmatpush1.msra.mxu0 0.0
    %1602 = vmatprep.subr.mxu0 0.0
    %1603 = vmatpush1.msra.mxu0 %v1569
    %1604 = vmatprep.subr.mxu0 0.0
    %1605 = vmatpush2.msra.mxu0 0.0
    %1606 = vmatprep.subr.mxu0 0.0
    %1607 = vmatpush2.msra.mxu0 0.0
    %1608 = vmatprep.subr.mxu0 0.0
    %1609 = vmatpush2.msra.mxu0 0.0
    %1610 = vmatprep.subr.mxu0 0.0
    %1611 = vmatpush2.msra.mxu0 0.0
    %1612 = vmatprep.subr.mxu0 0.0
    %1613 = vmatpush2.msra.mxu0 0.0
    %1614 = vmatprep.subr.mxu0 0.0
    %1615 = vmatpush2.msra.mxu0 0.0
    %1616 = vmatprep.subr.mxu0 0.0
    %1617 = vmatpush2.msra.mxu0 0.0
    %1618 = vmatprep.subr.mxu0 0.0
    %1619 = vmatpush2.msra.mxu0 0.0
    %1620 = vmatprep.subr.mxu0 0.0
    %1621 = vmatpush2.msra.mxu0 0.0
    %1622 = vmatprep.subr.mxu0 0.0
    %1623 = vmatpush2.msra.mxu0 0.0
    %1624 = vmatprep.subr.mxu0 0.0
    %1625 = vmatpush2.msra.mxu0 0.0
    %1626 = vmatprep.subr.mxu0 0.0
    %1627 = vmatpush2.msra.mxu0 0.0
    %1628 = vmatprep.subr.mxu0 0.0
    %1629 = vmatpush2.msra.mxu0 0.0
    %1630 = vmatprep.subr.mxu0 0.0
    %1631 = vmatpush2.msra.mxu0 0.0
    %1632 = vmatprep.subr.mxu0 0.0
    %1633 = vmatpush2.msra.mxu0 0.0
    %1634 = vmatprep.subr.mxu0 0.0
    %1635 = vmatpush2.msra.mxu0 0.0
    %1636 = vmatprep.mubr.f32.mxu0 0.0
    %1637 = vmatmul.mubr.f32.gmra.mxu0 %v623
    %v1638 = vpop.f32.mrf.mxu0
    %v1639 = vadd.f32 %v187, %v1638
    %v1640 = vpop.f32.mrf.mxu0
    %1641 = vmatprep.mubr.f32.mxu0 0.0
    %1642 = vmatmul.mubr.f32.gmra.mxu0 %v626
    %v1643 = vpop.f32.mrf.mxu0
    %v1644 = vadd.f32 %v192, %v1643
    %v1645 = vpop.f32.mrf.mxu0
    %1646 = vmatprep.mubr.f32.mxu0 0.0
    %1647 = vmatmul.mubr.f32.gmra.mxu0 %v629
    %v1648 = vpop.f32.mrf.mxu0
    %v1649 = vadd.f32 %v197, %v1648
    %v1650 = vpop.f32.mrf.mxu0
    %1651 = vmatprep.mubr.f32.mxu0 0.0
    %1652 = vmatmul.mubr.f32.gmra.mxu0 %v632
    %v1653 = vpop.f32.mrf.mxu0
    %v1654 = vadd.f32 %v202, %v1653
    %v1655 = vpop.f32.mrf.mxu0
    %1656 = vmatprep.mubr.f32.mxu0 0.0
    %1657 = vmatmul.mubr.f32.gmra.mxu0 %v635
    %v1658 = vpop.f32.mrf.mxu0
    %v1659 = vadd.f32 %v207, %v1658
    %v1660 = vpop.f32.mrf.mxu0
    %1661 = vmatprep.mubr.f32.mxu0 0.0
    %1662 = vmatmul.mubr.f32.gmra.mxu0 %v638
    %v1663 = vpop.f32.mrf.mxu0
    %v1664 = vadd.f32 %v212, %v1663
    %v1665 = vpop.f32.mrf.mxu0
    %1666 = vmatprep.mubr.f32.mxu0 0.0
    %1667 = vmatmul.mubr.f32.gmra.mxu0 %v641
    %v1668 = vpop.f32.mrf.mxu0
    %v1669 = vadd.f32 %v217, %v1668
    %v1670 = vpop.f32.mrf.mxu0
    %1671 = vdwg.mxu0
    %v1672 = vmax.f32 %v1639, 0.0
    %v1673 = vmax.f32 %v1644, 0.0
    %v1674 = vmax.f32 %v1649, 0.0
    %v1675 = vmax.f32 %v1654, 0.0
    %v1676 = vmax.f32 %v1659, 0.0
    %v1677 = vmax.f32 %v1664, 0.0
    %v1678 = vmax.f32 %v1669, 0.0
    %v1680 = vsel %vm756, %v1672, 0
    %v1683 = vsel %vm756, %v1673, 0
    %v1686 = vsel %vm756, %v1674, 0
    %v1689 = vsel %vm756, %v1675, 0
    %v1692 = vsel %vm756, %v1676, 0
    %v1695 = vsel %vm756, %v1677, 0
    %v1698 = vsel %vm756, %v1678, 0
    %1700 = vmatprep.subr.mxu0 0.0
    %1701 = vmatpush1.msra.mxu0 0.0
    %1702 = vmatprep.subr.mxu0 0.0
    %1703 = vmatpush1.msra.mxu0 0.0
    %1704 = vmatprep.subr.mxu0 0.0
    %1705 = vmatpush1.msra.mxu0 0.0
    %1706 = vmatprep.subr.mxu0 0.0
    %1707 = vmatpush1.msra.mxu0 0.0
    %1708 = vmatprep.subr.mxu0 0.0
    %1709 = vmatpush1.msra.mxu0 0.0
    %1710 = vmatprep.subr.mxu0 0.0
    %1711 = vmatpush1.msra.mxu0 0.0
    %1712 = vmatprep.subr.mxu0 0.0
    %1713 = vmatpush1.msra.mxu0 0.0
    %1714 = vmatprep.subr.mxu0 0.0
    %1715 = vmatpush1.msra.mxu0 0.0
    %1716 = vmatprep.subr.mxu0 0.0
    %1717 = vmatpush1.msra.mxu0 0.0
    %1718 = vmatprep.subr.mxu0 0.0
    %1719 = vmatpush1.msra.mxu0 0.0
    %1720 = vmatprep.subr.mxu0 0.0
    %1721 = vmatpush1.msra.mxu0 0.0
    %1722 = vmatprep.subr.mxu0 0.0
    %1723 = vmatpush1.msra.mxu0 0.0
    %1724 = vmatprep.subr.mxu0 0.0
    %1725 = vmatpush1.msra.mxu0 0.0
    %1726 = vmatprep.subr.mxu0 0.0
    %1727 = vmatpush1.msra.mxu0 0.0
    %1728 = vmatprep.subr.mxu0 0.0
    %1729 = vmatpush1.msra.mxu0 %v69
    %1730 = vmatprep.subr.mxu0 0.0
    %1731 = vmatpush1.msra.mxu0 %v68
    %1732 = vmatprep.subr.mxu0 0.0
    %1733 = vmatpush2.msra.mxu0 0.0
    %1734 = vmatprep.subr.mxu0 0.0
    %1735 = vmatpush2.msra.mxu0 0.0
    %1736 = vmatprep.subr.mxu0 0.0
    %1737 = vmatpush2.msra.mxu0 0.0
    %1738 = vmatprep.subr.mxu0 0.0
    %1739 = vmatpush2.msra.mxu0 0.0
    %1740 = vmatprep.subr.mxu0 0.0
    %1741 = vmatpush2.msra.mxu0 0.0
    %1742 = vmatprep.subr.mxu0 0.0
    %1743 = vmatpush2.msra.mxu0 0.0
    %1744 = vmatprep.subr.mxu0 0.0
    %1745 = vmatpush2.msra.mxu0 0.0
    %1746 = vmatprep.subr.mxu0 0.0
    %1747 = vmatpush2.msra.mxu0 0.0
    %1748 = vmatprep.subr.mxu0 0.0
    %1749 = vmatpush2.msra.mxu0 0.0
    %1750 = vmatprep.subr.mxu0 0.0
    %1751 = vmatpush2.msra.mxu0 0.0
    %1752 = vmatprep.subr.mxu0 0.0
    %1753 = vmatpush2.msra.mxu0 0.0
    %1754 = vmatprep.subr.mxu0 0.0
    %1755 = vmatpush2.msra.mxu0 0.0
    %1756 = vmatprep.subr.mxu0 0.0
    %1757 = vmatpush2.msra.mxu0 0.0
    %1758 = vmatprep.subr.mxu0 0.0
    %1759 = vmatpush2.msra.mxu0 0.0
    %1760 = vmatprep.subr.mxu0 0.0
    %1761 = vmatpush2.msra.mxu0 0.0
    %1762 = vmatprep.subr.mxu0 0.0
    %1763 = vmatpush2.msra.mxu0 0.0
    %1764 = vmatprep.mubr.f32.mxu0 0.0
    %1765 = vmatmul.mubr.f32.gmra.mxu0 %v1680
    %v1766 = vpop.f32.mrf.mxu0
    %v1767 = vadd.f32 %v754, %v1766
    %v1768 = vpop.f32.mrf.mxu0
    %1769 = vmatprep.mubr.f32.mxu0 0.0
    %1770 = vmatmul.mubr.f32.gmra.mxu0 %v1683
    %v1771 = vpop.f32.mrf.mxu0
    %v1772 = vadd.f32 %v754, %v1771
    %v1773 = vpop.f32.mrf.mxu0
    %1774 = vmatprep.mubr.f32.mxu0 0.0
    %1775 = vmatmul.mubr.f32.gmra.mxu0 %v1686
    %v1776 = vpop.f32.mrf.mxu0
    %v1777 = vadd.f32 %v754, %v1776
    %v1778 = vpop.f32.mrf.mxu0
    %1779 = vmatprep.mubr.f32.mxu0 0.0
    %1780 = vmatmul.mubr.f32.gmra.mxu0 %v1689
    %v1781 = vpop.f32.mrf.mxu0
    %v1782 = vadd.f32 %v754, %v1781
    %v1783 = vpop.f32.mrf.mxu0
    %1784 = vmatprep.mubr.f32.mxu0 0.0
    %1785 = vmatmul.mubr.f32.gmra.mxu0 %v1692
    %v1786 = vpop.f32.mrf.mxu0
    %v1787 = vadd.f32 %v754, %v1786
    %v1788 = vpop.f32.mrf.mxu0
    %1789 = vmatprep.mubr.f32.mxu0 0.0
    %1790 = vmatmul.mubr.f32.gmra.mxu0 %v1695
    %v1791 = vpop.f32.mrf.mxu0
    %v1792 = vadd.f32 %v754, %v1791
    %v1793 = vpop.f32.mrf.mxu0
    %1794 = vmatprep.mubr.f32.mxu0 0.0
    %1795 = vmatmul.mubr.f32.gmra.mxu0 %v1698
    %v1796 = vpop.f32.mrf.mxu0
    %v1797 = vadd.f32 %v754, %v1796
    %v1798 = vpop.f32.mrf.mxu0
    %1799 = vdwg.mxu0
    %v1800 = vmax.f32 %v1767, 0.0
    %v1801 = vmax.f32 %v1772, 0.0
    %v1802 = vmax.f32 %v1777, 0.0
    %v1803 = vmax.f32 %v1782, 0.0
    %v1804 = vmax.f32 %v1787, 0.0
    %v1805 = vmax.f32 %v1792, 0.0
    %v1806 = vmax.f32 %v1797, 0.0
    %v1807 = vmul.f32 %v227, %v1800
    %v1808 = vmul.f32 %v231, %v1801
    %v1809 = vmul.f32 %v235, %v1802
    %v1810 = vmul.f32 %v239, %v1803
    %v1811 = vmul.f32 %v243, %v1804
    %v1812 = vmul.f32 %v247, %v1805
    %v1813 = vmul.f32 %v251, %v1806
    %v1814 = vmul.f32 %v258, %v1800
    %v1815 = vmul.f32 %v262, %v1801
    %v1816 = vmul.f32 %v266, %v1802
    %v1817 = vmul.f32 %v270, %v1803
    %v1818 = vmul.f32 %v274, %v1804
    %v1819 = vmul.f32 %v278, %v1805
    %v1820 = vmul.f32 %v282, %v1806
    %v1821 = vmul.f32 %v289, %v1800
    %v1822 = vmul.f32 %v293, %v1801
    %v1823 = vmul.f32 %v297, %v1802
    %v1824 = vmul.f32 %v301, %v1803
    %v1825 = vmul.f32 %v305, %v1804
    %v1826 = vmul.f32 %v309, %v1805
    %v1827 = vmul.f32 %v313, %v1806
    %v1828 = vmul.f32 %v320, %v1800
    %v1829 = vmul.f32 %v324, %v1801
    %v1830 = vmul.f32 %v328, %v1802
    %v1831 = vmul.f32 %v332, %v1803
    %v1832 = vmul.f32 %v336, %v1804
    %v1833 = vmul.f32 %v340, %v1805
    %v1834 = vmul.f32 %v344, %v1806
    %v1835 = vmul.f32 %v351, %v1800
    %v1836 = vmul.f32 %v355, %v1801
    %v1837 = vmul.f32 %v359, %v1802
    %v1838 = vmul.f32 %v363, %v1803
    %v1839 = vmul.f32 %v367, %v1804
    %v1840 = vmul.f32 %v371, %v1805
    %v1841 = vmul.f32 %v375, %v1806
    %v1842 = vmul.f32 %v382, %v1800
    %v1843 = vmul.f32 %v386, %v1801
    %v1844 = vmul.f32 %v390, %v1802
    %v1845 = vmul.f32 %v394, %v1803
    %v1846 = vmul.f32 %v398, %v1804
    %v1847 = vmul.f32 %v402, %v1805
    %v1848 = vmul.f32 %v406, %v1806
    %v1849 = vmul.f32 %v413, %v1800
    %v1850 = vmul.f32 %v417, %v1801
    %v1851 = vmul.f32 %v421, %v1802
    %v1852 = vmul.f32 %v425, %v1803
    %v1853 = vmul.f32 %v429, %v1804
    %v1854 = vmul.f32 %v433, %v1805
    %v1855 = vmul.f32 %v437, %v1806
    %v1856 = vmul.f32 %v444, %v1800
    %v1857 = vmul.f32 %v448, %v1801
    %v1858 = vmul.f32 %v452, %v1802
    %v1859 = vmul.f32 %v456, %v1803
    %v1860 = vmul.f32 %v460, %v1804
    %v1861 = vmul.f32 %v464, %v1805
    %v1862 = vmul.f32 %v468, %v1806
    %v1863 = vsel %vm756, %v1807, -inf
    %v1864 = vsel %vm756, %v1808, -inf
    %v1865 = vmax.f32 %v1863, %v1864
    %v1866 = vsel %vm756, %v1809, -inf
    %v1867 = vmax.f32 %v1865, %v1866
    %v1868 = vsel %vm756, %v1810, -inf
    %v1869 = vmax.f32 %v1867, %v1868
    %v1870 = vsel %vm756, %v1811, -inf
    %v1871 = vmax.f32 %v1869, %v1870
    %v1872 = vsel %vm756, %v1812, -inf
    %v1873 = vmax.f32 %v1871, %v1872
    %v1874 = vsel %vm756, %v1813, -inf
    %v1875 = vmax.f32 %v1873, %v1874
    %v1876 = vrot.slane %v1875, 4
    %v1877 = vmax.f32 %v1875, %v1876
    %v1878 = vrot.slane %v1877, 2
    %v1879 = vmax.f32 %v1877, %v1878
    %v1880 = vrot.slane %v1879, 1
    %v1881 = vmax.f32 %v1879, %v1880
    %v1882 = vsel %vm756, %v1814, -inf
    %v1883 = vsel %vm756, %v1815, -inf
    %v1884 = vmax.f32 %v1882, %v1883
    %v1885 = vsel %vm756, %v1816, -inf
    %v1886 = vmax.f32 %v1884, %v1885
    %v1887 = vsel %vm756, %v1817, -inf
    %v1888 = vmax.f32 %v1886, %v1887
    %v1889 = vsel %vm756, %v1818, -inf
    %v1890 = vmax.f32 %v1888, %v1889
    %v1891 = vsel %vm756, %v1819, -inf
    %v1892 = vmax.f32 %v1890, %v1891
    %v1893 = vsel %vm756, %v1820, -inf
    %v1894 = vmax.f32 %v1892, %v1893
    %v1895 = vrot.slane %v1894, 4
    %v1896 = vmax.f32 %v1894, %v1895
    %v1897 = vrot.slane %v1896, 2
    %v1898 = vmax.f32 %v1896, %v1897
    %v1899 = vrot.slane %v1898, 1
    %v1900 = vmax.f32 %v1898, %v1899
    %v1901 = vsel %vm756, %v1821, -inf
    %v1902 = vsel %vm756, %v1822, -inf
    %v1903 = vmax.f32 %v1901, %v1902
    %v1904 = vsel %vm756, %v1823, -inf
    %v1905 = vmax.f32 %v1903, %v1904
    %v1906 = vsel %vm756, %v1824, -inf
    %v1907 = vmax.f32 %v1905, %v1906
    %v1908 = vsel %vm756, %v1825, -inf
    %v1909 = vmax.f32 %v1907, %v1908
    %v1910 = vsel %vm756, %v1826, -inf
    %v1911 = vmax.f32 %v1909, %v1910
    %v1912 = vsel %vm756, %v1827, -inf
    %v1913 = vmax.f32 %v1911, %v1912
    %v1914 = vrot.slane %v1913, 4
    %v1915 = vmax.f32 %v1913, %v1914
    %v1916 = vrot.slane %v1915, 2
    %v1917 = vmax.f32 %v1915, %v1916
    %v1918 = vrot.slane %v1917, 1
    %v1919 = vmax.f32 %v1917, %v1918
    %v1920 = vsel %vm756, %v1828, -inf
    %v1921 = vsel %vm756, %v1829, -inf
    %v1922 = vmax.f32 %v1920, %v1921
    %v1923 = vsel %vm756, %v1830, -inf
    %v1924 = vmax.f32 %v1922, %v1923
    %v1925 = vsel %vm756, %v1831, -inf
    %v1926 = vmax.f32 %v1924, %v1925
    %v1927 = vsel %vm756, %v1832, -inf
    %v1928 = vmax.f32 %v1926, %v1927
    %v1929 = vsel %vm756, %v1833, -inf
    %v1930 = vmax.f32 %v1928, %v1929
    %v1931 = vsel %vm756, %v1834, -inf
    %v1932 = vmax.f32 %v1930, %v1931
    %v1933 = vrot.slane %v1932, 4
    %v1934 = vmax.f32 %v1932, %v1933
    %v1935 = vrot.slane %v1934, 2
    %v1936 = vmax.f32 %v1934, %v1935
    %v1937 = vrot.slane %v1936, 1
    %v1938 = vmax.f32 %v1936, %v1937
    %v1939 = vsel %vm756, %v1835, -inf
    %v1940 = vsel %vm756, %v1836, -inf
    %v1941 = vmax.f32 %v1939, %v1940
    %v1942 = vsel %vm756, %v1837, -inf
    %v1943 = vmax.f32 %v1941, %v1942
    %v1944 = vsel %vm756, %v1838, -inf
    %v1945 = vmax.f32 %v1943, %v1944
    %v1946 = vsel %vm756, %v1839, -inf
    %v1947 = vmax.f32 %v1945, %v1946
    %v1948 = vsel %vm756, %v1840, -inf
    %v1949 = vmax.f32 %v1947, %v1948
    %v1950 = vsel %vm756, %v1841, -inf
    %v1951 = vmax.f32 %v1949, %v1950
    %v1952 = vrot.slane %v1951, 4
    %v1953 = vmax.f32 %v1951, %v1952
    %v1954 = vrot.slane %v1953, 2
    %v1955 = vmax.f32 %v1953, %v1954
    %v1956 = vrot.slane %v1955, 1
    %v1957 = vmax.f32 %v1955, %v1956
    %v1958 = vsel %vm756, %v1842, -inf
    %v1959 = vsel %vm756, %v1843, -inf
    %v1960 = vmax.f32 %v1958, %v1959
    %v1961 = vsel %vm756, %v1844, -inf
    %v1962 = vmax.f32 %v1960, %v1961
    %v1963 = vsel %vm756, %v1845, -inf
    %v1964 = vmax.f32 %v1962, %v1963
    %v1965 = vsel %vm756, %v1846, -inf
    %v1966 = vmax.f32 %v1964, %v1965
    %v1967 = vsel %vm756, %v1847, -inf
    %v1968 = vmax.f32 %v1966, %v1967
    %v1969 = vsel %vm756, %v1848, -inf
    %v1970 = vmax.f32 %v1968, %v1969
    %v1971 = vrot.slane %v1970, 4
    %v1972 = vmax.f32 %v1970, %v1971
    %v1973 = vrot.slane %v1972, 2
    %v1974 = vmax.f32 %v1972, %v1973
    %v1975 = vrot.slane %v1974, 1
    %v1976 = vmax.f32 %v1974, %v1975
    %v1977 = vsel %vm756, %v1849, -inf
    %v1978 = vsel %vm756, %v1850, -inf
    %v1979 = vmax.f32 %v1977, %v1978
    %v1980 = vsel %vm756, %v1851, -inf
    %v1981 = vmax.f32 %v1979, %v1980
    %v1982 = vsel %vm756, %v1852, -inf
    %v1983 = vmax.f32 %v1981, %v1982
    %v1984 = vsel %vm756, %v1853, -inf
    %v1985 = vmax.f32 %v1983, %v1984
    %v1986 = vsel %vm756, %v1854, -inf
    %v1987 = vmax.f32 %v1985, %v1986
    %v1988 = vsel %vm756, %v1855, -inf
    %v1989 = vmax.f32 %v1987, %v1988
    %v1990 = vrot.slane %v1989, 4
    %v1991 = vmax.f32 %v1989, %v1990
    %v1992 = vrot.slane %v1991, 2
    %v1993 = vmax.f32 %v1991, %v1992
    %v1994 = vrot.slane %v1993, 1
    %v1995 = vmax.f32 %v1993, %v1994
    %v1996 = vsel %vm756, %v1856, -inf
    %v1997 = vsel %vm756, %v1857, -inf
    %v1998 = vmax.f32 %v1996, %v1997
    %v1999 = vsel %vm756, %v1858, -inf
    %v2000 = vmax.f32 %v1998, %v1999
    %v2001 = vsel %vm756, %v1859, -inf
    %v2002 = vmax.f32 %v2000, %v2001
    %v2003 = vsel %vm756, %v1860, -inf
    %v2004 = vmax.f32 %v2002, %v2003
    %v2005 = vsel %vm756, %v1861, -inf
    %v2006 = vmax.f32 %v2004, %v2005
    %v2007 = vsel %vm756, %v1862, -inf
    %v2008 = vmax.f32 %v2006, %v2007
    %v2009 = vrot.slane %v2008, 4
    %v2010 = vmax.f32 %v2008, %v2009
    %v2011 = vrot.slane %v2010, 2
    %v2012 = vmax.f32 %v2010, %v2011
    %v2013 = vrot.slane %v2012, 1
    %v2014 = vmax.f32 %v2012, %v2013
    %2015 = vmatprep.subr.mxu0 0.0
    %2016 = vmatpush1.msra.mxu0 0.0
    %2017 = vmatprep.subr.mxu0 0.0
    %2018 = vmatpush1.msra.mxu0 0.0
    %2019 = vmatprep.subr.mxu0 0.0
    %2020 = vmatpush1.msra.mxu0 0.0
    %2021 = vmatprep.subr.mxu0 0.0
    %2022 = vmatpush1.msra.mxu0 0.0
    %2023 = vmatprep.subr.mxu0 0.0
    %2024 = vmatpush1.msra.mxu0 0.0
    %2025 = vmatprep.subr.mxu0 0.0
    %2026 = vmatpush1.msra.mxu0 0.0
    %2027 = vmatprep.subr.mxu0 0.0
    %2028 = vmatpush1.msra.mxu0 0.0
    %2029 = vmatprep.subr.mxu0 0.0
    %2030 = vmatpush1.msra.mxu0 0.0
    %2031 = vmatprep.subr.mxu0 0.0
    %2032 = vmatpush1.msra.mxu0 0.0
    %2033 = vmatprep.subr.mxu0 0.0
    %2034 = vmatpush1.msra.mxu0 0.0
    %2035 = vmatprep.subr.mxu0 0.0
    %2036 = vmatpush1.msra.mxu0 0.0
    %2037 = vmatprep.subr.mxu0 0.0
    %2038 = vmatpush1.msra.mxu0 0.0
    %2039 = vmatprep.subr.mxu0 0.0
    %2040 = vmatpush1.msra.mxu0 0.0
    %2041 = vmatprep.subr.mxu0 0.0
    %2042 = vmatpush1.msra.mxu0 0.0
    %2043 = vmatprep.subr.mxu0 0.0
    %2044 = vmatpush1.msra.mxu0 0.0
    %2045 = vmatprep.subr.mxu0 0.0
    %2046 = vmatpush1.msra.mxu0 %v1094
    %2047 = vmatprep.subr.mxu0 0.0
    %2048 = vmatpush2.msra.mxu0 0.0
    %2049 = vmatprep.subr.mxu0 0.0
    %2050 = vmatpush2.msra.mxu0 0.0
    %2051 = vmatprep.subr.mxu0 0.0
    %2052 = vmatpush2.msra.mxu0 0.0
    %2053 = vmatprep.subr.mxu0 0.0
    %2054 = vmatpush2.msra.mxu0 0.0
    %2055 = vmatprep.subr.mxu0 0.0
    %2056 = vmatpush2.msra.mxu0 0.0
    %2057 = vmatprep.subr.mxu0 0.0
    %2058 = vmatpush2.msra.mxu0 0.0
    %2059 = vmatprep.subr.mxu0 0.0
    %2060 = vmatpush2.msra.mxu0 0.0
    %2061 = vmatprep.subr.mxu0 0.0
    %2062 = vmatpush2.msra.mxu0 0.0
    %2063 = vmatprep.subr.mxu0 0.0
    %2064 = vmatpush2.msra.mxu0 0.0
    %2065 = vmatprep.subr.mxu0 0.0
    %2066 = vmatpush2.msra.mxu0 0.0
    %2067 = vmatprep.subr.mxu0 0.0
    %2068 = vmatpush2.msra.mxu0 0.0
    %2069 = vmatprep.subr.mxu0 0.0
    %2070 = vmatpush2.msra.mxu0 0.0
    %2071 = vmatprep.subr.mxu0 0.0
    %2072 = vmatpush2.msra.mxu0 0.0
    %2073 = vmatprep.subr.mxu0 0.0
    %2074 = vmatpush2.msra.mxu0 0.0
    %2075 = vmatprep.subr.mxu0 0.0
    %2076 = vmatpush2.msra.mxu0 0.0
    %2077 = vmatprep.subr.mxu0 0.0
    %2078 = vmatpush2.msra.mxu0 0.0
    %2079 = vmatprep.mubr.f32.mxu0 0.0
    %2080 = vmatmul.mubr.f32.gmra.mxu0 %v546
    %v2081 = vpop.f32.mrf.mxu0
    %v2082 = vadd.f32 0.0, %v2081
    %v2083 = vpop.f32.mrf.mxu0
    %2084 = vdwg.mxu0
    %2085 = vmatprep.subr.mxu0 0.0
    %2086 = vmatpush1.msra.mxu0 0.0
    %2087 = vmatprep.subr.mxu0 0.0
    %2088 = vmatpush1.msra.mxu0 0.0
    %2089 = vmatprep.subr.mxu0 0.0
    %2090 = vmatpush1.msra.mxu0 0.0
    %2091 = vmatprep.subr.mxu0 0.0
    %2092 = vmatpush1.msra.mxu0 0.0
    %2093 = vmatprep.subr.mxu0 0.0
    %2094 = vmatpush1.msra.mxu0 0.0
    %2095 = vmatprep.subr.mxu0 0.0
    %2096 = vmatpush1.msra.mxu0 0.0
    %2097 = vmatprep.subr.mxu0 0.0
    %2098 = vmatpush1.msra.mxu0 0.0
    %2099 = vmatprep.subr.mxu0 0.0
    %2100 = vmatpush1.msra.mxu0 0.0
    %2101 = vmatprep.subr.mxu0 0.0
    %2102 = vmatpush1.msra.mxu0 0.0
    %2103 = vmatprep.subr.mxu0 0.0
    %2104 = vmatpush1.msra.mxu0 0.0
    %2105 = vmatprep.subr.mxu0 0.0
    %2106 = vmatpush1.msra.mxu0 0.0
    %2107 = vmatprep.subr.mxu0 0.0
    %2108 = vmatpush1.msra.mxu0 0.0
    %2109 = vmatprep.subr.mxu0 0.0
    %2110 = vmatpush1.msra.mxu0 0.0
    %2111 = vmatprep.subr.mxu0 0.0
    %2112 = vmatpush1.msra.mxu0 0.0
    %2113 = vmatprep.subr.mxu0 0.0
    %2114 = vmatpush1.msra.mxu0 0.0
    %2115 = vmatprep.subr.mxu0 0.0
    %2116 = vmatpush1.msra.mxu0 %v1167
    %2117 = vmatprep.subr.mxu0 0.0
    %2118 = vmatpush2.msra.mxu0 0.0
    %2119 = vmatprep.subr.mxu0 0.0
    %2120 = vmatpush2.msra.mxu0 0.0
    %2121 = vmatprep.subr.mxu0 0.0
    %2122 = vmatpush2.msra.mxu0 0.0
    %2123 = vmatprep.subr.mxu0 0.0
    %2124 = vmatpush2.msra.mxu0 0.0
    %2125 = vmatprep.subr.mxu0 0.0
    %2126 = vmatpush2.msra.mxu0 0.0
    %2127 = vmatprep.subr.mxu0 0.0
    %2128 = vmatpush2.msra.mxu0 0.0
    %2129 = vmatprep.subr.mxu0 0.0
    %2130 = vmatpush2.msra.mxu0 0.0
    %2131 = vmatprep.subr.mxu0 0.0
    %2132 = vmatpush2.msra.mxu0 0.0
    %2133 = vmatprep.subr.mxu0 0.0
    %2134 = vmatpush2.msra.mxu0 0.0
    %2135 = vmatprep.subr.mxu0 0.0
    %2136 = vmatpush2.msra.mxu0 0.0
    %2137 = vmatprep.subr.mxu0 0.0
    %2138 = vmatpush2.msra.mxu0 0.0
    %2139 = vmatprep.subr.mxu0 0.0
    %2140 = vmatpush2.msra.mxu0 0.0
    %2141 = vmatprep.subr.mxu0 0.0
    %2142 = vmatpush2.msra.mxu0 0.0
    %2143 = vmatprep.subr.mxu0 0.0
    %2144 = vmatpush2.msra.mxu0 0.0
    %2145 = vmatprep.subr.mxu0 0.0
    %2146 = vmatpush2.msra.mxu0 0.0
    %2147 = vmatprep.subr.mxu0 0.0
    %2148 = vmatpush2.msra.mxu0 0.0
    %2149 = vmatprep.mubr.f32.mxu0 0.0
    %2150 = vmatmul.mubr.f32.gmra.mxu0 %v1500
    %v2151 = vpop.f32.mrf.mxu0
    %v2152 = vadd.f32 %v2082, %v2151
    %v2153 = vpop.f32.mrf.mxu0
    %2154 = vdwg.mxu0
    %v2163 = vsel %vm1247, %v1900, %v1881
    %v2164 = vsel %vm1249, %v1919, %v2163
    %v2165 = vsel %vm1251, %v1938, %v2164
    %v2166 = vsel %vm1253, %v1957, %v2165
    %v2167 = vsel %vm1255, %v1976, %v2166
    %v2168 = vsel %vm1257, %v1995, %v2167
    %v2169 = vsel %vm1259, %v2014, %v2168
    %v2170 = vsel %vm756, %v2169, 0
    %2172 = vmatprep.subr.mxu0 0.0
    %2173 = vmatpush1.msra.mxu0 0.0
    %2174 = vmatprep.subr.mxu0 0.0
    %2175 = vmatpush1.msra.mxu0 0.0
    %2176 = vmatprep.subr.mxu0 0.0
    %2177 = vmatpush1.msra.mxu0 0.0
    %2178 = vmatprep.subr.mxu0 0.0
    %2179 = vmatpush1.msra.mxu0 0.0
    %2180 = vmatprep.subr.mxu0 0.0
    %2181 = vmatpush1.msra.mxu0 0.0
    %2182 = vmatprep.subr.mxu0 0.0
    %2183 = vmatpush1.msra.mxu0 0.0
    %2184 = vmatprep.subr.mxu0 0.0
    %2185 = vmatpush1.msra.mxu0 0.0
    %2186 = vmatprep.subr.mxu0 0.0
    %2187 = vmatpush1.msra.mxu0 0.0
    %2188 = vmatprep.subr.mxu0 0.0
    %2189 = vmatpush1.msra.mxu0 0.0
    %2190 = vmatprep.subr.mxu0 0.0
    %2191 = vmatpush1.msra.mxu0 0.0
    %2192 = vmatprep.subr.mxu0 0.0
    %2193 = vmatpush1.msra.mxu0 0.0
    %2194 = vmatprep.subr.mxu0 0.0
    %2195 = vmatpush1.msra.mxu0 0.0
    %2196 = vmatprep.subr.mxu0 0.0
    %2197 = vmatpush1.msra.mxu0 0.0
    %2198 = vmatprep.subr.mxu0 0.0
    %2199 = vmatpush1.msra.mxu0 0.0
    %2200 = vmatprep.subr.mxu0 0.0
    %2201 = vmatpush1.msra.mxu0 %v74
    %2202 = vmatprep.subr.mxu0 0.0
    %2203 = vmatpush1.msra.mxu0 %v73
    %2204 = vmatprep.subr.mxu0 0.0
    %2205 = vmatpush2.msra.mxu0 0.0
    %2206 = vmatprep.subr.mxu0 0.0
    %2207 = vmatpush2.msra.mxu0 0.0
    %2208 = vmatprep.subr.mxu0 0.0
    %2209 = vmatpush2.msra.mxu0 0.0
    %2210 = vmatprep.subr.mxu0 0.0
    %2211 = vmatpush2.msra.mxu0 0.0
    %2212 = vmatprep.subr.mxu0 0.0
    %2213 = vmatpush2.msra.mxu0 0.0
    %2214 = vmatprep.subr.mxu0 0.0
    %2215 = vmatpush2.msra.mxu0 0.0
    %2216 = vmatprep.subr.mxu0 0.0
    %2217 = vmatpush2.msra.mxu0 0.0
    %2218 = vmatprep.subr.mxu0 0.0
    %2219 = vmatpush2.msra.mxu0 0.0
    %2220 = vmatprep.subr.mxu0 0.0
    %2221 = vmatpush2.msra.mxu0 0.0
    %2222 = vmatprep.subr.mxu0 0.0
    %2223 = vmatpush2.msra.mxu0 0.0
    %2224 = vmatprep.subr.mxu0 0.0
    %2225 = vmatpush2.msra.mxu0 0.0
    %2226 = vmatprep.subr.mxu0 0.0
    %2227 = vmatpush2.msra.mxu0 0.0
    %2228 = vmatprep.subr.mxu0 0.0
    %2229 = vmatpush2.msra.mxu0 0.0
    %2230 = vmatprep.subr.mxu0 0.0
    %2231 = vmatpush2.msra.mxu0 0.0
    %2232 = vmatprep.subr.mxu0 0.0
    %2233 = vmatpush2.msra.mxu0 0.0
    %2234 = vmatprep.subr.mxu0 0.0
    %2235 = vmatpush2.msra.mxu0 0.0
    %2236 = vmatprep.mubr.f32.mxu0 0.0
    %2237 = vmatmul.mubr.f32.gmra.mxu0 %v2170
    %v2238 = vpop.f32.mrf.mxu0
    %v2239 = vadd.f32 0.0, %v2238
    %v2240 = vpop.f32.mrf.mxu0
    %2241 = vdwg.mxu0
    %v2242 = vadd.f32 %v2152, %v2239
    %v2243 = vadd.f32 %v2242, %v1338
    %v2244 = vmax.f32 %v2243, 0.0
    %v2246 = vsel %vm756, %v2244, 0
    %2248 = vmatprep.subr.mxu0 0.0
    %2249 = vmatpush1.msra.mxu0 0.0
    %2250 = vmatprep.subr.mxu0 0.0
    %2251 = vmatpush1.msra.mxu0 0.0
    %2252 = vmatprep.subr.mxu0 0.0
    %2253 = vmatpush1.msra.mxu0 0.0
    %2254 = vmatprep.subr.mxu0 0.0
    %2255 = vmatpush1.msra.mxu0 0.0
    %2256 = vmatprep.subr.mxu0 0.0
    %2257 = vmatpush1.msra.mxu0 0.0
    %2258 = vmatprep.subr.mxu0 0.0
    %2259 = vmatpush1.msra.mxu0 0.0
    %2260 = vmatprep.subr.mxu0 0.0
    %2261 = vmatpush1.msra.mxu0 0.0
    %2262 = vmatprep.subr.mxu0 0.0
    %2263 = vmatpush1.msra.mxu0 0.0
    %2264 = vmatprep.subr.mxu0 0.0
    %2265 = vmatpush1.msra.mxu0 0.0
    %2266 = vmatprep.subr.mxu0 0.0
    %2267 = vmatpush1.msra.mxu0 0.0
    %2268 = vmatprep.subr.mxu0 0.0
    %2269 = vmatpush1.msra.mxu0 0.0
    %2270 = vmatprep.subr.mxu0 0.0
    %2271 = vmatpush1.msra.mxu0 0.0
    %2272 = vmatprep.subr.mxu0 0.0
    %2273 = vmatpush1.msra.mxu0 0.0
    %2274 = vmatprep.subr.mxu0 0.0
    %2275 = vmatpush1.msra.mxu0 0.0
    %2276 = vmatprep.subr.mxu0 0.0
    %2277 = vmatpush1.msra.mxu0 %v77
    %2278 = vmatprep.subr.mxu0 0.0
    %2279 = vmatpush1.msra.mxu0 %v76
    %2280 = vmatprep.subr.mxu0 0.0
    %2281 = vmatpush2.msra.mxu0 0.0
    %2282 = vmatprep.subr.mxu0 0.0
    %2283 = vmatpush2.msra.mxu0 0.0
    %2284 = vmatprep.subr.mxu0 0.0
    %2285 = vmatpush2.msra.mxu0 0.0
    %2286 = vmatprep.subr.mxu0 0.0
    %2287 = vmatpush2.msra.mxu0 0.0
    %2288 = vmatprep.subr.mxu0 0.0
    %2289 = vmatpush2.msra.mxu0 0.0
    %2290 = vmatprep.subr.mxu0 0.0
    %2291 = vmatpush2.msra.mxu0 0.0
    %2292 = vmatprep.subr.mxu0 0.0
    %2293 = vmatpush2.msra.mxu0 0.0
    %2294 = vmatprep.subr.mxu0 0.0
    %2295 = vmatpush2.msra.mxu0 0.0
    %2296 = vmatprep.subr.mxu0 0.0
    %2297 = vmatpush2.msra.mxu0 0.0
    %2298 = vmatprep.subr.mxu0 0.0
    %2299 = vmatpush2.msra.mxu0 0.0
    %2300 = vmatprep.subr.mxu0 0.0
    %2301 = vmatpush2.msra.mxu0 0.0
    %2302 = vmatprep.subr.mxu0 0.0
    %2303 = vmatpush2.msra.mxu0 0.0
    %2304 = vmatprep.subr.mxu0 0.0
    %2305 = vmatpush2.msra.mxu0 0.0
    %2306 = vmatprep.subr.mxu0 0.0
    %2307 = vmatpush2.msra.mxu0 0.0
    %2308 = vmatprep.subr.mxu0 0.0
    %2309 = vmatpush2.msra.mxu0 0.0
    %2310 = vmatprep.subr.mxu0 0.0
    %2311 = vmatpush2.msra.mxu0 0.0
    %2312 = vmatprep.mubr.f32.mxu0 0.0
    %2313 = vmatmul.mubr.f32.gmra.mxu0 %v2246
    %v2314 = vpop.f32.mrf.mxu0
    %v2315 = vadd.f32 %v1346, %v2314
    %v2316 = vpop.f32.mrf.mxu0
    %2317 = vdwg.mxu0
    %v2318 = vmax.f32 %v2315, 0.0
    %v2319 = vmul.f32 %v2318, %v2318
    %v2320 = vsel %vm94, %v2319, 0.0
    %2321 = vadd.xlane.f32.xlu0 %v2320
    %v2322 = vpop.xlane.xlu0 %2321
    %v2323 = vrsqrt.pop %v2322
    %v2324 = vmin.f32 %v2323, 1.0
    %v2325 = vmul.f32 %v2318, %v2324
    %2326 = vmatprep.subr.mxu0 0.0
    %2327 = vmatpush1.msra.mxu0 0.0
    %2328 = vmatprep.subr.mxu0 0.0
    %2329 = vmatpush1.msra.mxu0 0.0
    %2330 = vmatprep.subr.mxu0 0.0
    %2331 = vmatpush1.msra.mxu0 0.0
    %2332 = vmatprep.subr.mxu0 0.0
    %2333 = vmatpush1.msra.mxu0 0.0
    %2334 = vmatprep.subr.mxu0 0.0
    %2335 = vmatpush1.msra.mxu0 0.0
    %2336 = vmatprep.subr.mxu0 0.0
    %2337 = vmatpush1.msra.mxu0 0.0
    %2338 = vmatprep.subr.mxu0 0.0
    %2339 = vmatpush1.msra.mxu0 0.0
    %2340 = vmatprep.subr.mxu0 0.0
    %2341 = vmatpush1.msra.mxu0 0.0
    %2342 = vmatprep.subr.mxu0 0.0
    %2343 = vmatpush1.msra.mxu0 0.0
    %2344 = vmatprep.subr.mxu0 0.0
    %2345 = vmatpush1.msra.mxu0 0.0
    %2346 = vmatprep.subr.mxu0 0.0
    %2347 = vmatpush1.msra.mxu0 0.0
    %2348 = vmatprep.subr.mxu0 0.0
    %2349 = vmatpush1.msra.mxu0 0.0
    %2350 = vmatprep.subr.mxu0 0.0
    %2351 = vmatpush1.msra.mxu0 0.0
    %2352 = vmatprep.subr.mxu0 0.0
    %2353 = vmatpush1.msra.mxu0 0.0
    %2354 = vmatprep.subr.mxu0 0.0
    %2355 = vmatpush1.msra.mxu0 0.0
    %2356 = vmatprep.subr.mxu0 0.0
    %2357 = vmatpush1.msra.mxu0 %v473
    %2358 = vmatprep.subr.mxu0 0.0
    %2359 = vmatpush2.msra.mxu0 0.0
    %2360 = vmatprep.subr.mxu0 0.0
    %2361 = vmatpush2.msra.mxu0 0.0
    %2362 = vmatprep.subr.mxu0 0.0
    %2363 = vmatpush2.msra.mxu0 0.0
    %2364 = vmatprep.subr.mxu0 0.0
    %2365 = vmatpush2.msra.mxu0 0.0
    %2366 = vmatprep.subr.mxu0 0.0
    %2367 = vmatpush2.msra.mxu0 0.0
    %2368 = vmatprep.subr.mxu0 0.0
    %2369 = vmatpush2.msra.mxu0 0.0
    %2370 = vmatprep.subr.mxu0 0.0
    %2371 = vmatpush2.msra.mxu0 0.0
    %2372 = vmatprep.subr.mxu0 0.0
    %2373 = vmatpush2.msra.mxu0 0.0
    %2374 = vmatprep.subr.mxu0 0.0
    %2375 = vmatpush2.msra.mxu0 0.0
    %2376 = vmatprep.subr.mxu0 0.0
    %2377 = vmatpush2.msra.mxu0 0.0
    %2378 = vmatprep.subr.mxu0 0.0
    %2379 = vmatpush2.msra.mxu0 0.0
    %2380 = vmatprep.subr.mxu0 0.0
    %2381 = vmatpush2.msra.mxu0 0.0
    %2382 = vmatprep.subr.mxu0 0.0
    %2383 = vmatpush2.msra.mxu0 0.0
    %2384 = vmatprep.subr.mxu0 0.0
    %2385 = vmatpush2.msra.mxu0 0.0
    %2386 = vmatprep.subr.mxu0 0.0
    %2387 = vmatpush2.msra.mxu0 0.0
    %2388 = vmatprep.subr.mxu0 0.0
    %2389 = vmatpush2.msra.mxu0 0.0
    %2390 = vmatprep.mubr.f32.mxu0 0.0
    %2391 = vmatmul.mubr.f32.gmra.mxu0 %v1500
    %v2392 = vpop.f32.mrf.mxu0
    %v2393 = vadd.f32 0.0, %v2392
    %v2394 = vpop.f32.mrf.mxu0
    %2395 = vdwg.mxu0
    %v2397 = vsel %vm94, %v2325, 0
    %2399 = vmatprep.subr.mxu0 0.0
    %2400 = vmatpush1.msra.mxu0 0.0
    %2401 = vmatprep.subr.mxu0 0.0
    %2402 = vmatpush1.msra.mxu0 0.0
    %2403 = vmatprep.subr.mxu0 0.0
    %2404 = vmatpush1.msra.mxu0 0.0
    %2405 = vmatprep.subr.mxu0 0.0
    %2406 = vmatpush1.msra.mxu0 0.0
    %2407 = vmatprep.subr.mxu0 0.0
    %2408 = vmatpush1.msra.mxu0 0.0
    %2409 = vmatprep.subr.mxu0 0.0
    %2410 = vmatpush1.msra.mxu0 0.0
    %2411 = vmatprep.subr.mxu0 0.0
    %2412 = vmatpush1.msra.mxu0 0.0
    %2413 = vmatprep.subr.mxu0 0.0
    %2414 = vmatpush1.msra.mxu0 0.0
    %2415 = vmatprep.subr.mxu0 0.0
    %2416 = vmatpush1.msra.mxu0 0.0
    %2417 = vmatprep.subr.mxu0 0.0
    %2418 = vmatpush1.msra.mxu0 0.0
    %2419 = vmatprep.subr.mxu0 0.0
    %2420 = vmatpush1.msra.mxu0 0.0
    %2421 = vmatprep.subr.mxu0 0.0
    %2422 = vmatpush1.msra.mxu0 0.0
    %2423 = vmatprep.subr.mxu0 0.0
    %2424 = vmatpush1.msra.mxu0 0.0
    %2425 = vmatprep.subr.mxu0 0.0
    %2426 = vmatpush1.msra.mxu0 0.0
    %2427 = vmatprep.subr.mxu0 0.0
    %2428 = vmatpush1.msra.mxu0 0.0
    %2429 = vmatprep.subr.mxu0 0.0
    %2430 = vmatpush1.msra.mxu0 %v549
    %2431 = vmatprep.subr.mxu0 0.0
    %2432 = vmatpush2.msra.mxu0 0.0
    %2433 = vmatprep.subr.mxu0 0.0
    %2434 = vmatpush2.msra.mxu0 0.0
    %2435 = vmatprep.subr.mxu0 0.0
    %2436 = vmatpush2.msra.mxu0 0.0
    %2437 = vmatprep.subr.mxu0 0.0
    %2438 = vmatpush2.msra.mxu0 0.0
    %2439 = vmatprep.subr.mxu0 0.0
    %2440 = vmatpush2.msra.mxu0 0.0
    %2441 = vmatprep.subr.mxu0 0.0
    %2442 = vmatpush2.msra.mxu0 0.0
    %2443 = vmatprep.subr.mxu0 0.0
    %2444 = vmatpush2.msra.mxu0 0.0
    %2445 = vmatprep.subr.mxu0 0.0
    %2446 = vmatpush2.msra.mxu0 0.0
    %2447 = vmatprep.subr.mxu0 0.0
    %2448 = vmatpush2.msra.mxu0 0.0
    %2449 = vmatprep.subr.mxu0 0.0
    %2450 = vmatpush2.msra.mxu0 0.0
    %2451 = vmatprep.subr.mxu0 0.0
    %2452 = vmatpush2.msra.mxu0 0.0
    %2453 = vmatprep.subr.mxu0 0.0
    %2454 = vmatpush2.msra.mxu0 0.0
    %2455 = vmatprep.subr.mxu0 0.0
    %2456 = vmatpush2.msra.mxu0 0.0
    %2457 = vmatprep.subr.mxu0 0.0
    %2458 = vmatpush2.msra.mxu0 0.0
    %2459 = vmatprep.subr.mxu0 0.0
    %2460 = vmatpush2.msra.mxu0 0.0
    %2461 = vmatprep.subr.mxu0 0.0
    %2462 = vmatpush2.msra.mxu0 0.0
    %2463 = vmatprep.mubr.f32.mxu0 0.0
    %2464 = vmatmul.mubr.f32.gmra.mxu0 %v2397
    %v2465 = vpop.f32.mrf.mxu0
    %v2466 = vadd.f32 %v2393, %v2465
    %v2467 = vpop.f32.mrf.mxu0
    %2468 = vdwg.mxu0
    %2469 = vmatprep.subr.mxu0 0.0
    %2470 = vmatpush1.msra.mxu0 0.0
    %2471 = vmatprep.subr.mxu0 0.0
    %2472 = vmatpush1.msra.mxu0 0.0
    %2473 = vmatprep.subr.mxu0 0.0
    %2474 = vmatpush1.msra.mxu0 0.0
    %2475 = vmatprep.subr.mxu0 0.0
    %2476 = vmatpush1.msra.mxu0 0.0
    %2477 = vmatprep.subr.mxu0 0.0
    %2478 = vmatpush1.msra.mxu0 0.0
    %2479 = vmatprep.subr.mxu0 0.0
    %2480 = vmatpush1.msra.mxu0 0.0
    %2481 = vmatprep.subr.mxu0 0.0
    %2482 = vmatpush1.msra.mxu0 0.0
    %2483 = vmatprep.subr.mxu0 0.0
    %2484 = vmatpush1.msra.mxu0 0.0
    %2485 = vmatprep.subr.mxu0 0.0
    %2486 = vmatpush1.msra.mxu0 0.0
    %2487 = vmatprep.subr.mxu0 0.0
    %2488 = vmatpush1.msra.mxu0 0.0
    %2489 = vmatprep.subr.mxu0 0.0
    %2490 = vmatpush1.msra.mxu0 0.0
    %2491 = vmatprep.subr.mxu0 0.0
    %2492 = vmatpush1.msra.mxu0 0.0
    %2493 = vmatprep.subr.mxu0 0.0
    %2494 = vmatpush1.msra.mxu0 0.0
    %2495 = vmatprep.subr.mxu0 0.0
    %2496 = vmatpush1.msra.mxu0 0.0
    %2497 = vmatprep.subr.mxu0 0.0
    %2498 = vmatpush1.msra.mxu0 0.0
    %2499 = vmatprep.subr.mxu0 0.0
    %2500 = vmatpush1.msra.mxu0 %v2466
    %2501 = vmatprep.subr.mxu0 0.0
    %2502 = vmatpush2.msra.mxu0 0.0
    %2503 = vmatprep.subr.mxu0 0.0
    %2504 = vmatpush2.msra.mxu0 0.0
    %2505 = vmatprep.subr.mxu0 0.0
    %2506 = vmatpush2.msra.mxu0 0.0
    %2507 = vmatprep.subr.mxu0 0.0
    %2508 = vmatpush2.msra.mxu0 0.0
    %2509 = vmatprep.subr.mxu0 0.0
    %2510 = vmatpush2.msra.mxu0 0.0
    %2511 = vmatprep.subr.mxu0 0.0
    %2512 = vmatpush2.msra.mxu0 0.0
    %2513 = vmatprep.subr.mxu0 0.0
    %2514 = vmatpush2.msra.mxu0 0.0
    %2515 = vmatprep.subr.mxu0 0.0
    %2516 = vmatpush2.msra.mxu0 0.0
    %2517 = vmatprep.subr.mxu0 0.0
    %2518 = vmatpush2.msra.mxu0 0.0
    %2519 = vmatprep.subr.mxu0 0.0
    %2520 = vmatpush2.msra.mxu0 0.0
    %2521 = vmatprep.subr.mxu0 0.0
    %2522 = vmatpush2.msra.mxu0 0.0
    %2523 = vmatprep.subr.mxu0 0.0
    %2524 = vmatpush2.msra.mxu0 0.0
    %2525 = vmatprep.subr.mxu0 0.0
    %2526 = vmatpush2.msra.mxu0 0.0
    %2527 = vmatprep.subr.mxu0 0.0
    %2528 = vmatpush2.msra.mxu0 0.0
    %2529 = vmatprep.subr.mxu0 0.0
    %2530 = vmatpush2.msra.mxu0 0.0
    %2531 = vmatprep.subr.mxu0 0.0
    %2532 = vmatpush2.msra.mxu0 0.0
    %2533 = vmatprep.mubr.f32.mxu0 0.0
    %2534 = vmatmul.mubr.f32.gmra.mxu0 %v623
    %v2535 = vpop.f32.mrf.mxu0
    %v2536 = vadd.f32 %v187, %v2535
    %v2537 = vpop.f32.mrf.mxu0
    %2538 = vmatprep.mubr.f32.mxu0 0.0
    %2539 = vmatmul.mubr.f32.gmra.mxu0 %v626
    %v2540 = vpop.f32.mrf.mxu0
    %v2541 = vadd.f32 %v192, %v2540
    %v2542 = vpop.f32.mrf.mxu0
    %2543 = vmatprep.mubr.f32.mxu0 0.0
    %2544 = vmatmul.mubr.f32.gmra.mxu0 %v629
    %v2545 = vpop.f32.mrf.mxu0
    %v2546 = vadd.f32 %v197, %v2545
    %v2547 = vpop.f32.mrf.mxu0
    %2548 = vmatprep.mubr.f32.mxu0 0.0
    %2549 = vmatmul.mubr.f32.gmra.mxu0 %v632
    %v2550 = vpop.f32.mrf.mxu0
    %v2551 = vadd.f32 %v202, %v2550
    %v2552 = vpop.f32.mrf.mxu0
    %2553 = vmatprep.mubr.f32.mxu0 0.0
    %2554 = vmatmul.mubr.f32.gmra.mxu0 %v635
    %v2555 = vpop.f32.mrf.mxu0
    %v2556 = vadd.f32 %v207, %v2555
    %v2557 = vpop.f32.mrf.mxu0
    %2558 = vmatprep.mubr.f32.mxu0 0.0
    %2559 = vmatmul.mubr.f32.gmra.mxu0 %v638
    %v2560 = vpop.f32.mrf.mxu0
    %v2561 = vadd.f32 %v212, %v2560
    %v2562 = vpop.f32.mrf.mxu0
    %2563 = vmatprep.mubr.f32.mxu0 0.0
    %2564 = vmatmul.mubr.f32.gmra.mxu0 %v641
    %v2565 = vpop.f32.mrf.mxu0
    %v2566 = vadd.f32 %v217, %v2565
    %v2567 = vpop.f32.mrf.mxu0
    %2568 = vdwg.mxu0
    %v2569 = vmax.f32 %v2536, 0.0
    %v2570 = vmax.f32 %v2541, 0.0
    %v2571 = vmax.f32 %v2546, 0.0
    %v2572 = vmax.f32 %v2551, 0.0
    %v2573 = vmax.f32 %v2556, 0.0
    %v2574 = vmax.f32 %v2561, 0.0
    %v2575 = vmax.f32 %v2566, 0.0
    %v2577 = vsel %vm756, %v2569, 0
    %v2580 = vsel %vm756, %v2570, 0
    %v2583 = vsel %vm756, %v2571, 0
    %v2586 = vsel %vm756, %v2572, 0
    %v2589 = vsel %vm756, %v2573, 0
    %v2592 = vsel %vm756, %v2574, 0
    %v2595 = vsel %vm756, %v2575, 0
    %2597 = vmatprep.subr.mxu0 0.0
    %2598 = vmatpush1.msra.mxu0 0.0
    %2599 = vmatprep.subr.mxu0 0.0
    %2600 = vmatpush1.msra.mxu0 0.0
    %2601 = vmatprep.subr.mxu0 0.0
    %2602 = vmatpush1.msra.mxu0 0.0
    %2603 = vmatprep.subr.mxu0 0.0
    %2604 = vmatpush1.msra.mxu0 0.0
    %2605 = vmatprep.subr.mxu0 0.0
    %2606 = vmatpush1.msra.mxu0 0.0
    %2607 = vmatprep.subr.mxu0 0.0
    %2608 = vmatpush1.msra.mxu0 0.0
    %2609 = vmatprep.subr.mxu0 0.0
    %2610 = vmatpush1.msra.mxu0 0.0
    %2611 = vmatprep.subr.mxu0 0.0
    %2612 = vmatpush1.msra.mxu0 0.0
    %2613 = vmatprep.subr.mxu0 0.0
    %2614 = vmatpush1.msra.mxu0 0.0
    %2615 = vmatprep.subr.mxu0 0.0
    %2616 = vmatpush1.msra.mxu0 0.0
    %2617 = vmatprep.subr.mxu0 0.0
    %2618 = vmatpush1.msra.mxu0 0.0
    %2619 = vmatprep.subr.mxu0 0.0
    %2620 = vmatpush1.msra.mxu0 0.0
    %2621 = vmatprep.subr.mxu0 0.0
    %2622 = vmatpush1.msra.mxu0 0.0
    %2623 = vmatprep.subr.mxu0 0.0
    %2624 = vmatpush1.msra.mxu0 0.0
    %2625 = vmatprep.subr.mxu0 0.0
    %2626 = vmatpush1.msra.mxu0 %v69
    %2627 = vmatprep.subr.mxu0 0.0
    %2628 = vmatpush1.msra.mxu0 %v68
    %2629 = vmatprep.subr.mxu0 0.0
    %2630 = vmatpush2.msra.mxu0 0.0
    %2631 = vmatprep.subr.mxu0 0.0
    %2632 = vmatpush2.msra.mxu0 0.0
    %2633 = vmatprep.subr.mxu0 0.0
    %2634 = vmatpush2.msra.mxu0 0.0
    %2635 = vmatprep.subr.mxu0 0.0
    %2636 = vmatpush2.msra.mxu0 0.0
    %2637 = vmatprep.subr.mxu0 0.0
    %2638 = vmatpush2.msra.mxu0 0.0
    %2639 = vmatprep.subr.mxu0 0.0
    %2640 = vmatpush2.msra.mxu0 0.0
    %2641 = vmatprep.subr.mxu0 0.0
    %2642 = vmatpush2.msra.mxu0 0.0
    %2643 = vmatprep.subr.mxu0 0.0
    %2644 = vmatpush2.msra.mxu0 0.0
    %2645 = vmatprep.subr.mxu0 0.0
    %2646 = vmatpush2.msra.mxu0 0.0
    %2647 = vmatprep.subr.mxu0 0.0
    %2648 = vmatpush2.msra.mxu0 0.0
    %2649 = vmatprep.subr.mxu0 0.0
    %2650 = vmatpush2.msra.mxu0 0.0
    %2651 = vmatprep.subr.mxu0 0.0
    %2652 = vmatpush2.msra.mxu0 0.0
    %2653 = vmatprep.subr.mxu0 0.0
    %2654 = vmatpush2.msra.mxu0 0.0
    %2655 = vmatprep.subr.mxu0 0.0
    %2656 = vmatpush2.msra.mxu0 0.0
    %2657 = vmatprep.subr.mxu0 0.0
    %2658 = vmatpush2.msra.mxu0 0.0
    %2659 = vmatprep.subr.mxu0 0.0
    %2660 = vmatpush2.msra.mxu0 0.0
    %2661 = vmatprep.mubr.f32.mxu0 0.0
    %2662 = vmatmul.mubr.f32.gmra.mxu0 %v2577
    %v2663 = vpop.f32.mrf.mxu0
    %v2664 = vadd.f32 %v754, %v2663
    %v2665 = vpop.f32.mrf.mxu0
    %2666 = vmatprep.mubr.f32.mxu0 0.0
    %2667 = vmatmul.mubr.f32.gmra.mxu0 %v2580
    %v2668 = vpop.f32.mrf.mxu0
    %v2669 = vadd.f32 %v754, %v2668
    %v2670 = vpop.f32.mrf.mxu0
    %2671 = vmatprep.mubr.f32.mxu0 0.0
    %2672 = vmatmul.mubr.f32.gmra.mxu0 %v2583
    %v2673 = vpop.f32.mrf.mxu0
    %v2674 = vadd.f32 %v754, %v2673
    %v2675 = vpop.f32.mrf.mxu0
    %2676 = vmatprep.mubr.f32.mxu0 0.0
    %2677 = vmatmul.mubr.f32.gmra.mxu0 %v2586
    %v2678 = vpop.f32.mrf.mxu0
    %v2679 = vadd.f32 %v754, %v2678
    %v2680 = vpop.f32.mrf.mxu0
    %2681 = vmatprep.mubr.f32.mxu0 0.0
    %2682 = vmatmul.mubr.f32.gmra.mxu0 %v2589
    %v2683 = vpop.f32.mrf.mxu0
    %v2684 = vadd.f32 %v754, %v2683
    %v2685 = vpop.f32.mrf.mxu0
    %2686 = vmatprep.mubr.f32.mxu0 0.0
    %2687 = vmatmul.mubr.f32.gmra.mxu0 %v2592
    %v2688 = vpop.f32.mrf.mxu0
    %v2689 = vadd.f32 %v754, %v2688
    %v2690 = vpop.f32.mrf.mxu0
    %2691 = vmatprep.mubr.f32.mxu0 0.0
    %2692 = vmatmul.mubr.f32.gmra.mxu0 %v2595
    %v2693 = vpop.f32.mrf.mxu0
    %v2694 = vadd.f32 %v754, %v2693
    %v2695 = vpop.f32.mrf.mxu0
    %2696 = vdwg.mxu0
    %v2697 = vmax.f32 %v2664, 0.0
    %v2698 = vmax.f32 %v2669, 0.0
    %v2699 = vmax.f32 %v2674, 0.0
    %v2700 = vmax.f32 %v2679, 0.0
    %v2701 = vmax.f32 %v2684, 0.0
    %v2702 = vmax.f32 %v2689, 0.0
    %v2703 = vmax.f32 %v2694, 0.0
    %v2704 = vmul.f32 %v227, %v2697
    %v2705 = vmul.f32 %v231, %v2698
    %v2706 = vmul.f32 %v235, %v2699
    %v2707 = vmul.f32 %v239, %v2700
    %v2708 = vmul.f32 %v243, %v2701
    %v2709 = vmul.f32 %v247, %v2702
    %v2710 = vmul.f32 %v251, %v2703
    %v2711 = vmul.f32 %v258, %v2697
    %v2712 = vmul.f32 %v262, %v2698
    %v2713 = vmul.f32 %v266, %v2699
    %v2714 = vmul.f32 %v270, %v2700
    %v2715 = vmul.f32 %v274, %v2701
    %v2716 = vmul.f32 %v278, %v2702
    %v2717 = vmul.f32 %v282, %v2703
    %v2718 = vmul.f32 %v289, %v2697
    %v2719 = vmul.f32 %v293, %v2698
    %v2720 = vmul.f32 %v297, %v2699
    %v2721 = vmul.f32 %v301, %v2700
    %v2722 = vmul.f32 %v305, %v2701
    %v2723 = vmul.f32 %v309, %v2702
    %v2724 = vmul.f32 %v313, %v2703
    %v2725 = vmul.f32 %v320, %v2697
    %v2726 = vmul.f32 %v324, %v2698
    %v2727 = vmul.f32 %v328, %v2699
    %v2728 = vmul.f32 %v332, %v2700
    %v2729 = vmul.f32 %v336, %v2701
    %v2730 = vmul.f32 %v340, %v2702
    %v2731 = vmul.f32 %v344, %v2703
    %v2732 = vmul.f32 %v351, %v2697
    %v2733 = vmul.f32 %v355, %v2698
    %v2734 = vmul.f32 %v359, %v2699
    %v2735 = vmul.f32 %v363, %v2700
    %v2736 = vmul.f32 %v367, %v2701
    %v2737 = vmul.f32 %v371, %v2702
    %v2738 = vmul.f32 %v375, %v2703
    %v2739 = vmul.f32 %v382, %v2697
    %v2740 = vmul.f32 %v386, %v2698
    %v2741 = vmul.f32 %v390, %v2699
    %v2742 = vmul.f32 %v394, %v2700
    %v2743 = vmul.f32 %v398, %v2701
    %v2744 = vmul.f32 %v402, %v2702
    %v2745 = vmul.f32 %v406, %v2703
    %v2746 = vmul.f32 %v413, %v2697
    %v2747 = vmul.f32 %v417, %v2698
    %v2748 = vmul.f32 %v421, %v2699
    %v2749 = vmul.f32 %v425, %v2700
    %v2750 = vmul.f32 %v429, %v2701
    %v2751 = vmul.f32 %v433, %v2702
    %v2752 = vmul.f32 %v437, %v2703
    %v2753 = vmul.f32 %v444, %v2697
    %v2754 = vmul.f32 %v448, %v2698
    %v2755 = vmul.f32 %v452, %v2699
    %v2756 = vmul.f32 %v456, %v2700
    %v2757 = vmul.f32 %v460, %v2701
    %v2758 = vmul.f32 %v464, %v2702
    %v2759 = vmul.f32 %v468, %v2703
    %v2760 = vsel %vm756, %v2704, -inf
    %v2761 = vsel %vm756, %v2705, -inf
    %v2762 = vmax.f32 %v2760, %v2761
    %v2763 = vsel %vm756, %v2706, -inf
    %v2764 = vmax.f32 %v2762, %v2763
    %v2765 = vsel %vm756, %v2707, -inf
    %v2766 = vmax.f32 %v2764, %v2765
    %v2767 = vsel %vm756, %v2708, -inf
    %v2768 = vmax.f32 %v2766, %v2767
    %v2769 = vsel %vm756, %v2709, -inf
    %v2770 = vmax.f32 %v2768, %v2769
    %v2771 = vsel %vm756, %v2710, -inf
    %v2772 = vmax.f32 %v2770, %v2771
    %v2773 = vrot.slane %v2772, 4
    %v2774 = vmax.f32 %v2772, %v2773
    %v2775 = vrot.slane %v2774, 2
    %v2776 = vmax.f32 %v2774, %v2775
    %v2777 = vrot.slane %v2776, 1
    %v2778 = vmax.f32 %v2776, %v2777
    %v2779 = vsel %vm756, %v2711, -inf
    %v2780 = vsel %vm756, %v2712, -inf
    %v2781 = vmax.f32 %v2779, %v2780
    %v2782 = vsel %vm756, %v2713, -inf
    %v2783 = vmax.f32 %v2781, %v2782
    %v2784 = vsel %vm756, %v2714, -inf
    %v2785 = vmax.f32 %v2783, %v2784
    %v2786 = vsel %vm756, %v2715, -inf
    %v2787 = vmax.f32 %v2785, %v2786
    %v2788 = vsel %vm756, %v2716, -inf
    %v2789 = vmax.f32 %v2787, %v2788
    %v2790 = vsel %vm756, %v2717, -inf
    %v2791 = vmax.f32 %v2789, %v2790
    %v2792 = vrot.slane %v2791, 4
    %v2793 = vmax.f32 %v2791, %v2792
    %v2794 = vrot.slane %v2793, 2
    %v2795 = vmax.f32 %v2793, %v2794
    %v2796 = vrot.slane %v2795, 1
    %v2797 = vmax.f32 %v2795, %v2796
    %v2798 = vsel %vm756, %v2718, -inf
    %v2799 = vsel %vm756, %v2719, -inf
    %v2800 = vmax.f32 %v2798, %v2799
    %v2801 = vsel %vm756, %v2720, -inf
    %v2802 = vmax.f32 %v2800, %v2801
    %v2803 = vsel %vm756, %v2721, -inf
    %v2804 = vmax.f32 %v2802, %v2803
    %v2805 = vsel %vm756, %v2722, -inf
    %v2806 = vmax.f32 %v2804, %v2805
    %v2807 = vsel %vm756, %v2723, -inf
    %v2808 = vmax.f32 %v2806, %v2807
    %v2809 = vsel %vm756, %v2724, -inf
    %v2810 = vmax.f32 %v2808, %v2809
    %v2811 = vrot.slane %v2810, 4
    %v2812 = vmax.f32 %v2810, %v2811
    %v2813 = vrot.slane %v2812, 2
    %v2814 = vmax.f32 %v2812, %v2813
    %v2815 = vrot.slane %v2814, 1
    %v2816 = vmax.f32 %v2814, %v2815
    %v2817 = vsel %vm756, %v2725, -inf
    %v2818 = vsel %vm756, %v2726, -inf
    %v2819 = vmax.f32 %v2817, %v2818
    %v2820 = vsel %vm756, %v2727, -inf
    %v2821 = vmax.f32 %v2819, %v2820
    %v2822 = vsel %vm756, %v2728, -inf
    %v2823 = vmax.f32 %v2821, %v2822
    %v2824 = vsel %vm756, %v2729, -inf
    %v2825 = vmax.f32 %v2823, %v2824
    %v2826 = vsel %vm756, %v2730, -inf
    %v2827 = vmax.f32 %v2825, %v2826
    %v2828 = vsel %vm756, %v2731, -inf
    %v2829 = vmax.f32 %v2827, %v2828
    %v2830 = vrot.slane %v2829, 4
    %v2831 = vmax.f32 %v2829, %v2830
    %v2832 = vrot.slane %v2831, 2
    %v2833 = vmax.f32 %v2831, %v2832
    %v2834 = vrot.slane %v2833, 1
    %v2835 = vmax.f32 %v2833, %v2834
    %v2836 = vsel %vm756, %v2732, -inf
    %v2837 = vsel %vm756, %v2733, -inf
    %v2838 = vmax.f32 %v2836, %v2837
    %v2839 = vsel %vm756, %v2734, -inf
    %v2840 = vmax.f32 %v2838, %v2839
    %v2841 = vsel %vm756, %v2735, -inf
    %v2842 = vmax.f32 %v2840, %v2841
    %v2843 = vsel %vm756, %v2736, -inf
    %v2844 = vmax.f32 %v2842, %v2843
    %v2845 = vsel %vm756, %v2737, -inf
    %v2846 = vmax.f32 %v2844, %v2845
    %v2847 = vsel %vm756, %v2738, -inf
    %v2848 = vmax.f32 %v2846, %v2847
    %v2849 = vrot.slane %v2848, 4
    %v2850 = vmax.f32 %v2848, %v2849
    %v2851 = vrot.slane %v2850, 2
    %v2852 = vmax.f32 %v2850, %v2851
    %v2853 = vrot.slane %v2852, 1
    %v2854 = vmax.f32 %v2852, %v2853
    %v2855 = vsel %vm756, %v2739, -inf
    %v2856 = vsel %vm756, %v2740, -inf
    %v2857 = vmax.f32 %v2855, %v2856
    %v2858 = vsel %vm756, %v2741, -inf
    %v2859 = vmax.f32 %v2857, %v2858
    %v2860 = vsel %vm756, %v2742, -inf
    %v2861 = vmax.f32 %v2859, %v2860
    %v2862 = vsel %vm756, %v2743, -inf
    %v2863 = vmax.f32 %v2861, %v2862
    %v2864 = vsel %vm756, %v2744, -inf
    %v2865 = vmax.f32 %v2863, %v2864
    %v2866 = vsel %vm756, %v2745, -inf
    %v2867 = vmax.f32 %v2865, %v2866
    %v2868 = vrot.slane %v2867, 4
    %v2869 = vmax.f32 %v2867, %v2868
    %v2870 = vrot.slane %v2869, 2
    %v2871 = vmax.f32 %v2869, %v2870
    %v2872 = vrot.slane %v2871, 1
    %v2873 = vmax.f32 %v2871, %v2872
    %v2874 = vsel %vm756, %v2746, -inf
    %v2875 = vsel %vm756, %v2747, -inf
    %v2876 = vmax.f32 %v2874, %v2875
    %v2877 = vsel %vm756, %v2748, -inf
    %v2878 = vmax.f32 %v2876, %v2877
    %v2879 = vsel %vm756, %v2749, -inf
    %v2880 = vmax.f32 %v2878, %v2879
    %v2881 = vsel %vm756, %v2750, -inf
    %v2882 = vmax.f32 %v2880, %v2881
    %v2883 = vsel %vm756, %v2751, -inf
    %v2884 = vmax.f32 %v2882, %v2883
    %v2885 = vsel %vm756, %v2752, -inf
    %v2886 = vmax.f32 %v2884, %v2885
    %v2887 = vrot.slane %v2886, 4
    %v2888 = vmax.f32 %v2886, %v2887
    %v2889 = vrot.slane %v2888, 2
    %v2890 = vmax.f32 %v2888, %v2889
    %v2891 = vrot.slane %v2890, 1
    %v2892 = vmax.f32 %v2890, %v2891
    %v2893 = vsel %vm756, %v2753, -inf
    %v2894 = vsel %vm756, %v2754, -inf
    %v2895 = vmax.f32 %v2893, %v2894
    %v2896 = vsel %vm756, %v2755, -inf
    %v2897 = vmax.f32 %v2895, %v2896
    %v2898 = vsel %vm756, %v2756, -inf
    %v2899 = vmax.f32 %v2897, %v2898
    %v2900 = vsel %vm756, %v2757, -inf
    %v2901 = vmax.f32 %v2899, %v2900
    %v2902 = vsel %vm756, %v2758, -inf
    %v2903 = vmax.f32 %v2901, %v2902
    %v2904 = vsel %vm756, %v2759, -inf
    %v2905 = vmax.f32 %v2903, %v2904
    %v2906 = vrot.slane %v2905, 4
    %v2907 = vmax.f32 %v2905, %v2906
    %v2908 = vrot.slane %v2907, 2
    %v2909 = vmax.f32 %v2907, %v2908
    %v2910 = vrot.slane %v2909, 1
    %v2911 = vmax.f32 %v2909, %v2910
    %2912 = vmatprep.subr.mxu0 0.0
    %2913 = vmatpush1.msra.mxu0 0.0
    %2914 = vmatprep.subr.mxu0 0.0
    %2915 = vmatpush1.msra.mxu0 0.0
    %2916 = vmatprep.subr.mxu0 0.0
    %2917 = vmatpush1.msra.mxu0 0.0
    %2918 = vmatprep.subr.mxu0 0.0
    %2919 = vmatpush1.msra.mxu0 0.0
    %2920 = vmatprep.subr.mxu0 0.0
    %2921 = vmatpush1.msra.mxu0 0.0
    %2922 = vmatprep.subr.mxu0 0.0
    %2923 = vmatpush1.msra.mxu0 0.0
    %2924 = vmatprep.subr.mxu0 0.0
    %2925 = vmatpush1.msra.mxu0 0.0
    %2926 = vmatprep.subr.mxu0 0.0
    %2927 = vmatpush1.msra.mxu0 0.0
    %2928 = vmatprep.subr.mxu0 0.0
    %2929 = vmatpush1.msra.mxu0 0.0
    %2930 = vmatprep.subr.mxu0 0.0
    %2931 = vmatpush1.msra.mxu0 0.0
    %2932 = vmatprep.subr.mxu0 0.0
    %2933 = vmatpush1.msra.mxu0 0.0
    %2934 = vmatprep.subr.mxu0 0.0
    %2935 = vmatpush1.msra.mxu0 0.0
    %2936 = vmatprep.subr.mxu0 0.0
    %2937 = vmatpush1.msra.mxu0 0.0
    %2938 = vmatprep.subr.mxu0 0.0
    %2939 = vmatpush1.msra.mxu0 0.0
    %2940 = vmatprep.subr.mxu0 0.0
    %2941 = vmatpush1.msra.mxu0 0.0
    %2942 = vmatprep.subr.mxu0 0.0
    %2943 = vmatpush1.msra.mxu0 %v1094
    %2944 = vmatprep.subr.mxu0 0.0
    %2945 = vmatpush2.msra.mxu0 0.0
    %2946 = vmatprep.subr.mxu0 0.0
    %2947 = vmatpush2.msra.mxu0 0.0
    %2948 = vmatprep.subr.mxu0 0.0
    %2949 = vmatpush2.msra.mxu0 0.0
    %2950 = vmatprep.subr.mxu0 0.0
    %2951 = vmatpush2.msra.mxu0 0.0
    %2952 = vmatprep.subr.mxu0 0.0
    %2953 = vmatpush2.msra.mxu0 0.0
    %2954 = vmatprep.subr.mxu0 0.0
    %2955 = vmatpush2.msra.mxu0 0.0
    %2956 = vmatprep.subr.mxu0 0.0
    %2957 = vmatpush2.msra.mxu0 0.0
    %2958 = vmatprep.subr.mxu0 0.0
    %2959 = vmatpush2.msra.mxu0 0.0
    %2960 = vmatprep.subr.mxu0 0.0
    %2961 = vmatpush2.msra.mxu0 0.0
    %2962 = vmatprep.subr.mxu0 0.0
    %2963 = vmatpush2.msra.mxu0 0.0
    %2964 = vmatprep.subr.mxu0 0.0
    %2965 = vmatpush2.msra.mxu0 0.0
    %2966 = vmatprep.subr.mxu0 0.0
    %2967 = vmatpush2.msra.mxu0 0.0
    %2968 = vmatprep.subr.mxu0 0.0
    %2969 = vmatpush2.msra.mxu0 0.0
    %2970 = vmatprep.subr.mxu0 0.0
    %2971 = vmatpush2.msra.mxu0 0.0
    %2972 = vmatprep.subr.mxu0 0.0
    %2973 = vmatpush2.msra.mxu0 0.0
    %2974 = vmatprep.subr.mxu0 0.0
    %2975 = vmatpush2.msra.mxu0 0.0
    %2976 = vmatprep.mubr.f32.mxu0 0.0
    %2977 = vmatmul.mubr.f32.gmra.mxu0 %v1500
    %v2978 = vpop.f32.mrf.mxu0
    %v2979 = vadd.f32 0.0, %v2978
    %v2980 = vpop.f32.mrf.mxu0
    %2981 = vdwg.mxu0
    %2982 = vmatprep.subr.mxu0 0.0
    %2983 = vmatpush1.msra.mxu0 0.0
    %2984 = vmatprep.subr.mxu0 0.0
    %2985 = vmatpush1.msra.mxu0 0.0
    %2986 = vmatprep.subr.mxu0 0.0
    %2987 = vmatpush1.msra.mxu0 0.0
    %2988 = vmatprep.subr.mxu0 0.0
    %2989 = vmatpush1.msra.mxu0 0.0
    %2990 = vmatprep.subr.mxu0 0.0
    %2991 = vmatpush1.msra.mxu0 0.0
    %2992 = vmatprep.subr.mxu0 0.0
    %2993 = vmatpush1.msra.mxu0 0.0
    %2994 = vmatprep.subr.mxu0 0.0
    %2995 = vmatpush1.msra.mxu0 0.0
    %2996 = vmatprep.subr.mxu0 0.0
    %2997 = vmatpush1.msra.mxu0 0.0
    %2998 = vmatprep.subr.mxu0 0.0
    %2999 = vmatpush1.msra.mxu0 0.0
    %3000 = vmatprep.subr.mxu0 0.0
    %3001 = vmatpush1.msra.mxu0 0.0
    %3002 = vmatprep.subr.mxu0 0.0
    %3003 = vmatpush1.msra.mxu0 0.0
    %3004 = vmatprep.subr.mxu0 0.0
    %3005 = vmatpush1.msra.mxu0 0.0
    %3006 = vmatprep.subr.mxu0 0.0
    %3007 = vmatpush1.msra.mxu0 0.0
    %3008 = vmatprep.subr.mxu0 0.0
    %3009 = vmatpush1.msra.mxu0 0.0
    %3010 = vmatprep.subr.mxu0 0.0
    %3011 = vmatpush1.msra.mxu0 0.0
    %3012 = vmatprep.subr.mxu0 0.0
    %3013 = vmatpush1.msra.mxu0 %v1167
    %3014 = vmatprep.subr.mxu0 0.0
    %3015 = vmatpush2.msra.mxu0 0.0
    %3016 = vmatprep.subr.mxu0 0.0
    %3017 = vmatpush2.msra.mxu0 0.0
    %3018 = vmatprep.subr.mxu0 0.0
    %3019 = vmatpush2.msra.mxu0 0.0
    %3020 = vmatprep.subr.mxu0 0.0
    %3021 = vmatpush2.msra.mxu0 0.0
    %3022 = vmatprep.subr.mxu0 0.0
    %3023 = vmatpush2.msra.mxu0 0.0
    %3024 = vmatprep.subr.mxu0 0.0
    %3025 = vmatpush2.msra.mxu0 0.0
    %3026 = vmatprep.subr.mxu0 0.0
    %3027 = vmatpush2.msra.mxu0 0.0
    %3028 = vmatprep.subr.mxu0 0.0
    %3029 = vmatpush2.msra.mxu0 0.0
    %3030 = vmatprep.subr.mxu0 0.0
    %3031 = vmatpush2.msra.mxu0 0.0
    %3032 = vmatprep.subr.mxu0 0.0
    %3033 = vmatpush2.msra.mxu0 0.0
    %3034 = vmatprep.subr.mxu0 0.0
    %3035 = vmatpush2.msra.mxu0 0.0
    %3036 = vmatprep.subr.mxu0 0.0
    %3037 = vmatpush2.msra.mxu0 0.0
    %3038 = vmatprep.subr.mxu0 0.0
    %3039 = vmatpush2.msra.mxu0 0.0
    %3040 = vmatprep.subr.mxu0 0.0
    %3041 = vmatpush2.msra.mxu0 0.0
    %3042 = vmatprep.subr.mxu0 0.0
    %3043 = vmatpush2.msra.mxu0 0.0
    %3044 = vmatprep.subr.mxu0 0.0
    %3045 = vmatpush2.msra.mxu0 0.0
    %3046 = vmatprep.mubr.f32.mxu0 0.0
    %3047 = vmatmul.mubr.f32.gmra.mxu0 %v2397
    %v3048 = vpop.f32.mrf.mxu0
    %v3049 = vadd.f32 %v2979, %v3048
    %v3050 = vpop.f32.mrf.mxu0
    %3051 = vdwg.mxu0
    %v3060 = vsel %vm1247, %v2797, %v2778
    %v3061 = vsel %vm1249, %v2816, %v3060
    %v3062 = vsel %vm1251, %v2835, %v3061
    %v3063 = vsel %vm1253, %v2854, %v3062
    %v3064 = vsel %vm1255, %v2873, %v3063
    %v3065 = vsel %vm1257, %v2892, %v3064
    %v3066 = vsel %vm1259, %v2911, %v3065
    %v3067 = vsel %vm756, %v3066, 0
    %3069 = vmatprep.subr.mxu0 0.0
    %3070 = vmatpush1.msra.mxu0 0.0
    %3071 = vmatprep.subr.mxu0 0.0
    %3072 = vmatpush1.msra.mxu0 0.0
    %3073 = vmatprep.subr.mxu0 0.0
    %3074 = vmatpush1.msra.mxu0 0.0
    %3075 = vmatprep.subr.mxu0 0.0
    %3076 = vmatpush1.msra.mxu0 0.0
    %3077 = vmatprep.subr.mxu0 0.0
    %3078 = vmatpush1.msra.mxu0 0.0
    %3079 = vmatprep.subr.mxu0 0.0
    %3080 = vmatpush1.msra.mxu0 0.0
    %3081 = vmatprep.subr.mxu0 0.0
    %3082 = vmatpush1.msra.mxu0 0.0
    %3083 = vmatprep.subr.mxu0 0.0
    %3084 = vmatpush1.msra.mxu0 0.0
    %3085 = vmatprep.subr.mxu0 0.0
    %3086 = vmatpush1.msra.mxu0 0.0
    %3087 = vmatprep.subr.mxu0 0.0
    %3088 = vmatpush1.msra.mxu0 0.0
    %3089 = vmatprep.subr.mxu0 0.0
    %3090 = vmatpush1.msra.mxu0 0.0
    %3091 = vmatprep.subr.mxu0 0.0
    %3092 = vmatpush1.msra.mxu0 0.0
    %3093 = vmatprep.subr.mxu0 0.0
    %3094 = vmatpush1.msra.mxu0 0.0
    %3095 = vmatprep.subr.mxu0 0.0
    %3096 = vmatpush1.msra.mxu0 0.0
    %3097 = vmatprep.subr.mxu0 0.0
    %3098 = vmatpush1.msra.mxu0 %v74
    %3099 = vmatprep.subr.mxu0 0.0
    %3100 = vmatpush1.msra.mxu0 %v73
    %3101 = vmatprep.subr.mxu0 0.0
    %3102 = vmatpush2.msra.mxu0 0.0
    %3103 = vmatprep.subr.mxu0 0.0
    %3104 = vmatpush2.msra.mxu0 0.0
    %3105 = vmatprep.subr.mxu0 0.0
    %3106 = vmatpush2.msra.mxu0 0.0
    %3107 = vmatprep.subr.mxu0 0.0
    %3108 = vmatpush2.msra.mxu0 0.0
    %3109 = vmatprep.subr.mxu0 0.0
    %3110 = vmatpush2.msra.mxu0 0.0
    %3111 = vmatprep.subr.mxu0 0.0
    %3112 = vmatpush2.msra.mxu0 0.0
    %3113 = vmatprep.subr.mxu0 0.0
    %3114 = vmatpush2.msra.mxu0 0.0
    %3115 = vmatprep.subr.mxu0 0.0
    %3116 = vmatpush2.msra.mxu0 0.0
    %3117 = vmatprep.subr.mxu0 0.0
    %3118 = vmatpush2.msra.mxu0 0.0
    %3119 = vmatprep.subr.mxu0 0.0
    %3120 = vmatpush2.msra.mxu0 0.0
    %3121 = vmatprep.subr.mxu0 0.0
    %3122 = vmatpush2.msra.mxu0 0.0
    %3123 = vmatprep.subr.mxu0 0.0
    %3124 = vmatpush2.msra.mxu0 0.0
    %3125 = vmatprep.subr.mxu0 0.0
    %3126 = vmatpush2.msra.mxu0 0.0
    %3127 = vmatprep.subr.mxu0 0.0
    %3128 = vmatpush2.msra.mxu0 0.0
    %3129 = vmatprep.subr.mxu0 0.0
    %3130 = vmatpush2.msra.mxu0 0.0
    %3131 = vmatprep.subr.mxu0 0.0
    %3132 = vmatpush2.msra.mxu0 0.0
    %3133 = vmatprep.mubr.f32.mxu0 0.0
    %3134 = vmatmul.mubr.f32.gmra.mxu0 %v3067
    %v3135 = vpop.f32.mrf.mxu0
    %v3136 = vadd.f32 0.0, %v3135
    %v3137 = vpop.f32.mrf.mxu0
    %3138 = vdwg.mxu0
    %v3139 = vadd.f32 %v3049, %v3136
    %v3140 = vadd.f32 %v3139, %v1338
    %v3141 = vmax.f32 %v3140, 0.0
    %v3143 = vsel %vm756, %v3141, 0
    %3145 = vmatprep.subr.mxu0 0.0
    %3146 = vmatpush1.msra.mxu0 0.0
    %3147 = vmatprep.subr.mxu0 0.0
    %3148 = vmatpush1.msra.mxu0 0.0
    %3149 = vmatprep.subr.mxu0 0.0
    %3150 = vmatpush1.msra.mxu0 0.0
    %3151 = vmatprep.subr.mxu0 0.0
    %3152 = vmatpush1.msra.mxu0 0.0
    %3153 = vmatprep.subr.mxu0 0.0
    %3154 = vmatpush1.msra.mxu0 0.0
    %3155 = vmatprep.subr.mxu0 0.0
    %3156 = vmatpush1.msra.mxu0 0.0
    %3157 = vmatprep.subr.mxu0 0.0
    %3158 = vmatpush1.msra.mxu0 0.0
    %3159 = vmatprep.subr.mxu0 0.0
    %3160 = vmatpush1.msra.mxu0 0.0
    %3161 = vmatprep.subr.mxu0 0.0
    %3162 = vmatpush1.msra.mxu0 0.0
    %3163 = vmatprep.subr.mxu0 0.0
    %3164 = vmatpush1.msra.mxu0 0.0
    %3165 = vmatprep.subr.mxu0 0.0
    %3166 = vmatpush1.msra.mxu0 0.0
    %3167 = vmatprep.subr.mxu0 0.0
    %3168 = vmatpush1.msra.mxu0 0.0
    %3169 = vmatprep.subr.mxu0 0.0
    %3170 = vmatpush1.msra.mxu0 0.0
    %3171 = vmatprep.subr.mxu0 0.0
    %3172 = vmatpush1.msra.mxu0 0.0
    %3173 = vmatprep.subr.mxu0 0.0
    %3174 = vmatpush1.msra.mxu0 %v77
    %3175 = vmatprep.subr.mxu0 0.0
    %3176 = vmatpush1.msra.mxu0 %v76
    %3177 = vmatprep.subr.mxu0 0.0
    %3178 = vmatpush2.msra.mxu0 0.0
    %3179 = vmatprep.subr.mxu0 0.0
    %3180 = vmatpush2.msra.mxu0 0.0
    %3181 = vmatprep.subr.mxu0 0.0
    %3182 = vmatpush2.msra.mxu0 0.0
    %3183 = vmatprep.subr.mxu0 0.0
    %3184 = vmatpush2.msra.mxu0 0.0
    %3185 = vmatprep.subr.mxu0 0.0
    %3186 = vmatpush2.msra.mxu0 0.0
    %3187 = vmatprep.subr.mxu0 0.0
    %3188 = vmatpush2.msra.mxu0 0.0
    %3189 = vmatprep.subr.mxu0 0.0
    %3190 = vmatpush2.msra.mxu0 0.0
    %3191 = vmatprep.subr.mxu0 0.0
    %3192 = vmatpush2.msra.mxu0 0.0
    %3193 = vmatprep.subr.mxu0 0.0
    %3194 = vmatpush2.msra.mxu0 0.0
    %3195 = vmatprep.subr.mxu0 0.0
    %3196 = vmatpush2.msra.mxu0 0.0
    %3197 = vmatprep.subr.mxu0 0.0
    %3198 = vmatpush2.msra.mxu0 0.0
    %3199 = vmatprep.subr.mxu0 0.0
    %3200 = vmatpush2.msra.mxu0 0.0
    %3201 = vmatprep.subr.mxu0 0.0
    %3202 = vmatpush2.msra.mxu0 0.0
    %3203 = vmatprep.subr.mxu0 0.0
    %3204 = vmatpush2.msra.mxu0 0.0
    %3205 = vmatprep.subr.mxu0 0.0
    %3206 = vmatpush2.msra.mxu0 0.0
    %3207 = vmatprep.subr.mxu0 0.0
    %3208 = vmatpush2.msra.mxu0 0.0
    %3209 = vmatprep.mubr.f32.mxu0 0.0
    %3210 = vmatmul.mubr.f32.gmra.mxu0 %v3143
    %v3211 = vpop.f32.mrf.mxu0
    %v3212 = vadd.f32 %v1346, %v3211
    %v3213 = vpop.f32.mrf.mxu0
    %3214 = vdwg.mxu0
    %v3215 = vmax.f32 %v3212, 0.0
    %v3216 = vmul.f32 %v3215, %v3215
    %v3217 = vsel %vm94, %v3216, 0.0
    %3218 = vadd.xlane.f32.xlu0 %v3217
    %v3219 = vpop.xlane.xlu0 %3218
    %v3220 = vrsqrt.pop %v3219
    %v3221 = vmin.f32 %v3220, 1.0
    %v3222 = vmul.f32 %v3215, %v3221
    %3223 = vst.msk [vmem:[#allocation2] sm:$0xff] %vm94, %v3222
    %3224 = vrot.lane.b32.xlu0 %v2325, 4
    %v3225 = vpop.permute.xlu0 %3224
    %vm3227 = vcmask 64544
    %3228 = vst.msk [vmem:[#allocation2] sm:$0xff] %vm3227, %v3225
    // Predicated region
    $region70: #{igcnet_repara_forward.1} parent=1 // pred_check
      _
    $region71: #{igcnet_repara_forward.1} parent=1 // pred_check_branch
      %3230 = sbr.rel (0) target = $region73
    $region72: #{igcnet_repara_forward.1} parent=1 // pred_region
      %s3232 = ssub.s32 128, 128
      %3233 = vsyncadd [#allocation3], %s3232
      %s3235 = sshll.u32 [#allocation2], 4
      %s3236 = int_to_ptr.vmem [resolvable:$true] %s3235
      %3238 = dma.vmem_to_hbm [thread:$0]  %s3236, 128, %s17, [#allocation3]
    $region73: #{igcnet_repara_forward.1} parent=1 // pred_fallthru
      _
    // Predicated region
    $region74: #{igcnet_repara_forward.1} parent=1 // pred_check
      _
    $region75: #{igcnet_repara_forward.1} parent=1 // pred_check_branch
      %3240 = sbr.rel (0) target = $region77
    $region76: #{igcnet_repara_forward.1} parent=1 // pred_region
      %3241 = dma.done [#allocation3], 128
    $region77: #{igcnet_repara_forward.1} parent=1 // pred_fallthru
      _
    %3242 = vsyncpa [#allocation3], 1

</llo_original>
